<compile_context>
chip_gen: v5e
topology: v5e:2x2
jax: 0.10.0
libtpu: 0.0.40
codegen_flags: <defaults>
</compile_context>

<pallas_src>
import jax
import jax.numpy as jnp
import numpy as np
from jax.experimental import pallas as pl
from jax.experimental.pallas import tpu as pltpu


def _round_up(v, m):
    return ((v + m - 1) // m) * m


# ----------------------------------------------------------------------------
# Fused Pallas kernel: the whole forward pass on VMEM-resident 2-D slabs.
# All matmul weight refs except Pt/Wc are bf16; accumulation is f32.
# ----------------------------------------------------------------------------
def _fused_kernel(x_ref, w1_ref, b1_ref, w2_ref, b2_ref, we_ref, be_ref,
                  wd_ref, bd_ref, d1_ref, db1_ref, d2_ref, db2_ref,
                  pt_ref, psq_ref, wc_ref, bc_ref,
                  dec_ref, enc_ref, dist_ref, logit_ref):
    f32 = jnp.float32
    bf16 = jnp.bfloat16

    def mm(a, w_ref):                       # bf16 MXU matmul, f32 accumulate
        return jnp.dot(a.astype(bf16), w_ref[...], preferred_element_type=f32)

    def relu(t):
        return jnp.maximum(t, 0.0)

    # ---- encoder -----------------------------------------------------------
    h = relu(mm(x_ref[...], w1_ref) + b1_ref[...])            # conv1   (TB, 512)
    h = relu(mm(h, w2_ref) + b2_ref[...])                      # conv2   (TB, 256)
    z = mm(h, we_ref) + be_ref[...]                            # enc FC  (TB, LZ)
    enc_ref[...] = z                                           # pad cols are exact 0

    # ---- decoder -----------------------------------------------------------
    g = relu(mm(z, wd_ref) + bd_ref[...])                      # dec FC  (TB, 256)
    g = relu(mm(g, d1_ref) + db1_ref[...])                     # deconv1 (TB, 512)
    g = mm(g, d2_ref) + db2_ref[...]                           # deconv2 (TB, 1024)
    # sigmoid via EUP exp + EUP approx reciprocal (no f32 VALU divide)
    dec_ref[...] = pl.reciprocal(1.0 + jnp.exp(-g), approx=True)

    # ---- prototype classifier: ||z||^2 + ||p||^2 - 2 z p^T (f32, tiny) ------
    z_sq = jnp.sum(z * z, axis=-1, keepdims=True)              # (TB, 1)
    dist = jnp.maximum(
        z_sq + psq_ref[...] - 2.0 * jnp.dot(z, pt_ref[...],
                                            preferred_element_type=f32), 0.0)
    dist_ref[...] = dist                                       # (TB, PZ)
    logit_ref[...] = jnp.dot(dist, wc_ref[...],
                             preferred_element_type=f32) + bc_ref[...]   # (TB, CZ)


# ----------------------------------------------------------------------------
# Weight-only glue: realize each (transposed) conv as a dense matrix acting on
# NCHW-flattened activations.  Batch-independent; run ONCE per parameter set.
# ----------------------------------------------------------------------------
def _conv_dense(w, h_in, w_in, stride, pad):
    """PyTorch Conv2d weight (C_out, C_in, k, k) -> dense (C_in*H*W, C_out*Ho*Wo).
    Rows ordered (ci, ih, iw); cols ordered (co, oh, ow)  (= NCHW flatten)."""
    c_out, c_in, k, _ = w.shape
    ho = (h_in + 2 * pad - k) // stride + 1
    wo = (w_in + 2 * pad - k) // stride + 1
    A = np.zeros((k, ho, h_in), np.float32)     # A[kh, oh, ih]
    B = np.zeros((k, wo, w_in), np.float32)     # B[kw, ow, iw]
    for t in range(k):
        for o in range(ho):
            i = o * stride - pad + t
            if 0 <= i < h_in:
                A[t, o, i] = 1.0
        for o in range(wo):
            i = o * stride - pad + t
            if 0 <= i < w_in:
                B[t, o, i] = 1.0
    mat = jnp.einsum("ocab,ayi,bxj->cijoyx", w, A, B)
    return mat.reshape(c_in * h_in * w_in, c_out * ho * wo), ho, wo


def _convT_dense(w, h_in, w_in, stride, pad, out_pad):
    """PyTorch ConvTranspose2d weight (C_in, C_out, k, k) -> dense matrix.
    Rows ordered (ci, ih, iw); cols ordered (co, oh, ow)."""
    c_in, c_out, k, _ = w.shape
    ho = (h_in - 1) * stride - 2 * pad + k + out_pad
    wo = (w_in - 1) * stride - 2 * pad + k + out_pad
    A = np.zeros((k, ho, h_in), np.float32)
    B = np.zeros((k, wo, w_in), np.float32)
    for t in range(k):
        for i in range(h_in):
            o = i * stride - pad + t
            if 0 <= o < ho:
                A[t, o, i] = 1.0
        for i in range(w_in):
            o = i * stride - pad + t
            if 0 <= o < wo:
                B[t, o, i] = 1.0
    mat = jnp.einsum("coab,ayi,bxj->cijoyx", w, A, B)
    return mat.reshape(c_in * h_in * w_in, c_out * ho * wo), ho, wo


def build_dense_params(params, h, w):
    """Weight-only preprocessing.  Call ONCE per parameter set (outside the
    per-step jitted forward) and reuse the result for every batch."""
    f32, bf16 = jnp.float32, jnp.bfloat16

    W1, h1, w1 = _conv_dense(params["conv1_w"], h, w, 2, 1)
    W2, h2, w2 = _conv_dense(params["conv2_w"], h1, w1, 2, 1)
    D1, hd1, wd1 = _convT_dense(params["deconv1_w"], h2, w2, 2, 1, 1)
    D2, hd2, wd2 = _convT_dense(params["deconv2_w"], hd1, wd1, 2, 1, 1)

    latent = params["enc_fc_w"].shape[1]
    n_protos, _ = params["prototypes"].shape
    n_classes = params["cls_w"].shape[1]
    LZ = _round_up(latent, 128)       # lane-dense latent
    PZ = _round_up(n_protos, 128)     # lane-dense prototype count
    CZ = _round_up(n_classes, 128)    # lane-dense class count

    def pad_c(m, n):   # zero-pad columns to n
        return jnp.pad(m, ((0, 0), (0, n - m.shape[1])))

    def pad_r(m, n):   # zero-pad rows to n
        return jnp.pad(m, ((0, n - m.shape[0]), (0, 0)))

    rep = lambda b, n: jnp.repeat(b.astype(f32), n)[None, :]   # bias per (co,oh,ow)

    pt = params["prototypes"].astype(f32)                       # (P, L)
    dense = {
        # big matmuls: bf16 operands (f32 accumulation in-kernel)
        "W1": W1.astype(bf16), "b1": rep(params["conv1_b"], h1 * w1),
        "W2": W2.astype(bf16), "b2": rep(params["conv2_b"], h2 * w2),
        "We": pad_c(params["enc_fc_w"], LZ).astype(bf16),
        "be": pad_c(params["enc_fc_b"][None, :].astype(f32), LZ),
        "Wd": pad_r(params["dec_fc_w"], LZ).astype(bf16),
        "bd": params["dec_fc_b"].astype(f32)[None, :],
        "D1": D1.astype(bf16), "db1": rep(params["deconv1_b"], hd1 * wd1),
        "D2": D2.astype(bf16), "db2": rep(params["deconv2_b"], hd2 * wd2),
        # prototype / classifier path kept f32 (tiny matmuls, better accuracy)
        "Pt": pad_c(pad_r(pt.T, LZ), PZ),                       # (LZ, PZ)
        "psq": pad_c(jnp.sum(pt * pt, axis=1)[None, :], PZ),    # (1, PZ), precomputed
        "Wc": pad_c(pad_r(params["cls_w"].astype(f32), PZ), CZ),
        "bc": pad_c(params["cls_b"].astype(f32)[None, :], CZ),
    }
    meta = {"latent": latent, "n_prototypes": n_protos, "n_classes": n_classes}
    return dense, meta


# ----------------------------------------------------------------------------
# pallas_call wrapper
# ----------------------------------------------------------------------------
def _fused_forward(x_flat, dense):
    B, in_dim = x_flat.shape
    LZ = dense["We"].shape[1]
    dec_dim = dense["D2"].shape[1]
    PZ = dense["Pt"].shape[1]
    CZ = dense["Wc"].shape[1]

    # Batch/M tiling: multiple of 8, up to 512; for B > 8 arrange >= 2 grid steps
    # so the "parallel" axis shards across v7x's 2 TensorCores and the ~0.35us
    # per-step overhead is amortized.  Weights use constant index maps -> fetched
    # once, VMEM-resident for the whole grid.
    if B <= 8:
        TB = B
    else:
        TB = min(512, _round_up(pl.cdiv(B, 2), 8))
    grid = (pl.cdiv(B, TB),)

    order = ("W1", "b1", "W2", "b2", "We", "be", "Wd", "bd",
             "D1", "db1", "D2", "db2", "Pt", "psq", "Wc", "bc")
    weights = [dense[k] for k in order]

    def rows(n):
        return pl.BlockSpec((TB, n), lambda i: (i, 0))

    in_specs = [rows(in_dim)] + [pl.BlockSpec(w.shape, lambda i: (0, 0))
                                 for w in weights]
    out_specs = (rows(dec_dim), rows(LZ), rows(PZ), rows(CZ))
    out_shape = (jax.ShapeDtypeStruct((B, dec_dim), jnp.float32),
                 jax.ShapeDtypeStruct((B, LZ), jnp.float32),
                 jax.ShapeDtypeStruct((B, PZ), jnp.float32),
                 jax.ShapeDtypeStruct((B, CZ), jnp.float32))

    mm_flops = 2 * B * sum(int(dense[k].shape[0] * dense[k].shape[1])
                           for k in ("W1", "W2", "We", "Wd", "D1", "D2", "Pt", "Wc"))
    bytes_accessed = (int(x_flat.size) * 4
                      + sum(int(w.size) * w.dtype.itemsize for w in weights)
                      + B * (dec_dim + LZ + PZ + CZ) * 4)
    cost = pl.CostEstimate(flops=int(mm_flops), transcendentals=int(B * dec_dim),
                           bytes_accessed=int(bytes_accessed))

    return pl.pallas_call(
        _fused_kernel,
        grid=grid,
        in_specs=in_specs,
        out_specs=out_specs,
        out_shape=out_shape,
        compiler_params=pltpu.CompilerParams(
            dimension_semantics=("parallel",),
            vmem_limit_bytes=48 * 1024 * 1024),
        cost_estimate=cost,
    )(x_flat, *weights)


def prototype_model_forward(x, dense, meta):
    """Returns (encoded, decoded, (distances, logits)) like PrototypeModel.forward.
    `dense` / `meta` come from build_dense_params (computed once, reused)."""
    B, C, H, W = x.shape
    x_flat = x.reshape(B, C * H * W)                 # NCHW flatten == W1 row order
    dec_flat, enc_p, dist_p, logit_p = _fused_forward(x_flat, dense)
    decoded = dec_flat.reshape(B, C, H, W)           # D2 col order is NCHW -> free
    L, P, Cc = meta["latent"], meta["n_prototypes"], meta["n_classes"]
    encoded = enc_p[:, :L]
    distances = dist_p[:, :P]
    logits = logit_p[:, :Cc]
    return encoded, decoded, (distances, logits)


# ----------------------------------------------------------------------------
# Parameters
# ----------------------------------------------------------------------------
def init_params(key, in_channels, latent_size, n_prototypes, n_classes):
    ks = jax.random.split(key, 16)
    n = lambda i, shape, s=0.1: (s * jax.random.normal(ks[i], shape)).astype(jnp.float32)
    return {
        "conv1_w": n(0, (8, in_channels, 3, 3)), "conv1_b": n(1, (8,)),
        "conv2_w": n(2, (16, 8, 3, 3)),          "conv2_b": n(3, (16,)),
        "enc_fc_w": n(4, (16 * 4 * 4, latent_size)), "enc_fc_b": n(5, (latent_size,)),
        "dec_fc_w": n(6, (latent_size, 16 * 4 * 4)), "dec_fc_b": n(7, (16 * 4 * 4,)),
        "deconv1_w": n(8, (16, 8, 3, 3)),        "deconv1_b": n(9, (8,)),
        "deconv2_w": n(10, (8, in_channels, 3, 3)), "deconv2_b": n(11, (in_channels,)),
        "prototypes": n(12, (n_prototypes, latent_size), 1.0),
        "cls_w": n(13, (n_prototypes, n_classes)), "cls_b": n(14, (n_classes,)),
    }


# ----------------------------------------------------------------------------
# Pure-JAX reference (im2col + zero-insertion, PyTorch semantics, f32 HIGHEST)
# used only to validate the fused Pallas kernel numerically in __main__.
# ----------------------------------------------------------------------------
def _im2col_ref(x, k, stride, pad):
    x = jnp.pad(x, ((0, 0), (0, 0), (pad, pad), (pad, pad)))
    N, C, H, W = x.shape
    ho = (H - k) // stride + 1
    wo = (W - k) // stride + 1
    cols = []
    for i in range(k):
        for j in range(k):
            cols.append(x[:, :, i:i + stride * ho:stride, j:j + stride * wo:stride])
    p = jnp.stack(cols, 0).transpose(1, 3, 4, 2, 0)
    return p.reshape(N * ho * wo, C * k * k), ho, wo


def _conv2d_ref(x, w, b, stride, pad, act):
    N = x.shape[0]
    c_out, _, k, _ = w.shape
    patches, ho, wo = _im2col_ref(x, k, stride, pad)
    out = jnp.dot(patches, w.reshape(c_out, -1).T,
                  precision=jax.lax.Precision.HIGHEST) + b
    if act == "relu":
        out = jnp.maximum(out, 0.0)
    elif act == "sigmoid":
        out = 1.0 / (1.0 + jnp.exp(-out))
    return out.reshape(N, ho, wo, c_out).transpose(0, 3, 1, 2)


def _convT2d_ref(x, w, b, stride, pad, out_pad, act):
    _, _, k, _ = w.shape
    N, C, H, W = x.shape
    up = jnp.zeros((N, C, (H - 1) * stride + 1, (W - 1) * stride + 1), x.dtype)
    up = up.at[:, :, ::stride, ::stride].set(x)
    lo, hi = k - 1 - pad, k - 1 - pad + out_pad
    up = jnp.pad(up, ((0, 0), (0, 0), (lo, hi), (lo, hi)))
    w_eff = jnp.flip(w, axis=(2, 3)).transpose(1, 0, 2, 3)
    return _conv2d_ref(up, w_eff, b, 1, 0, act)


def _reference_forward(x, params):
    N = x.shape[0]
    hp = jax.lax.Precision.HIGHEST
    h = _conv2d_ref(x, params["conv1_w"], params["conv1_b"], 2, 1, "relu")
    h = _conv2d_ref(h, params["conv2_w"], params["conv2_b"], 2, 1, "relu")
    z = jnp.dot(h.reshape(N, -1), params["enc_fc_w"], precision=hp) + params["enc_fc_b"]
    d = jnp.maximum(jnp.dot(z, params["dec_fc_w"], precision=hp) + params["dec_fc_b"], 0.0)
    d = d.reshape(N, 16, 4, 4)
    d = _convT2d_ref(d, params["deconv1_w"], params["deconv1_b"], 2, 1, 1, "relu")
    dec = _convT2d_ref(d, params["deconv2_w"], params["deconv2_b"], 2, 1, 1, "sigmoid")
    diff = z[:, None, :] - params["prototypes"][None, :, :]
    dist = jnp.sum(diff * diff, axis=-1)
    logits = jnp.dot(dist, params["cls_w"], precision=hp) + params["cls_b"]
    return z, dec, dist, logits


if __name__ == "__main__":
    batch, in_channels, spatial = 2, 4, 16
    latent_size, n_prototypes, n_classes = 32, 10, 5

    key = jax.random.PRNGKey(0)
    kx, kp = jax.random.split(key)
    x = jax.random.normal(kx, (batch, in_channels, spatial, spatial), dtype=jnp.float32)
    params = init_params(kp, in_channels, latent_size, n_prototypes, n_classes)

    # Weight-only preprocessing: built ONCE, reused for every forward call.
    dense, meta = build_dense_params(params, spatial, spatial)

    fwd = jax.jit(lambda xx, dd: prototype_model_forward(xx, dd, meta))
    encoded, decoded, (distances, logits) = fwd(x, dense)
    jax.block_until_ready((encoded, decoded, distances, logits))

    assert encoded.shape == (batch, latent_size)
    assert decoded.shape == (batch, in_channels, spatial, spatial)
    assert distances.shape == (batch, n_prototypes)
    assert logits.shape == (batch, n_classes)

    # Numerical check vs. the f32 direct-conv reference.  The kernel uses bf16
    # MXU operands (f32 accumulation), so tolerances are slightly looser than
    # pure-f32 round-off.
    r_enc, r_dec, r_dist, r_log = _reference_forward(x, params)
    for got, ref in ((encoded, r_enc), (decoded, r_dec),
                     (distances, r_dist), (logits, r_log)):
        err = float(jnp.max(jnp.abs(got - ref)))
        assert bool(jnp.allclose(got, ref, rtol=5e-2, atol=3e-2)), f"max abs err {err}"

    print("KERNEL_OK")
</pallas_src>

<mosaic_0001>
module attributes {stable_mosaic.version = 11 : i64} {
  func.func @_fused_kernel(%arg0: i32, %arg1: memref<2x1024xf32, #tpu.memory_space<vmem>>, %arg2: memref<1024x512xbf16, #tpu.memory_space<vmem>>, %arg3: memref<1x512xf32, #tpu.memory_space<vmem>>, %arg4: memref<512x256xbf16, #tpu.memory_space<vmem>>, %arg5: memref<1x256xf32, #tpu.memory_space<vmem>>, %arg6: memref<256x128xbf16, #tpu.memory_space<vmem>>, %arg7: memref<1x128xf32, #tpu.memory_space<vmem>>, %arg8: memref<128x256xbf16, #tpu.memory_space<vmem>>, %arg9: memref<1x256xf32, #tpu.memory_space<vmem>>, %arg10: memref<256x512xbf16, #tpu.memory_space<vmem>>, %arg11: memref<1x512xf32, #tpu.memory_space<vmem>>, %arg12: memref<512x1024xbf16, #tpu.memory_space<vmem>>, %arg13: memref<1x1024xf32, #tpu.memory_space<vmem>>, %arg14: memref<128x128xf32, #tpu.memory_space<vmem>>, %arg15: memref<1x128xf32, #tpu.memory_space<vmem>>, %arg16: memref<128x128xf32, #tpu.memory_space<vmem>>, %arg17: memref<1x128xf32, #tpu.memory_space<vmem>>, %arg18: memref<2x1024xf32, #tpu.memory_space<vmem>>, %arg19: memref<2x128xf32, #tpu.memory_space<vmem>>, %arg20: memref<2x128xf32, #tpu.memory_space<vmem>>, %arg21: memref<2x128xf32, #tpu.memory_space<vmem>>) attributes {dimension_semantics = [#tpu.dimension_semantics<parallel>], iteration_bounds = array<i64: 1>, scalar_prefetch = 0 : i64, scratch_operands = 0 : i64, tpu.core_type = #tpu.core_type<tc>, window_params = [{transform_indices = @transform_0, window_bounds = array<i64: 2, 1024>}, {pipeline_mode = #tpu.pipeline_mode<synchronous>, transform_indices = @transform_1, window_bounds = array<i64: 1024, 512>}, {pipeline_mode = #tpu.pipeline_mode<synchronous>, transform_indices = @transform_2, window_bounds = array<i64: 1, 512>}, {pipeline_mode = #tpu.pipeline_mode<synchronous>, transform_indices = @transform_3, window_bounds = array<i64: 512, 256>}, {pipeline_mode = #tpu.pipeline_mode<synchronous>, transform_indices = @transform_4, window_bounds = array<i64: 1, 256>}, {pipeline_mode = #tpu.pipeline_mode<synchronous>, transform_indices = @transform_5, window_bounds = array<i64: 256, 128>}, {pipeline_mode = #tpu.pipeline_mode<synchronous>, transform_indices = @transform_6, window_bounds = array<i64: 1, 128>}, {pipeline_mode = #tpu.pipeline_mode<synchronous>, transform_indices = @transform_7, window_bounds = array<i64: 128, 256>}, {pipeline_mode = #tpu.pipeline_mode<synchronous>, transform_indices = @transform_8, window_bounds = array<i64: 1, 256>}, {pipeline_mode = #tpu.pipeline_mode<synchronous>, transform_indices = @transform_9, window_bounds = array<i64: 256, 512>}, {pipeline_mode = #tpu.pipeline_mode<synchronous>, transform_indices = @transform_10, window_bounds = array<i64: 1, 512>}, {pipeline_mode = #tpu.pipeline_mode<synchronous>, transform_indices = @transform_11, window_bounds = array<i64: 512, 1024>}, {pipeline_mode = #tpu.pipeline_mode<synchronous>, transform_indices = @transform_12, window_bounds = array<i64: 1, 1024>}, {pipeline_mode = #tpu.pipeline_mode<synchronous>, transform_indices = @transform_13, window_bounds = array<i64: 128, 128>}, {pipeline_mode = #tpu.pipeline_mode<synchronous>, transform_indices = @transform_14, window_bounds = array<i64: 1, 128>}, {pipeline_mode = #tpu.pipeline_mode<synchronous>, transform_indices = @transform_15, window_bounds = array<i64: 128, 128>}, {pipeline_mode = #tpu.pipeline_mode<synchronous>, transform_indices = @transform_16, window_bounds = array<i64: 1, 128>}, {transform_indices = @transform_17, window_bounds = array<i64: 2, 1024>}, {transform_indices = @transform_18, window_bounds = array<i64: 2, 128>}, {transform_indices = @transform_19, window_bounds = array<i64: 2, 128>}, {transform_indices = @transform_20, window_bounds = array<i64: 2, 128>}]} {
    %c0 = arith.constant 0 : index
    %c0_0 = arith.constant 0 : index
    %0 = vector.load %arg1[%c0, %c0_0] : memref<2x1024xf32, #tpu.memory_space<vmem>>, vector<2x1024xf32>
    %1 = arith.truncf %0 : vector<2x1024xf32> to vector<2x1024xbf16>
    %c0_1 = arith.constant 0 : index
    %c0_2 = arith.constant 0 : index
    %2 = vector.load %arg2[%c0_1, %c0_2] : memref<1024x512xbf16, #tpu.memory_space<vmem>>, vector<1024x512xbf16>
    %cst = arith.constant dense<0.000000e+00> : vector<2x512xf32>
    %3 = tpu.matmul %1, %2, %cst {dimension_numbers = #tpu.dot_dimension_numbers<[1], [0], [0], [1], [0, 0, 1, 1], [], []>} : vector<2x1024xbf16>, vector<1024x512xbf16>, vector<2x512xf32> -> vector<2x512xf32>
    %c0_3 = arith.constant 0 : index
    %c0_4 = arith.constant 0 : index
    %4 = vector.load %arg3[%c0_3, %c0_4] : memref<1x512xf32, #tpu.memory_space<vmem>>, vector<1x512xf32>
    %5 = vector.broadcast %4 : vector<1x512xf32> to vector<2x512xf32>
    %6 = arith.addf %3, %5 : vector<2x512xf32>
    %cst_5 = arith.constant 0.000000e+00 : f32
    %7 = vector.broadcast %cst_5 : f32 to vector<2x512xf32>
    %8 = arith.maximumf %6, %7 : vector<2x512xf32>
    %9 = arith.truncf %8 : vector<2x512xf32> to vector<2x512xbf16>
    %c0_6 = arith.constant 0 : index
    %c0_7 = arith.constant 0 : index
    %10 = vector.load %arg4[%c0_6, %c0_7] : memref<512x256xbf16, #tpu.memory_space<vmem>>, vector<512x256xbf16>
    %cst_8 = arith.constant dense<0.000000e+00> : vector<2x256xf32>
    %11 = tpu.matmul %9, %10, %cst_8 {dimension_numbers = #tpu.dot_dimension_numbers<[1], [0], [0], [1], [0, 0, 1, 1], [], []>} : vector<2x512xbf16>, vector<512x256xbf16>, vector<2x256xf32> -> vector<2x256xf32>
    %c0_9 = arith.constant 0 : index
    %c0_10 = arith.constant 0 : index
    %12 = vector.load %arg5[%c0_9, %c0_10] : memref<1x256xf32, #tpu.memory_space<vmem>>, vector<1x256xf32>
    %13 = vector.broadcast %12 : vector<1x256xf32> to vector<2x256xf32>
    %14 = arith.addf %11, %13 : vector<2x256xf32>
    %cst_11 = arith.constant 0.000000e+00 : f32
    %15 = vector.broadcast %cst_11 : f32 to vector<2x256xf32>
    %16 = arith.maximumf %14, %15 : vector<2x256xf32>
    %17 = arith.truncf %16 : vector<2x256xf32> to vector<2x256xbf16>
    %c0_12 = arith.constant 0 : index
    %c0_13 = arith.constant 0 : index
    %18 = vector.load %arg6[%c0_12, %c0_13] : memref<256x128xbf16, #tpu.memory_space<vmem>>, vector<256x128xbf16>
    %cst_14 = arith.constant dense<0.000000e+00> : vector<2x128xf32>
    %19 = tpu.matmul %17, %18, %cst_14 {dimension_numbers = #tpu.dot_dimension_numbers<[1], [0], [0], [1], [0, 0, 1, 1], [], []>} : vector<2x256xbf16>, vector<256x128xbf16>, vector<2x128xf32> -> vector<2x128xf32>
    %c0_15 = arith.constant 0 : index
    %c0_16 = arith.constant 0 : index
    %20 = vector.load %arg7[%c0_15, %c0_16] : memref<1x128xf32, #tpu.memory_space<vmem>>, vector<1x128xf32>
    %21 = vector.broadcast %20 : vector<1x128xf32> to vector<2x128xf32>
    %22 = arith.addf %19, %21 : vector<2x128xf32>
    %c0_17 = arith.constant 0 : index
    %c0_18 = arith.constant 0 : index
    %23 = vector.load %arg19[%c0_17, %c0_18] : memref<2x128xf32, #tpu.memory_space<vmem>>, vector<2x128xf32>
    tpu.vector_store %arg19[%c0_17, %c0_18], %22 {strides = array<i32>} : memref<2x128xf32, #tpu.memory_space<vmem>>, vector<2x128xf32>,
    %24 = arith.truncf %22 : vector<2x128xf32> to vector<2x128xbf16>
    %c0_19 = arith.constant 0 : index
    %c0_20 = arith.constant 0 : index
    %25 = vector.load %arg8[%c0_19, %c0_20] : memref<128x256xbf16, #tpu.memory_space<vmem>>, vector<128x256xbf16>
    %cst_21 = arith.constant dense<0.000000e+00> : vector<2x256xf32>
    %26 = tpu.matmul %24, %25, %cst_21 {dimension_numbers = #tpu.dot_dimension_numbers<[1], [0], [0], [1], [0, 0, 1, 1], [], []>} : vector<2x128xbf16>, vector<128x256xbf16>, vector<2x256xf32> -> vector<2x256xf32>
    %c0_22 = arith.constant 0 : index
    %c0_23 = arith.constant 0 : index
    %27 = vector.load %arg9[%c0_22, %c0_23] : memref<1x256xf32, #tpu.memory_space<vmem>>, vector<1x256xf32>
    %28 = vector.broadcast %27 : vector<1x256xf32> to vector<2x256xf32>
    %29 = arith.addf %26, %28 : vector<2x256xf32>
    %cst_24 = arith.constant 0.000000e+00 : f32
    %30 = vector.broadcast %cst_24 : f32 to vector<2x256xf32>
    %31 = arith.maximumf %29, %30 : vector<2x256xf32>
    %32 = arith.truncf %31 : vector<2x256xf32> to vector<2x256xbf16>
    %c0_25 = arith.constant 0 : index
    %c0_26 = arith.constant 0 : index
    %33 = vector.load %arg10[%c0_25, %c0_26] : memref<256x512xbf16, #tpu.memory_space<vmem>>, vector<256x512xbf16>
    %cst_27 = arith.constant dense<0.000000e+00> : vector<2x512xf32>
    %34 = tpu.matmul %32, %33, %cst_27 {dimension_numbers = #tpu.dot_dimension_numbers<[1], [0], [0], [1], [0, 0, 1, 1], [], []>} : vector<2x256xbf16>, vector<256x512xbf16>, vector<2x512xf32> -> vector<2x512xf32>
    %c0_28 = arith.constant 0 : index
    %c0_29 = arith.constant 0 : index
    %35 = vector.load %arg11[%c0_28, %c0_29] : memref<1x512xf32, #tpu.memory_space<vmem>>, vector<1x512xf32>
    %36 = vector.broadcast %35 : vector<1x512xf32> to vector<2x512xf32>
    %37 = arith.addf %34, %36 : vector<2x512xf32>
    %cst_30 = arith.constant 0.000000e+00 : f32
    %38 = vector.broadcast %cst_30 : f32 to vector<2x512xf32>
    %39 = arith.maximumf %37, %38 : vector<2x512xf32>
    %40 = arith.truncf %39 : vector<2x512xf32> to vector<2x512xbf16>
    %c0_31 = arith.constant 0 : index
    %c0_32 = arith.constant 0 : index
    %41 = vector.load %arg12[%c0_31, %c0_32] : memref<512x1024xbf16, #tpu.memory_space<vmem>>, vector<512x1024xbf16>
    %cst_33 = arith.constant dense<0.000000e+00> : vector<2x1024xf32>
    %42 = tpu.matmul %40, %41, %cst_33 {dimension_numbers = #tpu.dot_dimension_numbers<[1], [0], [0], [1], [0, 0, 1, 1], [], []>} : vector<2x512xbf16>, vector<512x1024xbf16>, vector<2x1024xf32> -> vector<2x1024xf32>
    %c0_34 = arith.constant 0 : index
    %c0_35 = arith.constant 0 : index
    %43 = vector.load %arg13[%c0_34, %c0_35] : memref<1x1024xf32, #tpu.memory_space<vmem>>, vector<1x1024xf32>
    %44 = vector.broadcast %43 : vector<1x1024xf32> to vector<2x1024xf32>
    %45 = arith.addf %42, %44 : vector<2x1024xf32>
    %cst_36 = arith.constant 0.000000e+00 : f32
    %46 = vector.broadcast %cst_36 : f32 to vector<2x1024xf32>
    %47 = arith.subf %46, %45 : vector<2x1024xf32>
    %48 = math.exp %47 : vector<2x1024xf32>
    %cst_37 = arith.constant 1.000000e+00 : f32
    %49 = vector.broadcast %cst_37 : f32 to vector<2x1024xf32>
    %50 = arith.addf %49, %48 : vector<2x1024xf32>
    %51 = tpu.reciprocal %50 {approx = true} : vector<2x1024xf32> -> vector<2x1024xf32>
    %c0_38 = arith.constant 0 : index
    %c0_39 = arith.constant 0 : index
    %52 = vector.load %arg18[%c0_38, %c0_39] : memref<2x1024xf32, #tpu.memory_space<vmem>>, vector<2x1024xf32>
    tpu.vector_store %arg18[%c0_38, %c0_39], %51 {strides = array<i32>} : memref<2x1024xf32, #tpu.memory_space<vmem>>, vector<2x1024xf32>,
    %53 = arith.mulf %22, %22 : vector<2x128xf32>
    %cst_40 = arith.constant dense<0.000000e+00> : vector<2xf32>
    %54 = vector.multi_reduction <add>, %53, %cst_40 [1] : vector<2x128xf32> to vector<2xf32>
    %55 = vector.shape_cast %54 : vector<2xf32> to vector<2x1xf32>
    %c0_41 = arith.constant 0 : index
    %c0_42 = arith.constant 0 : index
    %56 = vector.load %arg15[%c0_41, %c0_42] : memref<1x128xf32, #tpu.memory_space<vmem>>, vector<1x128xf32>
    %57 = vector.broadcast %55 : vector<2x1xf32> to vector<2x128xf32>
    %58 = vector.broadcast %56 : vector<1x128xf32> to vector<2x128xf32>
    %59 = arith.addf %57, %58 : vector<2x128xf32>
    %c0_43 = arith.constant 0 : index
    %c0_44 = arith.constant 0 : index
    %60 = vector.load %arg14[%c0_43, %c0_44] : memref<128x128xf32, #tpu.memory_space<vmem>>, vector<128x128xf32>
    %cst_45 = arith.constant dense<0.000000e+00> : vector<2x128xf32>
    %61 = tpu.matmul %22, %60, %cst_45 {dimension_numbers = #tpu.dot_dimension_numbers<[1], [0], [0], [1], [0, 0, 1, 1], [], []>} : vector<2x128xf32>, vector<128x128xf32>, vector<2x128xf32> -> vector<2x128xf32>
    %cst_46 = arith.constant 2.000000e+00 : f32
    %62 = vector.broadcast %cst_46 : f32 to vector<2x128xf32>
    %63 = arith.mulf %62, %61 : vector<2x128xf32>
    %64 = arith.subf %59, %63 : vector<2x128xf32>
    %cst_47 = arith.constant 0.000000e+00 : f32
    %65 = vector.broadcast %cst_47 : f32 to vector<2x128xf32>
    %66 = arith.maximumf %64, %65 : vector<2x128xf32>
    %c0_48 = arith.constant 0 : index
    %c0_49 = arith.constant 0 : index
    %67 = vector.load %arg20[%c0_48, %c0_49] : memref<2x128xf32, #tpu.memory_space<vmem>>, vector<2x128xf32>
    tpu.vector_store %arg20[%c0_48, %c0_49], %66 {strides = array<i32>} : memref<2x128xf32, #tpu.memory_space<vmem>>, vector<2x128xf32>,
    %c0_50 = arith.constant 0 : index
    %c0_51 = arith.constant 0 : index
    %68 = vector.load %arg16[%c0_50, %c0_51] : memref<128x128xf32, #tpu.memory_space<vmem>>, vector<128x128xf32>
    %cst_52 = arith.constant dense<0.000000e+00> : vector<2x128xf32>
    %69 = tpu.matmul %66, %68, %cst_52 {dimension_numbers = #tpu.dot_dimension_numbers<[1], [0], [0], [1], [0, 0, 1, 1], [], []>} : vector<2x128xf32>, vector<128x128xf32>, vector<2x128xf32> -> vector<2x128xf32>
    %c0_53 = arith.constant 0 : index
    %c0_54 = arith.constant 0 : index
    %70 = vector.load %arg17[%c0_53, %c0_54] : memref<1x128xf32, #tpu.memory_space<vmem>>, vector<1x128xf32>
    %71 = vector.broadcast %70 : vector<1x128xf32> to vector<2x128xf32>
    %72 = arith.addf %69, %71 : vector<2x128xf32>
    %c0_55 = arith.constant 0 : index
    %c0_56 = arith.constant 0 : index
    %73 = vector.load %arg21[%c0_55, %c0_56] : memref<2x128xf32, #tpu.memory_space<vmem>>, vector<2x128xf32>
    tpu.vector_store %arg21[%c0_55, %c0_56], %72 {strides = array<i32>} : memref<2x128xf32, #tpu.memory_space<vmem>>, vector<2x128xf32>,
    return
  }
  func.func @transform_0(%arg0: i32) -> (i32, i32) {
    %c0_i32 = arith.constant 0 : i32
    %c0_i32_0 = arith.constant 0 : i32
    return %arg0, %c0_i32 : i32, i32
  }
  func.func @transform_1(%arg0: i32) -> (i32, i32) {
    %c0_i32 = arith.constant 0 : i32
    %c0_i32_0 = arith.constant 0 : i32
    %c0_i32_1 = arith.constant 0 : i32
    return %c0_i32, %c0_i32_0 : i32, i32
  }
  func.func @transform_2(%arg0: i32) -> (i32, i32) {
    %c0_i32 = arith.constant 0 : i32
    %c0_i32_0 = arith.constant 0 : i32
    %c0_i32_1 = arith.constant 0 : i32
    return %c0_i32, %c0_i32_0 : i32, i32
  }
  func.func @transform_3(%arg0: i32) -> (i32, i32) {
    %c0_i32 = arith.constant 0 : i32
    %c0_i32_0 = arith.constant 0 : i32
    %c0_i32_1 = arith.constant 0 : i32
    return %c0_i32, %c0_i32_0 : i32, i32
  }
  func.func @transform_4(%arg0: i32) -> (i32, i32) {
    %c0_i32 = arith.constant 0 : i32
    %c0_i32_0 = arith.constant 0 : i32
    %c0_i32_1 = arith.constant 0 : i32
    return %c0_i32, %c0_i32_0 : i32, i32
  }
  func.func @transform_5(%arg0: i32) -> (i32, i32) {
    %c0_i32 = arith.constant 0 : i32
    %c0_i32_0 = arith.constant 0 : i32
    %c0_i32_1 = arith.constant 0 : i32
    return %c0_i32, %c0_i32_0 : i32, i32
  }
  func.func @transform_6(%arg0: i32) -> (i32, i32) {
    %c0_i32 = arith.constant 0 : i32
    %c0_i32_0 = arith.constant 0 : i32
    %c0_i32_1 = arith.constant 0 : i32
    return %c0_i32, %c0_i32_0 : i32, i32
  }
  func.func @transform_7(%arg0: i32) -> (i32, i32) {
    %c0_i32 = arith.constant 0 : i32
    %c0_i32_0 = arith.constant 0 : i32
    %c0_i32_1 = arith.constant 0 : i32
    return %c0_i32, %c0_i32_0 : i32, i32
  }
  func.func @transform_8(%arg0: i32) -> (i32, i32) {
    %c0_i32 = arith.constant 0 : i32
    %c0_i32_0 = arith.constant 0 : i32
    %c0_i32_1 = arith.constant 0 : i32
    return %c0_i32, %c0_i32_0 : i32, i32
  }
  func.func @transform_9(%arg0: i32) -> (i32, i32) {
    %c0_i32 = arith.constant 0 : i32
    %c0_i32_0 = arith.constant 0 : i32
    %c0_i32_1 = arith.constant 0 : i32
    return %c0_i32, %c0_i32_0 : i32, i32
  }
  func.func @transform_10(%arg0: i32) -> (i32, i32) {
    %c0_i32 = arith.constant 0 : i32
    %c0_i32_0 = arith.constant 0 : i32
    %c0_i32_1 = arith.constant 0 : i32
    return %c0_i32, %c0_i32_0 : i32, i32
  }
  func.func @transform_11(%arg0: i32) -> (i32, i32) {
    %c0_i32 = arith.constant 0 : i32
    %c0_i32_0 = arith.constant 0 : i32
    %c0_i32_1 = arith.constant 0 : i32
    return %c0_i32, %c0_i32_0 : i32, i32
  }
  func.func @transform_12(%arg0: i32) -> (i32, i32) {
    %c0_i32 = arith.constant 0 : i32
    %c0_i32_0 = arith.constant 0 : i32
    %c0_i32_1 = arith.constant 0 : i32
    return %c0_i32, %c0_i32_0 : i32, i32
  }
  func.func @transform_13(%arg0: i32) -> (i32, i32) {
    %c0_i32 = arith.constant 0 : i32
    %c0_i32_0 = arith.constant 0 : i32
    %c0_i32_1 = arith.constant 0 : i32
    return %c0_i32, %c0_i32_0 : i32, i32
  }
  func.func @transform_14(%arg0: i32) -> (i32, i32) {
    %c0_i32 = arith.constant 0 : i32
    %c0_i32_0 = arith.constant 0 : i32
    %c0_i32_1 = arith.constant 0 : i32
    return %c0_i32, %c0_i32_0 : i32, i32
  }
  func.func @transform_15(%arg0: i32) -> (i32, i32) {
    %c0_i32 = arith.constant 0 : i32
    %c0_i32_0 = arith.constant 0 : i32
    %c0_i32_1 = arith.constant 0 : i32
    return %c0_i32, %c0_i32_0 : i32, i32
  }
  func.func @transform_16(%arg0: i32) -> (i32, i32) {
    %c0_i32 = arith.constant 0 : i32
    %c0_i32_0 = arith.constant 0 : i32
    %c0_i32_1 = arith.constant 0 : i32
    return %c0_i32, %c0_i32_0 : i32, i32
  }
  func.func @transform_17(%arg0: i32) -> (i32, i32) {
    %c0_i32 = arith.constant 0 : i32
    %c0_i32_0 = arith.constant 0 : i32
    return %arg0, %c0_i32 : i32, i32
  }
  func.func @transform_18(%arg0: i32) -> (i32, i32) {
    %c0_i32 = arith.constant 0 : i32
    %c0_i32_0 = arith.constant 0 : i32
    return %arg0, %c0_i32 : i32, i32
  }
  func.func @transform_19(%arg0: i32) -> (i32, i32) {
    %c0_i32 = arith.constant 0 : i32
    %c0_i32_0 = arith.constant 0 : i32
    return %arg0, %c0_i32 : i32, i32
  }
  func.func @transform_20(%arg0: i32) -> (i32, i32) {
    %c0_i32 = arith.constant 0 : i32
    %c0_i32_0 = arith.constant 0 : i32
    return %arg0, %c0_i32 : i32, i32
  }
}

</mosaic_0001>

<llo_original>
// kernel: _lambda_.1
$region0: #{_lambda_.1}
  #allocation0 [shape = 'u32[]', space=smem, size = 0x4, offset = 0x4, fixed_abs, tag = 'smem constant byte address 0x4 - core index']
  #allocation1 [shape = 'u32[72,128]{1,0:T(1,128)}', space=vmem, size = 0x9000, scoped, tag = 'internal scratch']
  %s0 = inlined_call_operand.vmem [shape: f32[2,1024], index: 0, kind: input, shape index: {}]
  %s1 = inlined_call_operand.hbm [shape: bf16[1024,512], index: 1, kind: input, shape index: {}]
  %s2 = inlined_call_operand.vmem [shape: f32[1,512], index: 2, kind: input, shape index: {}]
  %s3 = inlined_call_operand.hbm [shape: bf16[512,256], index: 3, kind: input, shape index: {}]
  %s4 = inlined_call_operand.vmem [shape: f32[1,256], index: 4, kind: input, shape index: {}]
  %s5 = inlined_call_operand.vmem [shape: bf16[256,128], index: 5, kind: input, shape index: {}]
  %s6 = inlined_call_operand.vmem [shape: f32[1,128], index: 6, kind: input, shape index: {}]
  %s7 = inlined_call_operand.hbm [shape: bf16[128,256], index: 7, kind: input, shape index: {}]
  %s8 = inlined_call_operand.vmem [shape: f32[1,256], index: 8, kind: input, shape index: {}]
  %s9 = inlined_call_operand.hbm [shape: bf16[256,512], index: 9, kind: input, shape index: {}]
  %s10 = inlined_call_operand.vmem [shape: f32[1,512], index: 10, kind: input, shape index: {}]
  %s11 = inlined_call_operand.hbm [shape: bf16[512,1024], index: 11, kind: input, shape index: {}]
  %s12 = inlined_call_operand.vmem [shape: f32[1,1024], index: 12, kind: input, shape index: {}]
  %s13 = inlined_call_operand.hbm [shape: f32[128,128], index: 13, kind: input, shape index: {}]
  %s14 = inlined_call_operand.vmem [shape: f32[1,128], index: 14, kind: input, shape index: {}]
  %s15 = inlined_call_operand.hbm [shape: f32[128,128], index: 15, kind: input, shape index: {}]
  %s16 = inlined_call_operand.vmem [shape: f32[1,128], index: 16, kind: input, shape index: {}]
  %s17 = inlined_call_operand.vmem [shape: f32[2,1024], index: 17, kind: output, shape index: {0}]
  %s18 = inlined_call_operand.hbm [shape: f32[2,128], index: 18, kind: output, shape index: {1}]
  %s19 = inlined_call_operand.hbm [shape: f32[2,128], index: 19, kind: output, shape index: {2}]
  %s20 = inlined_call_operand.hbm [shape: f32[2,128], index: 20, kind: output, shape index: {3}]
  %21 = xla_tuple %s17, %s18, %s19, %s20
  %s22 = sld [smem:[#allocation0]]
  $region130: #{_lambda_.1} parent=0
    _
  %s24 = ssub.s32 1, %s22
  %s25 = scalar_select 0, %s24, %s22
  $region1: #{_lambda_.1} parent=0
    #allocation2 [shape = 'u8[1048576]{0}', space=vmem, size = 0x100000, scoped, tag = 'input window, operand 1, single buffered']
    #allocation3 [shape = 's32[1]{0}', space=sflag, size = 0x4, scoped, tag = 'scoped memory for _lambda_.1']
    #allocation4 [shape = 's32[1]{0}', space=sflag, size = 0x4, scoped, tag = 'scoped memory for _lambda_.1']
    #allocation5 [shape = 'u8[262144]{0}', space=vmem, size = 0x40000, scoped, tag = 'input window, operand 3, single buffered']
    #allocation6 [shape = 's32[1]{0}', space=sflag, size = 0x4, scoped, tag = 'scoped memory for _lambda_.1']
    #allocation7 [shape = 'u8[65536]{0}', space=vmem, size = 0x10000, scoped, tag = 'input window, operand 7, single buffered']
    #allocation8 [shape = 'u8[262144]{0}', space=vmem, size = 0x40000, scoped, tag = 'input window, operand 9, single buffered']
    #allocation9 [shape = 's32[1]{0}', space=sflag, size = 0x4, scoped, tag = 'scoped memory for _lambda_.1']
    #allocation10 [shape = 'u8[1048576]{0}', space=vmem, size = 0x100000, scoped, tag = 'input window, operand 11, single buffered']
    #allocation11 [shape = 'u8[65536]{0}', space=vmem, size = 0x10000, scoped, tag = 'input window, operand 13, single buffered']
    #allocation12 [shape = 's32[1]{0}', space=sflag, size = 0x4, scoped, tag = 'scoped memory for _lambda_.1']
    #allocation13 [shape = 'u8[65536]{0}', space=vmem, size = 0x10000, scoped, tag = 'input window, operand 15, single buffered']
    #allocation14 [shape = 'u8[1024]{0}', space=vmem, size = 0x400, scoped, tag = 'output window, operand 1, single buffered']
    #allocation15 [shape = 'u8[1024]{0}', space=vmem, size = 0x400, scoped, tag = 'output window, operand 2, single buffered']
    #allocation16 [shape = 's32[1]{0}', space=sflag, size = 0x4, scoped, tag = 'scoped memory for _lambda_.1']
    #allocation17 [shape = 'u8[1024]{0}', space=vmem, size = 0x400, scoped, tag = 'output window, operand 3, single buffered']
    %26 = vsyncpa [#allocation3], 0
    %27 = vsyncpa [#allocation6], 0
    %28 = vsyncpa [#allocation9], 0
    %29 = vsyncpa [#allocation12], 0
    %30 = vsyncpa [#allocation4], 0
    %31 = vsyncpa [#allocation16], 0
    // Predicated region
    $region2: #{_lambda_.1} parent=1 // pred_check
      _
    $region3: #{_lambda_.1} parent=1 // pred_check_branch
      %33 = sbr.rel (0) target = $region5
    $region4: #{_lambda_.1} parent=1 // pred_region
      _
    $region5: #{_lambda_.1} parent=1 // pred_fallthru
      _
    // Predicated region
    $region6: #{_lambda_.1} parent=1 // pred_check
      _
    $region7: #{_lambda_.1} parent=1 // pred_check_branch
      %35 = sbr.rel (0) target = $region9
    $region8: #{_lambda_.1} parent=1 // pred_region
      %37 = vsyncadd [#allocation3], 0
      %s38 = sshll.u32 %s1, 4
      %s39 = int_to_ptr.hbm [resolvable:$true] %s38
      %s40 = sshll.u32 [#allocation2], 4
      %s41 = int_to_ptr.vmem [resolvable:$true] %s40
      %46 = dma.hbm_to_vmem [thread:$0]  %s39, 32768, %s41, [#allocation3], 256, 256, 16
    $region9: #{_lambda_.1} parent=1 // pred_fallthru
      _
    // Predicated region
    $region10: #{_lambda_.1} parent=1 // pred_check
      _
    $region11: #{_lambda_.1} parent=1 // pred_check_branch
      %48 = sbr.rel (0) target = $region13
    $region12: #{_lambda_.1} parent=1 // pred_region
      _
    $region13: #{_lambda_.1} parent=1 // pred_fallthru
      _
    // Predicated region
    $region14: #{_lambda_.1} parent=1 // pred_check
      _
    $region15: #{_lambda_.1} parent=1 // pred_check_branch
      %50 = sbr.rel (0) target = $region17
    $region16: #{_lambda_.1} parent=1 // pred_region
      %52 = vsyncadd [#allocation6], 0
      %s53 = sshll.u32 %s3, 4
      %s54 = int_to_ptr.hbm [resolvable:$true] %s53
      %s55 = sshll.u32 [#allocation5], 4
      %s56 = int_to_ptr.vmem [resolvable:$true] %s55
      %61 = dma.hbm_to_vmem [thread:$0]  %s54, 8192, %s56, [#allocation6], 128, 128, 8
    $region17: #{_lambda_.1} parent=1 // pred_fallthru
      _
    // Predicated region
    $region18: #{_lambda_.1} parent=1 // pred_check
      _
    $region19: #{_lambda_.1} parent=1 // pred_check_branch
      %63 = sbr.rel (0) target = $region21
    $region20: #{_lambda_.1} parent=1 // pred_region
      _
    $region21: #{_lambda_.1} parent=1 // pred_fallthru
      _
    // Predicated region
    $region22: #{_lambda_.1} parent=1 // pred_check
      _
    $region23: #{_lambda_.1} parent=1 // pred_check_branch
      %65 = sbr.rel (0) target = $region25
    $region24: #{_lambda_.1} parent=1 // pred_region
      _
    $region25: #{_lambda_.1} parent=1 // pred_fallthru
      _
    // Predicated region
    $region26: #{_lambda_.1} parent=1 // pred_check
      _
    $region27: #{_lambda_.1} parent=1 // pred_check_branch
      %67 = sbr.rel (0) target = $region29
    $region28: #{_lambda_.1} parent=1 // pred_region
      _
    $region29: #{_lambda_.1} parent=1 // pred_fallthru
      _
    // Predicated region
    $region30: #{_lambda_.1} parent=1 // pred_check
      _
    $region31: #{_lambda_.1} parent=1 // pred_check_branch
      %69 = sbr.rel (0) target = $region33
    $region32: #{_lambda_.1} parent=1 // pred_region
      %71 = vsyncadd [#allocation6], 0
      %s72 = sshll.u32 %s7, 4
      %s73 = int_to_ptr.hbm [resolvable:$true] %s72
      %s74 = sshll.u32 [#allocation7], 4
      %s75 = int_to_ptr.vmem [resolvable:$true] %s74
      %80 = dma.hbm_to_vmem [thread:$0]  %s73, 2048, %s75, [#allocation6], 128, 128, 8
    $region33: #{_lambda_.1} parent=1 // pred_fallthru
      _
    // Predicated region
    $region34: #{_lambda_.1} parent=1 // pred_check
      _
    $region35: #{_lambda_.1} parent=1 // pred_check_branch
      %82 = sbr.rel (0) target = $region37
    $region36: #{_lambda_.1} parent=1 // pred_region
      _
    $region37: #{_lambda_.1} parent=1 // pred_fallthru
      _
    // Predicated region
    $region38: #{_lambda_.1} parent=1 // pred_check
      _
    $region39: #{_lambda_.1} parent=1 // pred_check_branch
      %84 = sbr.rel (0) target = $region41
    $region40: #{_lambda_.1} parent=1 // pred_region
      %86 = vsyncadd [#allocation9], 0
      %s87 = sshll.u32 %s9, 4
      %s88 = int_to_ptr.hbm [resolvable:$true] %s87
      %s89 = sshll.u32 [#allocation8], 4
      %s90 = int_to_ptr.vmem [resolvable:$true] %s89
      %95 = dma.hbm_to_vmem [thread:$0]  %s88, 8192, %s90, [#allocation9], 256, 256, 16
    $region41: #{_lambda_.1} parent=1 // pred_fallthru
      _
    // Predicated region
    $region42: #{_lambda_.1} parent=1 // pred_check
      _
    $region43: #{_lambda_.1} parent=1 // pred_check_branch
      %97 = sbr.rel (0) target = $region45
    $region44: #{_lambda_.1} parent=1 // pred_region
      _
    $region45: #{_lambda_.1} parent=1 // pred_fallthru
      _
    // Predicated region
    $region46: #{_lambda_.1} parent=1 // pred_check
      _
    $region47: #{_lambda_.1} parent=1 // pred_check_branch
      %99 = sbr.rel (0) target = $region49
    $region48: #{_lambda_.1} parent=1 // pred_region
      %101 = vsyncadd [#allocation9], 0
      %s102 = sshll.u32 %s11, 4
      %s103 = int_to_ptr.hbm [resolvable:$true] %s102
      %s104 = sshll.u32 [#allocation10], 4
      %s105 = int_to_ptr.vmem [resolvable:$true] %s104
      %110 = dma.hbm_to_vmem [thread:$0]  %s103, 32768, %s105, [#allocation9], 512, 512, 32
    $region49: #{_lambda_.1} parent=1 // pred_fallthru
      _
    // Predicated region
    $region50: #{_lambda_.1} parent=1 // pred_check
      _
    $region51: #{_lambda_.1} parent=1 // pred_check_branch
      %112 = sbr.rel (0) target = $region53
    $region52: #{_lambda_.1} parent=1 // pred_region
      _
    $region53: #{_lambda_.1} parent=1 // pred_fallthru
      _
    // Predicated region
    $region54: #{_lambda_.1} parent=1 // pred_check
      _
    $region55: #{_lambda_.1} parent=1 // pred_check_branch
      %114 = sbr.rel (0) target = $region57
    $region56: #{_lambda_.1} parent=1 // pred_region
      %116 = vsyncadd [#allocation12], 0
      %s117 = sshll.u32 %s13, 4
      %s118 = int_to_ptr.hbm [resolvable:$true] %s117
      %s119 = sshll.u32 [#allocation11], 4
      %s120 = int_to_ptr.vmem [resolvable:$true] %s119
      %125 = dma.hbm_to_vmem [thread:$0]  %s118, 2048, %s120, [#allocation12], 128, 128, 8
    $region57: #{_lambda_.1} parent=1 // pred_fallthru
      _
    // Predicated region
    $region58: #{_lambda_.1} parent=1 // pred_check
      _
    $region59: #{_lambda_.1} parent=1 // pred_check_branch
      %127 = sbr.rel (0) target = $region61
    $region60: #{_lambda_.1} parent=1 // pred_region
      _
    $region61: #{_lambda_.1} parent=1 // pred_fallthru
      _
    // Predicated region
    $region62: #{_lambda_.1} parent=1 // pred_check
      _
    $region63: #{_lambda_.1} parent=1 // pred_check_branch
      %129 = sbr.rel (0) target = $region65
    $region64: #{_lambda_.1} parent=1 // pred_region
      %131 = vsyncadd [#allocation12], 0
      %s132 = sshll.u32 %s15, 4
      %s133 = int_to_ptr.hbm [resolvable:$true] %s132
      %s134 = sshll.u32 [#allocation13], 4
      %s135 = int_to_ptr.vmem [resolvable:$true] %s134
      %140 = dma.hbm_to_vmem [thread:$0]  %s133, 2048, %s135, [#allocation12], 128, 128, 8
    $region65: #{_lambda_.1} parent=1 // pred_fallthru
      _
    // Predicated region
    $region66: #{_lambda_.1} parent=1 // pred_check
      _
    $region67: #{_lambda_.1} parent=1 // pred_check_branch
      %142 = sbr.rel (0) target = $region69
    $region68: #{_lambda_.1} parent=1 // pred_region
      _
    $region69: #{_lambda_.1} parent=1 // pred_fallthru
      _
    // Predicated region
    $region70: #{_lambda_.1} parent=1 // pred_check
      _
    $region71: #{_lambda_.1} parent=1 // pred_check_branch
      %144 = sbr.rel (0) target = $region73
    $region72: #{_lambda_.1} parent=1 // pred_region
      %146 = dma.done [#allocation3], 32768
    $region73: #{_lambda_.1} parent=1 // pred_fallthru
      _
    // Predicated region
    $region74: #{_lambda_.1} parent=1 // pred_check
      _
    $region75: #{_lambda_.1} parent=1 // pred_check_branch
      %148 = sbr.rel (0) target = $region77
    $region76: #{_lambda_.1} parent=1 // pred_region
      %150 = dma.done [#allocation6], 8192
    $region77: #{_lambda_.1} parent=1 // pred_fallthru
      _
    // Predicated region
    $region78: #{_lambda_.1} parent=1 // pred_check
      _
    $region79: #{_lambda_.1} parent=1 // pred_check_branch
      %152 = sbr.rel (0) target = $region81
    $region80: #{_lambda_.1} parent=1 // pred_region
      %154 = dma.done [#allocation6], 2048
    $region81: #{_lambda_.1} parent=1 // pred_fallthru
      _
    // Predicated region
    $region82: #{_lambda_.1} parent=1 // pred_check
      _
    $region83: #{_lambda_.1} parent=1 // pred_check_branch
      %156 = sbr.rel (0) target = $region85
    $region84: #{_lambda_.1} parent=1 // pred_region
      %158 = dma.done [#allocation9], 8192
    $region85: #{_lambda_.1} parent=1 // pred_fallthru
      _
    // Predicated region
    $region86: #{_lambda_.1} parent=1 // pred_check
      _
    $region87: #{_lambda_.1} parent=1 // pred_check_branch
      %160 = sbr.rel (0) target = $region89
    $region88: #{_lambda_.1} parent=1 // pred_region
      %162 = dma.done [#allocation9], 32768
    $region89: #{_lambda_.1} parent=1 // pred_fallthru
      _
    // Predicated region
    $region90: #{_lambda_.1} parent=1 // pred_check
      _
    $region91: #{_lambda_.1} parent=1 // pred_check_branch
      %164 = sbr.rel (0) target = $region93
    $region92: #{_lambda_.1} parent=1 // pred_region
      %166 = dma.done [#allocation12], 2048
    $region93: #{_lambda_.1} parent=1 // pred_fallthru
      _
    // Predicated region
    $region94: #{_lambda_.1} parent=1 // pred_check
      _
    $region95: #{_lambda_.1} parent=1 // pred_check_branch
      %168 = sbr.rel (0) target = $region97
    $region96: #{_lambda_.1} parent=1 // pred_region
      %170 = dma.done [#allocation12], 2048
    $region97: #{_lambda_.1} parent=1 // pred_fallthru
      _
    %v171 = vld [vmem:[%s0] sm:$0xff]
    %v172 = vld [vmem:[%s0 + $0x8] sm:$0xff]
    %175 = vst [vmem:[#allocation1] ss:$4 sm:$0xff] %v171
    %s176 = scalar_lea.vmem [#allocation1], 32
    %177 = vst [vmem:[%s176] ss:$4 sm:$0xff] %v172
    %v178 = vld.sshfl [vmem:[#allocation1] sm:$0xff pattern:$0x73625140]
    %v179 = vld.sshfl [vmem:[#allocation1 + $0x8] sm:$0xff pattern:$0x73625140]
    %v180 = vld.sshfl [vmem:[#allocation1 + $0x10] sm:$0xff pattern:$0x73625140]
    %v181 = vld.sshfl [vmem:[#allocation1 + $0x18] sm:$0xff pattern:$0x73625140]
    %v182 = vld.sshfl [vmem:[#allocation1 + $0x20] sm:$0xff pattern:$0x73625140]
    %v183 = vld.sshfl [vmem:[#allocation1 + $0x28] sm:$0xff pattern:$0x73625140]
    %v184 = vld.sshfl [vmem:[#allocation1 + $0x30] sm:$0xff pattern:$0x73625140]
    %v185 = vld.sshfl [vmem:[#allocation1 + $0x38] sm:$0xff pattern:$0x73625140]
    %v194 = vpack.c.bf16 %v178, %v178
    %v195 = vpack.c.bf16 %v179, %v179
    %v196 = vpack.c.bf16 %v180, %v180
    %v197 = vpack.c.bf16 %v181, %v181
    %v198 = vpack.c.bf16 %v182, %v182
    %v199 = vpack.c.bf16 %v183, %v183
    %v200 = vpack.c.bf16 %v184, %v184
    %v201 = vpack.c.bf16 %v185, %v185
    %v202 = vld [vmem:[#allocation2] sm:$0xff]
    %v203 = vld [vmem:[#allocation2 + $0x8] sm:$0xff]
    %v204 = vld [vmem:[#allocation2 + $0x10] sm:$0xff]
    %v205 = vld [vmem:[#allocation2 + $0x18] sm:$0xff]
    %v206 = vld [vmem:[#allocation2 + $0x20] sm:$0xff]
    %v207 = vld [vmem:[#allocation2 + $0x28] sm:$0xff]
    %v208 = vld [vmem:[#allocation2 + $0x30] sm:$0xff]
    %v209 = vld [vmem:[#allocation2 + $0x38] sm:$0xff]
    %v210 = vld [vmem:[#allocation2 + $0x40] sm:$0xff]
    %v211 = vld [vmem:[#allocation2 + $0x48] sm:$0xff]
    %v212 = vld [vmem:[#allocation2 + $0x50] sm:$0xff]
    %v213 = vld [vmem:[#allocation2 + $0x58] sm:$0xff]
    %v214 = vld [vmem:[#allocation2 + $0x60] sm:$0xff]
    %v215 = vld [vmem:[#allocation2 + $0x68] sm:$0xff]
    %v216 = vld [vmem:[#allocation2 + $0x70] sm:$0xff]
    %v217 = vld [vmem:[#allocation2 + $0x78] sm:$0xff]
    %v218 = vld [vmem:[#allocation2 + $0x80] sm:$0xff]
    %v219 = vld [vmem:[#allocation2 + $0x88] sm:$0xff]
    %v220 = vld [vmem:[#allocation2 + $0x90] sm:$0xff]
    %v221 = vld [vmem:[#allocation2 + $0x98] sm:$0xff]
    %v222 = vld [vmem:[#allocation2 + $0xa0] sm:$0xff]
    %v223 = vld [vmem:[#allocation2 + $0xa8] sm:$0xff]
    %v224 = vld [vmem:[#allocation2 + $0xb0] sm:$0xff]
    %v225 = vld [vmem:[#allocation2 + $0xb8] sm:$0xff]
    %v226 = vld [vmem:[#allocation2 + $0xc0] sm:$0xff]
    %v227 = vld [vmem:[#allocation2 + $0xc8] sm:$0xff]
    %v228 = vld [vmem:[#allocation2 + $0xd0] sm:$0xff]
    %v229 = vld [vmem:[#allocation2 + $0xd8] sm:$0xff]
    %v230 = vld [vmem:[#allocation2 + $0xe0] sm:$0xff]
    %v231 = vld [vmem:[#allocation2 + $0xe8] sm:$0xff]
    %v232 = vld [vmem:[#allocation2 + $0xf0] sm:$0xff]
    %v233 = vld [vmem:[#allocation2 + $0xf8] sm:$0xff]
    %v234 = vld [vmem:[#allocation2 + $0x100] sm:$0xff]
    %v235 = vld [vmem:[#allocation2 + $0x108] sm:$0xff]
    %v236 = vld [vmem:[#allocation2 + $0x110] sm:$0xff]
    %v237 = vld [vmem:[#allocation2 + $0x118] sm:$0xff]
    %v238 = vld [vmem:[#allocation2 + $0x120] sm:$0xff]
    %v239 = vld [vmem:[#allocation2 + $0x128] sm:$0xff]
    %v240 = vld [vmem:[#allocation2 + $0x130] sm:$0xff]
    %v241 = vld [vmem:[#allocation2 + $0x138] sm:$0xff]
    %v242 = vld [vmem:[#allocation2 + $0x140] sm:$0xff]
    %v243 = vld [vmem:[#allocation2 + $0x148] sm:$0xff]
    %v244 = vld [vmem:[#allocation2 + $0x150] sm:$0xff]
    %v245 = vld [vmem:[#allocation2 + $0x158] sm:$0xff]
    %v246 = vld [vmem:[#allocation2 + $0x160] sm:$0xff]
    %v247 = vld [vmem:[#allocation2 + $0x168] sm:$0xff]
    %v248 = vld [vmem:[#allocation2 + $0x170] sm:$0xff]
    %v249 = vld [vmem:[#allocation2 + $0x178] sm:$0xff]
    %v250 = vld [vmem:[#allocation2 + $0x180] sm:$0xff]
    %v251 = vld [vmem:[#allocation2 + $0x188] sm:$0xff]
    %v252 = vld [vmem:[#allocation2 + $0x190] sm:$0xff]
    %v253 = vld [vmem:[#allocation2 + $0x198] sm:$0xff]
    %v254 = vld [vmem:[#allocation2 + $0x1a0] sm:$0xff]
    %v255 = vld [vmem:[#allocation2 + $0x1a8] sm:$0xff]
    %v256 = vld [vmem:[#allocation2 + $0x1b0] sm:$0xff]
    %v257 = vld [vmem:[#allocation2 + $0x1b8] sm:$0xff]
    %v258 = vld [vmem:[#allocation2 + $0x1c0] sm:$0xff]
    %v259 = vld [vmem:[#allocation2 + $0x1c8] sm:$0xff]
    %v260 = vld [vmem:[#allocation2 + $0x1d0] sm:$0xff]
    %v261 = vld [vmem:[#allocation2 + $0x1d8] sm:$0xff]
    %v262 = vld [vmem:[#allocation2 + $0x1e0] sm:$0xff]
    %v263 = vld [vmem:[#allocation2 + $0x1e8] sm:$0xff]
    %v264 = vld [vmem:[#allocation2 + $0x1f0] sm:$0xff]
    %v265 = vld [vmem:[#allocation2 + $0x1f8] sm:$0xff]
    %v266 = vld [vmem:[#allocation2 + $0x200] sm:$0xff]
    %v267 = vld [vmem:[#allocation2 + $0x208] sm:$0xff]
    %v268 = vld [vmem:[#allocation2 + $0x210] sm:$0xff]
    %v269 = vld [vmem:[#allocation2 + $0x218] sm:$0xff]
    %v270 = vld [vmem:[#allocation2 + $0x220] sm:$0xff]
    %v271 = vld [vmem:[#allocation2 + $0x228] sm:$0xff]
    %v272 = vld [vmem:[#allocation2 + $0x230] sm:$0xff]
    %v273 = vld [vmem:[#allocation2 + $0x238] sm:$0xff]
    %v274 = vld [vmem:[#allocation2 + $0x240] sm:$0xff]
    %v275 = vld [vmem:[#allocation2 + $0x248] sm:$0xff]
    %v276 = vld [vmem:[#allocation2 + $0x250] sm:$0xff]
    %v277 = vld [vmem:[#allocation2 + $0x258] sm:$0xff]
    %v278 = vld [vmem:[#allocation2 + $0x260] sm:$0xff]
    %v279 = vld [vmem:[#allocation2 + $0x268] sm:$0xff]
    %v280 = vld [vmem:[#allocation2 + $0x270] sm:$0xff]
    %v281 = vld [vmem:[#allocation2 + $0x278] sm:$0xff]
    %v282 = vld [vmem:[#allocation2 + $0x280] sm:$0xff]
    %v283 = vld [vmem:[#allocation2 + $0x288] sm:$0xff]
    %v284 = vld [vmem:[#allocation2 + $0x290] sm:$0xff]
    %v285 = vld [vmem:[#allocation2 + $0x298] sm:$0xff]
    %v286 = vld [vmem:[#allocation2 + $0x2a0] sm:$0xff]
    %v287 = vld [vmem:[#allocation2 + $0x2a8] sm:$0xff]
    %v288 = vld [vmem:[#allocation2 + $0x2b0] sm:$0xff]
    %v289 = vld [vmem:[#allocation2 + $0x2b8] sm:$0xff]
    %v290 = vld [vmem:[#allocation2 + $0x2c0] sm:$0xff]
    %v291 = vld [vmem:[#allocation2 + $0x2c8] sm:$0xff]
    %v292 = vld [vmem:[#allocation2 + $0x2d0] sm:$0xff]
    %v293 = vld [vmem:[#allocation2 + $0x2d8] sm:$0xff]
    %v294 = vld [vmem:[#allocation2 + $0x2e0] sm:$0xff]
    %v295 = vld [vmem:[#allocation2 + $0x2e8] sm:$0xff]
    %v296 = vld [vmem:[#allocation2 + $0x2f0] sm:$0xff]
    %v297 = vld [vmem:[#allocation2 + $0x2f8] sm:$0xff]
    %v298 = vld [vmem:[#allocation2 + $0x300] sm:$0xff]
    %v299 = vld [vmem:[#allocation2 + $0x308] sm:$0xff]
    %v300 = vld [vmem:[#allocation2 + $0x310] sm:$0xff]
    %v301 = vld [vmem:[#allocation2 + $0x318] sm:$0xff]
    %v302 = vld [vmem:[#allocation2 + $0x320] sm:$0xff]
    %v303 = vld [vmem:[#allocation2 + $0x328] sm:$0xff]
    %v304 = vld [vmem:[#allocation2 + $0x330] sm:$0xff]
    %v305 = vld [vmem:[#allocation2 + $0x338] sm:$0xff]
    %v306 = vld [vmem:[#allocation2 + $0x340] sm:$0xff]
    %v307 = vld [vmem:[#allocation2 + $0x348] sm:$0xff]
    %v308 = vld [vmem:[#allocation2 + $0x350] sm:$0xff]
    %v309 = vld [vmem:[#allocation2 + $0x358] sm:$0xff]
    %v310 = vld [vmem:[#allocation2 + $0x360] sm:$0xff]
    %v311 = vld [vmem:[#allocation2 + $0x368] sm:$0xff]
    %v312 = vld [vmem:[#allocation2 + $0x370] sm:$0xff]
    %v313 = vld [vmem:[#allocation2 + $0x378] sm:$0xff]
    %v314 = vld [vmem:[#allocation2 + $0x380] sm:$0xff]
    %v315 = vld [vmem:[#allocation2 + $0x388] sm:$0xff]
    %v316 = vld [vmem:[#allocation2 + $0x390] sm:$0xff]
    %v317 = vld [vmem:[#allocation2 + $0x398] sm:$0xff]
    %v318 = vld [vmem:[#allocation2 + $0x3a0] sm:$0xff]
    %v319 = vld [vmem:[#allocation2 + $0x3a8] sm:$0xff]
    %v320 = vld [vmem:[#allocation2 + $0x3b0] sm:$0xff]
    %v321 = vld [vmem:[#allocation2 + $0x3b8] sm:$0xff]
    %v322 = vld [vmem:[#allocation2 + $0x3c0] sm:$0xff]
    %v323 = vld [vmem:[#allocation2 + $0x3c8] sm:$0xff]
    %v324 = vld [vmem:[#allocation2 + $0x3d0] sm:$0xff]
    %v325 = vld [vmem:[#allocation2 + $0x3d8] sm:$0xff]
    %v326 = vld [vmem:[#allocation2 + $0x3e0] sm:$0xff]
    %v327 = vld [vmem:[#allocation2 + $0x3e8] sm:$0xff]
    %v328 = vld [vmem:[#allocation2 + $0x3f0] sm:$0xff]
    %v329 = vld [vmem:[#allocation2 + $0x3f8] sm:$0xff]
    %v330 = vld [vmem:[#allocation2 + $0x400] sm:$0xff]
    %v331 = vld [vmem:[#allocation2 + $0x408] sm:$0xff]
    %v332 = vld [vmem:[#allocation2 + $0x410] sm:$0xff]
    %v333 = vld [vmem:[#allocation2 + $0x418] sm:$0xff]
    %v334 = vld [vmem:[#allocation2 + $0x420] sm:$0xff]
    %v335 = vld [vmem:[#allocation2 + $0x428] sm:$0xff]
    %v336 = vld [vmem:[#allocation2 + $0x430] sm:$0xff]
    %v337 = vld [vmem:[#allocation2 + $0x438] sm:$0xff]
    %v338 = vld [vmem:[#allocation2 + $0x440] sm:$0xff]
    %v339 = vld [vmem:[#allocation2 + $0x448] sm:$0xff]
    %v340 = vld [vmem:[#allocation2 + $0x450] sm:$0xff]
    %v341 = vld [vmem:[#allocation2 + $0x458] sm:$0xff]
    %v342 = vld [vmem:[#allocation2 + $0x460] sm:$0xff]
    %v343 = vld [vmem:[#allocation2 + $0x468] sm:$0xff]
    %v344 = vld [vmem:[#allocation2 + $0x470] sm:$0xff]
    %v345 = vld [vmem:[#allocation2 + $0x478] sm:$0xff]
    %v346 = vld [vmem:[#allocation2 + $0x480] sm:$0xff]
    %v347 = vld [vmem:[#allocation2 + $0x488] sm:$0xff]
    %v348 = vld [vmem:[#allocation2 + $0x490] sm:$0xff]
    %v349 = vld [vmem:[#allocation2 + $0x498] sm:$0xff]
    %v350 = vld [vmem:[#allocation2 + $0x4a0] sm:$0xff]
    %v351 = vld [vmem:[#allocation2 + $0x4a8] sm:$0xff]
    %v352 = vld [vmem:[#allocation2 + $0x4b0] sm:$0xff]
    %v353 = vld [vmem:[#allocation2 + $0x4b8] sm:$0xff]
    %v354 = vld [vmem:[#allocation2 + $0x4c0] sm:$0xff]
    %v355 = vld [vmem:[#allocation2 + $0x4c8] sm:$0xff]
    %v356 = vld [vmem:[#allocation2 + $0x4d0] sm:$0xff]
    %v357 = vld [vmem:[#allocation2 + $0x4d8] sm:$0xff]
    %v358 = vld [vmem:[#allocation2 + $0x4e0] sm:$0xff]
    %v359 = vld [vmem:[#allocation2 + $0x4e8] sm:$0xff]
    %v360 = vld [vmem:[#allocation2 + $0x4f0] sm:$0xff]
    %v361 = vld [vmem:[#allocation2 + $0x4f8] sm:$0xff]
    %v362 = vld [vmem:[#allocation2 + $0x500] sm:$0xff]
    %v363 = vld [vmem:[#allocation2 + $0x508] sm:$0xff]
    %v364 = vld [vmem:[#allocation2 + $0x510] sm:$0xff]
    %v365 = vld [vmem:[#allocation2 + $0x518] sm:$0xff]
    %v366 = vld [vmem:[#allocation2 + $0x520] sm:$0xff]
    %v367 = vld [vmem:[#allocation2 + $0x528] sm:$0xff]
    %v368 = vld [vmem:[#allocation2 + $0x530] sm:$0xff]
    %v369 = vld [vmem:[#allocation2 + $0x538] sm:$0xff]
    %v370 = vld [vmem:[#allocation2 + $0x540] sm:$0xff]
    %v371 = vld [vmem:[#allocation2 + $0x548] sm:$0xff]
    %v372 = vld [vmem:[#allocation2 + $0x550] sm:$0xff]
    %v373 = vld [vmem:[#allocation2 + $0x558] sm:$0xff]
    %v374 = vld [vmem:[#allocation2 + $0x560] sm:$0xff]
    %v375 = vld [vmem:[#allocation2 + $0x568] sm:$0xff]
    %v376 = vld [vmem:[#allocation2 + $0x570] sm:$0xff]
    %v377 = vld [vmem:[#allocation2 + $0x578] sm:$0xff]
    %v378 = vld [vmem:[#allocation2 + $0x580] sm:$0xff]
    %v379 = vld [vmem:[#allocation2 + $0x588] sm:$0xff]
    %v380 = vld [vmem:[#allocation2 + $0x590] sm:$0xff]
    %v381 = vld [vmem:[#allocation2 + $0x598] sm:$0xff]
    %v382 = vld [vmem:[#allocation2 + $0x5a0] sm:$0xff]
    %v383 = vld [vmem:[#allocation2 + $0x5a8] sm:$0xff]
    %v384 = vld [vmem:[#allocation2 + $0x5b0] sm:$0xff]
    %v385 = vld [vmem:[#allocation2 + $0x5b8] sm:$0xff]
    %v386 = vld [vmem:[#allocation2 + $0x5c0] sm:$0xff]
    %v387 = vld [vmem:[#allocation2 + $0x5c8] sm:$0xff]
    %v388 = vld [vmem:[#allocation2 + $0x5d0] sm:$0xff]
    %v389 = vld [vmem:[#allocation2 + $0x5d8] sm:$0xff]
    %v390 = vld [vmem:[#allocation2 + $0x5e0] sm:$0xff]
    %v391 = vld [vmem:[#allocation2 + $0x5e8] sm:$0xff]
    %v392 = vld [vmem:[#allocation2 + $0x5f0] sm:$0xff]
    %v393 = vld [vmem:[#allocation2 + $0x5f8] sm:$0xff]
    %v394 = vld [vmem:[#allocation2 + $0x600] sm:$0xff]
    %v395 = vld [vmem:[#allocation2 + $0x608] sm:$0xff]
    %v396 = vld [vmem:[#allocation2 + $0x610] sm:$0xff]
    %v397 = vld [vmem:[#allocation2 + $0x618] sm:$0xff]
    %v398 = vld [vmem:[#allocation2 + $0x620] sm:$0xff]
    %v399 = vld [vmem:[#allocation2 + $0x628] sm:$0xff]
    %v400 = vld [vmem:[#allocation2 + $0x630] sm:$0xff]
    %v401 = vld [vmem:[#allocation2 + $0x638] sm:$0xff]
    %v402 = vld [vmem:[#allocation2 + $0x640] sm:$0xff]
    %v403 = vld [vmem:[#allocation2 + $0x648] sm:$0xff]
    %v404 = vld [vmem:[#allocation2 + $0x650] sm:$0xff]
    %v405 = vld [vmem:[#allocation2 + $0x658] sm:$0xff]
    %v406 = vld [vmem:[#allocation2 + $0x660] sm:$0xff]
    %v407 = vld [vmem:[#allocation2 + $0x668] sm:$0xff]
    %v408 = vld [vmem:[#allocation2 + $0x670] sm:$0xff]
    %v409 = vld [vmem:[#allocation2 + $0x678] sm:$0xff]
    %v410 = vld [vmem:[#allocation2 + $0x680] sm:$0xff]
    %v411 = vld [vmem:[#allocation2 + $0x688] sm:$0xff]
    %v412 = vld [vmem:[#allocation2 + $0x690] sm:$0xff]
    %v413 = vld [vmem:[#allocation2 + $0x698] sm:$0xff]
    %v414 = vld [vmem:[#allocation2 + $0x6a0] sm:$0xff]
    %v415 = vld [vmem:[#allocation2 + $0x6a8] sm:$0xff]
    %v416 = vld [vmem:[#allocation2 + $0x6b0] sm:$0xff]
    %v417 = vld [vmem:[#allocation2 + $0x6b8] sm:$0xff]
    %v418 = vld [vmem:[#allocation2 + $0x6c0] sm:$0xff]
    %v419 = vld [vmem:[#allocation2 + $0x6c8] sm:$0xff]
    %v420 = vld [vmem:[#allocation2 + $0x6d0] sm:$0xff]
    %v421 = vld [vmem:[#allocation2 + $0x6d8] sm:$0xff]
    %v422 = vld [vmem:[#allocation2 + $0x6e0] sm:$0xff]
    %v423 = vld [vmem:[#allocation2 + $0x6e8] sm:$0xff]
    %v424 = vld [vmem:[#allocation2 + $0x6f0] sm:$0xff]
    %v425 = vld [vmem:[#allocation2 + $0x6f8] sm:$0xff]
    %v426 = vld [vmem:[#allocation2 + $0x700] sm:$0xff]
    %v427 = vld [vmem:[#allocation2 + $0x708] sm:$0xff]
    %v428 = vld [vmem:[#allocation2 + $0x710] sm:$0xff]
    %v429 = vld [vmem:[#allocation2 + $0x718] sm:$0xff]
    %v430 = vld [vmem:[#allocation2 + $0x720] sm:$0xff]
    %v431 = vld [vmem:[#allocation2 + $0x728] sm:$0xff]
    %v432 = vld [vmem:[#allocation2 + $0x730] sm:$0xff]
    %v433 = vld [vmem:[#allocation2 + $0x738] sm:$0xff]
    %v434 = vld [vmem:[#allocation2 + $0x740] sm:$0xff]
    %v435 = vld [vmem:[#allocation2 + $0x748] sm:$0xff]
    %v436 = vld [vmem:[#allocation2 + $0x750] sm:$0xff]
    %v437 = vld [vmem:[#allocation2 + $0x758] sm:$0xff]
    %v438 = vld [vmem:[#allocation2 + $0x760] sm:$0xff]
    %v439 = vld [vmem:[#allocation2 + $0x768] sm:$0xff]
    %v440 = vld [vmem:[#allocation2 + $0x770] sm:$0xff]
    %v441 = vld [vmem:[#allocation2 + $0x778] sm:$0xff]
    %v442 = vld [vmem:[#allocation2 + $0x780] sm:$0xff]
    %v443 = vld [vmem:[#allocation2 + $0x788] sm:$0xff]
    %v444 = vld [vmem:[#allocation2 + $0x790] sm:$0xff]
    %v445 = vld [vmem:[#allocation2 + $0x798] sm:$0xff]
    %v446 = vld [vmem:[#allocation2 + $0x7a0] sm:$0xff]
    %v447 = vld [vmem:[#allocation2 + $0x7a8] sm:$0xff]
    %v448 = vld [vmem:[#allocation2 + $0x7b0] sm:$0xff]
    %v449 = vld [vmem:[#allocation2 + $0x7b8] sm:$0xff]
    %v450 = vld [vmem:[#allocation2 + $0x7c0] sm:$0xff]
    %v451 = vld [vmem:[#allocation2 + $0x7c8] sm:$0xff]
    %v452 = vld [vmem:[#allocation2 + $0x7d0] sm:$0xff]
    %v453 = vld [vmem:[#allocation2 + $0x7d8] sm:$0xff]
    %v454 = vld [vmem:[#allocation2 + $0x7e0] sm:$0xff]
    %v455 = vld [vmem:[#allocation2 + $0x7e8] sm:$0xff]
    %v456 = vld [vmem:[#allocation2 + $0x7f0] sm:$0xff]
    %v457 = vld [vmem:[#allocation2 + $0x7f8] sm:$0xff]
    %v458 = vld [vmem:[%s2] sm:$0xf]
    %v460 = vperm.slane %v458, 0
    %v461 = vperm.slane %v458, 1
    %v462 = vperm.slane %v458, 2
    %v463 = vperm.slane %v458, 3
    %v724 = vunpack.c.l.b16 %v202
    %v725 = vunpack.c.h.b16 %v202
    %v726 = vunpack.c.l.b16 %v203
    %v727 = vunpack.c.h.b16 %v203
    %v728 = vunpack.c.l.b16 %v204
    %v729 = vunpack.c.h.b16 %v204
    %v730 = vunpack.c.l.b16 %v205
    %v731 = vunpack.c.h.b16 %v205
    %v732 = vunpack.c.l.b16 %v206
    %v733 = vunpack.c.h.b16 %v206
    %v734 = vunpack.c.l.b16 %v207
    %v735 = vunpack.c.h.b16 %v207
    %v736 = vunpack.c.l.b16 %v208
    %v737 = vunpack.c.h.b16 %v208
    %v738 = vunpack.c.l.b16 %v209
    %v739 = vunpack.c.h.b16 %v209
    %v740 = vunpack.c.l.b16 %v210
    %v741 = vunpack.c.h.b16 %v210
    %v742 = vunpack.c.l.b16 %v211
    %v743 = vunpack.c.h.b16 %v211
    %v744 = vunpack.c.l.b16 %v212
    %v745 = vunpack.c.h.b16 %v212
    %v746 = vunpack.c.l.b16 %v213
    %v747 = vunpack.c.h.b16 %v213
    %v748 = vunpack.c.l.b16 %v214
    %v749 = vunpack.c.h.b16 %v214
    %v750 = vunpack.c.l.b16 %v215
    %v751 = vunpack.c.h.b16 %v215
    %v752 = vunpack.c.l.b16 %v216
    %v753 = vunpack.c.h.b16 %v216
    %v754 = vunpack.c.l.b16 %v217
    %v755 = vunpack.c.h.b16 %v217
    %v756 = vunpack.c.l.b16 %v218
    %v757 = vunpack.c.h.b16 %v218
    %v758 = vunpack.c.l.b16 %v219
    %v759 = vunpack.c.h.b16 %v219
    %v760 = vunpack.c.l.b16 %v220
    %v761 = vunpack.c.h.b16 %v220
    %v762 = vunpack.c.l.b16 %v221
    %v763 = vunpack.c.h.b16 %v221
    %v764 = vunpack.c.l.b16 %v222
    %v765 = vunpack.c.h.b16 %v222
    %v766 = vunpack.c.l.b16 %v223
    %v767 = vunpack.c.h.b16 %v223
    %v768 = vunpack.c.l.b16 %v224
    %v769 = vunpack.c.h.b16 %v224
    %v770 = vunpack.c.l.b16 %v225
    %v771 = vunpack.c.h.b16 %v225
    %v772 = vunpack.c.l.b16 %v226
    %v773 = vunpack.c.h.b16 %v226
    %v774 = vunpack.c.l.b16 %v227
    %v775 = vunpack.c.h.b16 %v227
    %v776 = vunpack.c.l.b16 %v228
    %v777 = vunpack.c.h.b16 %v228
    %v778 = vunpack.c.l.b16 %v229
    %v779 = vunpack.c.h.b16 %v229
    %v780 = vunpack.c.l.b16 %v230
    %v781 = vunpack.c.h.b16 %v230
    %v782 = vunpack.c.l.b16 %v231
    %v783 = vunpack.c.h.b16 %v231
    %v784 = vunpack.c.l.b16 %v232
    %v785 = vunpack.c.h.b16 %v232
    %v786 = vunpack.c.l.b16 %v233
    %v787 = vunpack.c.h.b16 %v233
    %v788 = vunpack.c.l.b16 %v234
    %v789 = vunpack.c.h.b16 %v234
    %v790 = vunpack.c.l.b16 %v235
    %v791 = vunpack.c.h.b16 %v235
    %v792 = vunpack.c.l.b16 %v236
    %v793 = vunpack.c.h.b16 %v236
    %v794 = vunpack.c.l.b16 %v237
    %v795 = vunpack.c.h.b16 %v237
    %v796 = vunpack.c.l.b16 %v238
    %v797 = vunpack.c.h.b16 %v238
    %v798 = vunpack.c.l.b16 %v239
    %v799 = vunpack.c.h.b16 %v239
    %v800 = vunpack.c.l.b16 %v240
    %v801 = vunpack.c.h.b16 %v240
    %v802 = vunpack.c.l.b16 %v241
    %v803 = vunpack.c.h.b16 %v241
    %v804 = vunpack.c.l.b16 %v242
    %v805 = vunpack.c.h.b16 %v242
    %v806 = vunpack.c.l.b16 %v243
    %v807 = vunpack.c.h.b16 %v243
    %v808 = vunpack.c.l.b16 %v244
    %v809 = vunpack.c.h.b16 %v244
    %v810 = vunpack.c.l.b16 %v245
    %v811 = vunpack.c.h.b16 %v245
    %v812 = vunpack.c.l.b16 %v246
    %v813 = vunpack.c.h.b16 %v246
    %v814 = vunpack.c.l.b16 %v247
    %v815 = vunpack.c.h.b16 %v247
    %v816 = vunpack.c.l.b16 %v248
    %v817 = vunpack.c.h.b16 %v248
    %v818 = vunpack.c.l.b16 %v249
    %v819 = vunpack.c.h.b16 %v249
    %v820 = vunpack.c.l.b16 %v250
    %v821 = vunpack.c.h.b16 %v250
    %v822 = vunpack.c.l.b16 %v251
    %v823 = vunpack.c.h.b16 %v251
    %v824 = vunpack.c.l.b16 %v252
    %v825 = vunpack.c.h.b16 %v252
    %v826 = vunpack.c.l.b16 %v253
    %v827 = vunpack.c.h.b16 %v253
    %v828 = vunpack.c.l.b16 %v254
    %v829 = vunpack.c.h.b16 %v254
    %v830 = vunpack.c.l.b16 %v255
    %v831 = vunpack.c.h.b16 %v255
    %v832 = vunpack.c.l.b16 %v256
    %v833 = vunpack.c.h.b16 %v256
    %v834 = vunpack.c.l.b16 %v257
    %v835 = vunpack.c.h.b16 %v257
    %v836 = vunpack.c.l.b16 %v258
    %v837 = vunpack.c.h.b16 %v258
    %v838 = vunpack.c.l.b16 %v259
    %v839 = vunpack.c.h.b16 %v259
    %v840 = vunpack.c.l.b16 %v260
    %v841 = vunpack.c.h.b16 %v260
    %v842 = vunpack.c.l.b16 %v261
    %v843 = vunpack.c.h.b16 %v261
    %v844 = vunpack.c.l.b16 %v262
    %v845 = vunpack.c.h.b16 %v262
    %v846 = vunpack.c.l.b16 %v263
    %v847 = vunpack.c.h.b16 %v263
    %v848 = vunpack.c.l.b16 %v264
    %v849 = vunpack.c.h.b16 %v264
    %v850 = vunpack.c.l.b16 %v265
    %v851 = vunpack.c.h.b16 %v265
    %v852 = vunpack.c.l.b16 %v266
    %v853 = vunpack.c.h.b16 %v266
    %v854 = vunpack.c.l.b16 %v267
    %v855 = vunpack.c.h.b16 %v267
    %v856 = vunpack.c.l.b16 %v268
    %v857 = vunpack.c.h.b16 %v268
    %v858 = vunpack.c.l.b16 %v269
    %v859 = vunpack.c.h.b16 %v269
    %v860 = vunpack.c.l.b16 %v270
    %v861 = vunpack.c.h.b16 %v270
    %v862 = vunpack.c.l.b16 %v271
    %v863 = vunpack.c.h.b16 %v271
    %v864 = vunpack.c.l.b16 %v272
    %v865 = vunpack.c.h.b16 %v272
    %v866 = vunpack.c.l.b16 %v273
    %v867 = vunpack.c.h.b16 %v273
    %v868 = vunpack.c.l.b16 %v274
    %v869 = vunpack.c.h.b16 %v274
    %v870 = vunpack.c.l.b16 %v275
    %v871 = vunpack.c.h.b16 %v275
    %v872 = vunpack.c.l.b16 %v276
    %v873 = vunpack.c.h.b16 %v276
    %v874 = vunpack.c.l.b16 %v277
    %v875 = vunpack.c.h.b16 %v277
    %v876 = vunpack.c.l.b16 %v278
    %v877 = vunpack.c.h.b16 %v278
    %v878 = vunpack.c.l.b16 %v279
    %v879 = vunpack.c.h.b16 %v279
    %v880 = vunpack.c.l.b16 %v280
    %v881 = vunpack.c.h.b16 %v280
    %v882 = vunpack.c.l.b16 %v281
    %v883 = vunpack.c.h.b16 %v281
    %v884 = vunpack.c.l.b16 %v282
    %v885 = vunpack.c.h.b16 %v282
    %v886 = vunpack.c.l.b16 %v283
    %v887 = vunpack.c.h.b16 %v283
    %v888 = vunpack.c.l.b16 %v284
    %v889 = vunpack.c.h.b16 %v284
    %v890 = vunpack.c.l.b16 %v285
    %v891 = vunpack.c.h.b16 %v285
    %v892 = vunpack.c.l.b16 %v286
    %v893 = vunpack.c.h.b16 %v286
    %v894 = vunpack.c.l.b16 %v287
    %v895 = vunpack.c.h.b16 %v287
    %v896 = vunpack.c.l.b16 %v288
    %v897 = vunpack.c.h.b16 %v288
    %v898 = vunpack.c.l.b16 %v289
    %v899 = vunpack.c.h.b16 %v289
    %v900 = vunpack.c.l.b16 %v290
    %v901 = vunpack.c.h.b16 %v290
    %v902 = vunpack.c.l.b16 %v291
    %v903 = vunpack.c.h.b16 %v291
    %v904 = vunpack.c.l.b16 %v292
    %v905 = vunpack.c.h.b16 %v292
    %v906 = vunpack.c.l.b16 %v293
    %v907 = vunpack.c.h.b16 %v293
    %v908 = vunpack.c.l.b16 %v294
    %v909 = vunpack.c.h.b16 %v294
    %v910 = vunpack.c.l.b16 %v295
    %v911 = vunpack.c.h.b16 %v295
    %v912 = vunpack.c.l.b16 %v296
    %v913 = vunpack.c.h.b16 %v296
    %v914 = vunpack.c.l.b16 %v297
    %v915 = vunpack.c.h.b16 %v297
    %v916 = vunpack.c.l.b16 %v298
    %v917 = vunpack.c.h.b16 %v298
    %v918 = vunpack.c.l.b16 %v299
    %v919 = vunpack.c.h.b16 %v299
    %v920 = vunpack.c.l.b16 %v300
    %v921 = vunpack.c.h.b16 %v300
    %v922 = vunpack.c.l.b16 %v301
    %v923 = vunpack.c.h.b16 %v301
    %v924 = vunpack.c.l.b16 %v302
    %v925 = vunpack.c.h.b16 %v302
    %v926 = vunpack.c.l.b16 %v303
    %v927 = vunpack.c.h.b16 %v303
    %v928 = vunpack.c.l.b16 %v304
    %v929 = vunpack.c.h.b16 %v304
    %v930 = vunpack.c.l.b16 %v305
    %v931 = vunpack.c.h.b16 %v305
    %v932 = vunpack.c.l.b16 %v306
    %v933 = vunpack.c.h.b16 %v306
    %v934 = vunpack.c.l.b16 %v307
    %v935 = vunpack.c.h.b16 %v307
    %v936 = vunpack.c.l.b16 %v308
    %v937 = vunpack.c.h.b16 %v308
    %v938 = vunpack.c.l.b16 %v309
    %v939 = vunpack.c.h.b16 %v309
    %v940 = vunpack.c.l.b16 %v310
    %v941 = vunpack.c.h.b16 %v310
    %v942 = vunpack.c.l.b16 %v311
    %v943 = vunpack.c.h.b16 %v311
    %v944 = vunpack.c.l.b16 %v312
    %v945 = vunpack.c.h.b16 %v312
    %v946 = vunpack.c.l.b16 %v313
    %v947 = vunpack.c.h.b16 %v313
    %v948 = vunpack.c.l.b16 %v314
    %v949 = vunpack.c.h.b16 %v314
    %v950 = vunpack.c.l.b16 %v315
    %v951 = vunpack.c.h.b16 %v315
    %v952 = vunpack.c.l.b16 %v316
    %v953 = vunpack.c.h.b16 %v316
    %v954 = vunpack.c.l.b16 %v317
    %v955 = vunpack.c.h.b16 %v317
    %v956 = vunpack.c.l.b16 %v318
    %v957 = vunpack.c.h.b16 %v318
    %v958 = vunpack.c.l.b16 %v319
    %v959 = vunpack.c.h.b16 %v319
    %v960 = vunpack.c.l.b16 %v320
    %v961 = vunpack.c.h.b16 %v320
    %v962 = vunpack.c.l.b16 %v321
    %v963 = vunpack.c.h.b16 %v321
    %v964 = vunpack.c.l.b16 %v322
    %v965 = vunpack.c.h.b16 %v322
    %v966 = vunpack.c.l.b16 %v323
    %v967 = vunpack.c.h.b16 %v323
    %v968 = vunpack.c.l.b16 %v324
    %v969 = vunpack.c.h.b16 %v324
    %v970 = vunpack.c.l.b16 %v325
    %v971 = vunpack.c.h.b16 %v325
    %v972 = vunpack.c.l.b16 %v326
    %v973 = vunpack.c.h.b16 %v326
    %v974 = vunpack.c.l.b16 %v327
    %v975 = vunpack.c.h.b16 %v327
    %v976 = vunpack.c.l.b16 %v328
    %v977 = vunpack.c.h.b16 %v328
    %v978 = vunpack.c.l.b16 %v329
    %v979 = vunpack.c.h.b16 %v329
    %v980 = vunpack.c.l.b16 %v330
    %v981 = vunpack.c.h.b16 %v330
    %v982 = vunpack.c.l.b16 %v331
    %v983 = vunpack.c.h.b16 %v331
    %v984 = vunpack.c.l.b16 %v332
    %v985 = vunpack.c.h.b16 %v332
    %v986 = vunpack.c.l.b16 %v333
    %v987 = vunpack.c.h.b16 %v333
    %v988 = vunpack.c.l.b16 %v334
    %v989 = vunpack.c.h.b16 %v334
    %v990 = vunpack.c.l.b16 %v335
    %v991 = vunpack.c.h.b16 %v335
    %v992 = vunpack.c.l.b16 %v336
    %v993 = vunpack.c.h.b16 %v336
    %v994 = vunpack.c.l.b16 %v337
    %v995 = vunpack.c.h.b16 %v337
    %v996 = vunpack.c.l.b16 %v338
    %v997 = vunpack.c.h.b16 %v338
    %v998 = vunpack.c.l.b16 %v339
    %v999 = vunpack.c.h.b16 %v339
    %v1000 = vunpack.c.l.b16 %v340
    %v1001 = vunpack.c.h.b16 %v340
    %v1002 = vunpack.c.l.b16 %v341
    %v1003 = vunpack.c.h.b16 %v341
    %v1004 = vunpack.c.l.b16 %v342
    %v1005 = vunpack.c.h.b16 %v342
    %v1006 = vunpack.c.l.b16 %v343
    %v1007 = vunpack.c.h.b16 %v343
    %v1008 = vunpack.c.l.b16 %v344
    %v1009 = vunpack.c.h.b16 %v344
    %v1010 = vunpack.c.l.b16 %v345
    %v1011 = vunpack.c.h.b16 %v345
    %v1012 = vunpack.c.l.b16 %v346
    %v1013 = vunpack.c.h.b16 %v346
    %v1014 = vunpack.c.l.b16 %v347
    %v1015 = vunpack.c.h.b16 %v347
    %v1016 = vunpack.c.l.b16 %v348
    %v1017 = vunpack.c.h.b16 %v348
    %v1018 = vunpack.c.l.b16 %v349
    %v1019 = vunpack.c.h.b16 %v349
    %v1020 = vunpack.c.l.b16 %v350
    %v1021 = vunpack.c.h.b16 %v350
    %v1022 = vunpack.c.l.b16 %v351
    %v1023 = vunpack.c.h.b16 %v351
    %v1024 = vunpack.c.l.b16 %v352
    %v1025 = vunpack.c.h.b16 %v352
    %v1026 = vunpack.c.l.b16 %v353
    %v1027 = vunpack.c.h.b16 %v353
    %v1028 = vunpack.c.l.b16 %v354
    %v1029 = vunpack.c.h.b16 %v354
    %v1030 = vunpack.c.l.b16 %v355
    %v1031 = vunpack.c.h.b16 %v355
    %v1032 = vunpack.c.l.b16 %v356
    %v1033 = vunpack.c.h.b16 %v356
    %v1034 = vunpack.c.l.b16 %v357
    %v1035 = vunpack.c.h.b16 %v357
    %v1036 = vunpack.c.l.b16 %v358
    %v1037 = vunpack.c.h.b16 %v358
    %v1038 = vunpack.c.l.b16 %v359
    %v1039 = vunpack.c.h.b16 %v359
    %v1040 = vunpack.c.l.b16 %v360
    %v1041 = vunpack.c.h.b16 %v360
    %v1042 = vunpack.c.l.b16 %v361
    %v1043 = vunpack.c.h.b16 %v361
    %v1044 = vunpack.c.l.b16 %v362
    %v1045 = vunpack.c.h.b16 %v362
    %v1046 = vunpack.c.l.b16 %v363
    %v1047 = vunpack.c.h.b16 %v363
    %v1048 = vunpack.c.l.b16 %v364
    %v1049 = vunpack.c.h.b16 %v364
    %v1050 = vunpack.c.l.b16 %v365
    %v1051 = vunpack.c.h.b16 %v365
    %v1052 = vunpack.c.l.b16 %v366
    %v1053 = vunpack.c.h.b16 %v366
    %v1054 = vunpack.c.l.b16 %v367
    %v1055 = vunpack.c.h.b16 %v367
    %v1056 = vunpack.c.l.b16 %v368
    %v1057 = vunpack.c.h.b16 %v368
    %v1058 = vunpack.c.l.b16 %v369
    %v1059 = vunpack.c.h.b16 %v369
    %v1060 = vunpack.c.l.b16 %v370
    %v1061 = vunpack.c.h.b16 %v370
    %v1062 = vunpack.c.l.b16 %v371
    %v1063 = vunpack.c.h.b16 %v371
    %v1064 = vunpack.c.l.b16 %v372
    %v1065 = vunpack.c.h.b16 %v372
    %v1066 = vunpack.c.l.b16 %v373
    %v1067 = vunpack.c.h.b16 %v373
    %v1068 = vunpack.c.l.b16 %v374
    %v1069 = vunpack.c.h.b16 %v374
    %v1070 = vunpack.c.l.b16 %v375
    %v1071 = vunpack.c.h.b16 %v375
    %v1072 = vunpack.c.l.b16 %v376
    %v1073 = vunpack.c.h.b16 %v376
    %v1074 = vunpack.c.l.b16 %v377
    %v1075 = vunpack.c.h.b16 %v377
    %v1076 = vunpack.c.l.b16 %v378
    %v1077 = vunpack.c.h.b16 %v378
    %v1078 = vunpack.c.l.b16 %v379
    %v1079 = vunpack.c.h.b16 %v379
    %v1080 = vunpack.c.l.b16 %v380
    %v1081 = vunpack.c.h.b16 %v380
    %v1082 = vunpack.c.l.b16 %v381
    %v1083 = vunpack.c.h.b16 %v381
    %v1084 = vunpack.c.l.b16 %v382
    %v1085 = vunpack.c.h.b16 %v382
    %v1086 = vunpack.c.l.b16 %v383
    %v1087 = vunpack.c.h.b16 %v383
    %v1088 = vunpack.c.l.b16 %v384
    %v1089 = vunpack.c.h.b16 %v384
    %v1090 = vunpack.c.l.b16 %v385
    %v1091 = vunpack.c.h.b16 %v385
    %v1092 = vunpack.c.l.b16 %v386
    %v1093 = vunpack.c.h.b16 %v386
    %v1094 = vunpack.c.l.b16 %v387
    %v1095 = vunpack.c.h.b16 %v387
    %v1096 = vunpack.c.l.b16 %v388
    %v1097 = vunpack.c.h.b16 %v388
    %v1098 = vunpack.c.l.b16 %v389
    %v1099 = vunpack.c.h.b16 %v389
    %v1100 = vunpack.c.l.b16 %v390
    %v1101 = vunpack.c.h.b16 %v390
    %v1102 = vunpack.c.l.b16 %v391
    %v1103 = vunpack.c.h.b16 %v391
    %v1104 = vunpack.c.l.b16 %v392
    %v1105 = vunpack.c.h.b16 %v392
    %v1106 = vunpack.c.l.b16 %v393
    %v1107 = vunpack.c.h.b16 %v393
    %v1108 = vunpack.c.l.b16 %v394
    %v1109 = vunpack.c.h.b16 %v394
    %v1110 = vunpack.c.l.b16 %v395
    %v1111 = vunpack.c.h.b16 %v395
    %v1112 = vunpack.c.l.b16 %v396
    %v1113 = vunpack.c.h.b16 %v396
    %v1114 = vunpack.c.l.b16 %v397
    %v1115 = vunpack.c.h.b16 %v397
    %v1116 = vunpack.c.l.b16 %v398
    %v1117 = vunpack.c.h.b16 %v398
    %v1118 = vunpack.c.l.b16 %v399
    %v1119 = vunpack.c.h.b16 %v399
    %v1120 = vunpack.c.l.b16 %v400
    %v1121 = vunpack.c.h.b16 %v400
    %v1122 = vunpack.c.l.b16 %v401
    %v1123 = vunpack.c.h.b16 %v401
    %v1124 = vunpack.c.l.b16 %v402
    %v1125 = vunpack.c.h.b16 %v402
    %v1126 = vunpack.c.l.b16 %v403
    %v1127 = vunpack.c.h.b16 %v403
    %v1128 = vunpack.c.l.b16 %v404
    %v1129 = vunpack.c.h.b16 %v404
    %v1130 = vunpack.c.l.b16 %v405
    %v1131 = vunpack.c.h.b16 %v405
    %v1132 = vunpack.c.l.b16 %v406
    %v1133 = vunpack.c.h.b16 %v406
    %v1134 = vunpack.c.l.b16 %v407
    %v1135 = vunpack.c.h.b16 %v407
    %v1136 = vunpack.c.l.b16 %v408
    %v1137 = vunpack.c.h.b16 %v408
    %v1138 = vunpack.c.l.b16 %v409
    %v1139 = vunpack.c.h.b16 %v409
    %v1140 = vunpack.c.l.b16 %v410
    %v1141 = vunpack.c.h.b16 %v410
    %v1142 = vunpack.c.l.b16 %v411
    %v1143 = vunpack.c.h.b16 %v411
    %v1144 = vunpack.c.l.b16 %v412
    %v1145 = vunpack.c.h.b16 %v412
    %v1146 = vunpack.c.l.b16 %v413
    %v1147 = vunpack.c.h.b16 %v413
    %v1148 = vunpack.c.l.b16 %v414
    %v1149 = vunpack.c.h.b16 %v414
    %v1150 = vunpack.c.l.b16 %v415
    %v1151 = vunpack.c.h.b16 %v415
    %v1152 = vunpack.c.l.b16 %v416
    %v1153 = vunpack.c.h.b16 %v416
    %v1154 = vunpack.c.l.b16 %v417
    %v1155 = vunpack.c.h.b16 %v417
    %v1156 = vunpack.c.l.b16 %v418
    %v1157 = vunpack.c.h.b16 %v418
    %v1158 = vunpack.c.l.b16 %v419
    %v1159 = vunpack.c.h.b16 %v419
    %v1160 = vunpack.c.l.b16 %v420
    %v1161 = vunpack.c.h.b16 %v420
    %v1162 = vunpack.c.l.b16 %v421
    %v1163 = vunpack.c.h.b16 %v421
    %v1164 = vunpack.c.l.b16 %v422
    %v1165 = vunpack.c.h.b16 %v422
    %v1166 = vunpack.c.l.b16 %v423
    %v1167 = vunpack.c.h.b16 %v423
    %v1168 = vunpack.c.l.b16 %v424
    %v1169 = vunpack.c.h.b16 %v424
    %v1170 = vunpack.c.l.b16 %v425
    %v1171 = vunpack.c.h.b16 %v425
    %v1172 = vunpack.c.l.b16 %v426
    %v1173 = vunpack.c.h.b16 %v426
    %v1174 = vunpack.c.l.b16 %v427
    %v1175 = vunpack.c.h.b16 %v427
    %v1176 = vunpack.c.l.b16 %v428
    %v1177 = vunpack.c.h.b16 %v428
    %v1178 = vunpack.c.l.b16 %v429
    %v1179 = vunpack.c.h.b16 %v429
    %v1180 = vunpack.c.l.b16 %v430
    %v1181 = vunpack.c.h.b16 %v430
    %v1182 = vunpack.c.l.b16 %v431
    %v1183 = vunpack.c.h.b16 %v431
    %v1184 = vunpack.c.l.b16 %v432
    %v1185 = vunpack.c.h.b16 %v432
    %v1186 = vunpack.c.l.b16 %v433
    %v1187 = vunpack.c.h.b16 %v433
    %v1188 = vunpack.c.l.b16 %v434
    %v1189 = vunpack.c.h.b16 %v434
    %v1190 = vunpack.c.l.b16 %v435
    %v1191 = vunpack.c.h.b16 %v435
    %v1192 = vunpack.c.l.b16 %v436
    %v1193 = vunpack.c.h.b16 %v436
    %v1194 = vunpack.c.l.b16 %v437
    %v1195 = vunpack.c.h.b16 %v437
    %v1196 = vunpack.c.l.b16 %v438
    %v1197 = vunpack.c.h.b16 %v438
    %v1198 = vunpack.c.l.b16 %v439
    %v1199 = vunpack.c.h.b16 %v439
    %v1200 = vunpack.c.l.b16 %v440
    %v1201 = vunpack.c.h.b16 %v440
    %v1202 = vunpack.c.l.b16 %v441
    %v1203 = vunpack.c.h.b16 %v441
    %v1204 = vunpack.c.l.b16 %v442
    %v1205 = vunpack.c.h.b16 %v442
    %v1206 = vunpack.c.l.b16 %v443
    %v1207 = vunpack.c.h.b16 %v443
    %v1208 = vunpack.c.l.b16 %v444
    %v1209 = vunpack.c.h.b16 %v444
    %v1210 = vunpack.c.l.b16 %v445
    %v1211 = vunpack.c.h.b16 %v445
    %v1212 = vunpack.c.l.b16 %v446
    %v1213 = vunpack.c.h.b16 %v446
    %v1214 = vunpack.c.l.b16 %v447
    %v1215 = vunpack.c.h.b16 %v447
    %v1216 = vunpack.c.l.b16 %v448
    %v1217 = vunpack.c.h.b16 %v448
    %v1218 = vunpack.c.l.b16 %v449
    %v1219 = vunpack.c.h.b16 %v449
    %v1220 = vunpack.c.l.b16 %v450
    %v1221 = vunpack.c.h.b16 %v450
    %v1222 = vunpack.c.l.b16 %v451
    %v1223 = vunpack.c.h.b16 %v451
    %v1224 = vunpack.c.l.b16 %v452
    %v1225 = vunpack.c.h.b16 %v452
    %v1226 = vunpack.c.l.b16 %v453
    %v1227 = vunpack.c.h.b16 %v453
    %v1228 = vunpack.c.l.b16 %v454
    %v1229 = vunpack.c.h.b16 %v454
    %v1230 = vunpack.c.l.b16 %v455
    %v1231 = vunpack.c.h.b16 %v455
    %v1232 = vunpack.c.l.b16 %v456
    %v1233 = vunpack.c.h.b16 %v456
    %v1234 = vunpack.c.l.b16 %v457
    %v1235 = vunpack.c.h.b16 %v457
    %v1236 = vpack.c.b16 %v728, %v724
    %v1237 = vpack.c.b16 %v729, %v725
    %v1238 = vpack.c.b16 %v730, %v726
    %v1239 = vpack.c.b16 %v731, %v727
    %v1240 = vpack.c.b16 %v736, %v732
    %v1241 = vpack.c.b16 %v737, %v733
    %v1242 = vpack.c.b16 %v738, %v734
    %v1243 = vpack.c.b16 %v739, %v735
    %v1244 = vpack.c.b16 %v744, %v740
    %v1245 = vpack.c.b16 %v745, %v741
    %v1246 = vpack.c.b16 %v746, %v742
    %v1247 = vpack.c.b16 %v747, %v743
    %v1248 = vpack.c.b16 %v752, %v748
    %v1249 = vpack.c.b16 %v753, %v749
    %v1250 = vpack.c.b16 %v754, %v750
    %v1251 = vpack.c.b16 %v755, %v751
    %v1252 = vpack.c.b16 %v760, %v756
    %v1253 = vpack.c.b16 %v761, %v757
    %v1254 = vpack.c.b16 %v762, %v758
    %v1255 = vpack.c.b16 %v763, %v759
    %v1256 = vpack.c.b16 %v768, %v764
    %v1257 = vpack.c.b16 %v769, %v765
    %v1258 = vpack.c.b16 %v770, %v766
    %v1259 = vpack.c.b16 %v771, %v767
    %v1260 = vpack.c.b16 %v776, %v772
    %v1261 = vpack.c.b16 %v777, %v773
    %v1262 = vpack.c.b16 %v778, %v774
    %v1263 = vpack.c.b16 %v779, %v775
    %v1264 = vpack.c.b16 %v784, %v780
    %v1265 = vpack.c.b16 %v785, %v781
    %v1266 = vpack.c.b16 %v786, %v782
    %v1267 = vpack.c.b16 %v787, %v783
    %v1268 = vpack.c.b16 %v792, %v788
    %v1269 = vpack.c.b16 %v793, %v789
    %v1270 = vpack.c.b16 %v794, %v790
    %v1271 = vpack.c.b16 %v795, %v791
    %v1272 = vpack.c.b16 %v800, %v796
    %v1273 = vpack.c.b16 %v801, %v797
    %v1274 = vpack.c.b16 %v802, %v798
    %v1275 = vpack.c.b16 %v803, %v799
    %v1276 = vpack.c.b16 %v808, %v804
    %v1277 = vpack.c.b16 %v809, %v805
    %v1278 = vpack.c.b16 %v810, %v806
    %v1279 = vpack.c.b16 %v811, %v807
    %v1280 = vpack.c.b16 %v816, %v812
    %v1281 = vpack.c.b16 %v817, %v813
    %v1282 = vpack.c.b16 %v818, %v814
    %v1283 = vpack.c.b16 %v819, %v815
    %v1284 = vpack.c.b16 %v824, %v820
    %v1285 = vpack.c.b16 %v825, %v821
    %v1286 = vpack.c.b16 %v826, %v822
    %v1287 = vpack.c.b16 %v827, %v823
    %v1288 = vpack.c.b16 %v832, %v828
    %v1289 = vpack.c.b16 %v833, %v829
    %v1290 = vpack.c.b16 %v834, %v830
    %v1291 = vpack.c.b16 %v835, %v831
    %v1292 = vpack.c.b16 %v840, %v836
    %v1293 = vpack.c.b16 %v841, %v837
    %v1294 = vpack.c.b16 %v842, %v838
    %v1295 = vpack.c.b16 %v843, %v839
    %v1296 = vpack.c.b16 %v848, %v844
    %v1297 = vpack.c.b16 %v849, %v845
    %v1298 = vpack.c.b16 %v850, %v846
    %v1299 = vpack.c.b16 %v851, %v847
    %v1300 = vpack.c.b16 %v856, %v852
    %v1301 = vpack.c.b16 %v857, %v853
    %v1302 = vpack.c.b16 %v858, %v854
    %v1303 = vpack.c.b16 %v859, %v855
    %v1304 = vpack.c.b16 %v864, %v860
    %v1305 = vpack.c.b16 %v865, %v861
    %v1306 = vpack.c.b16 %v866, %v862
    %v1307 = vpack.c.b16 %v867, %v863
    %v1308 = vpack.c.b16 %v872, %v868
    %v1309 = vpack.c.b16 %v873, %v869
    %v1310 = vpack.c.b16 %v874, %v870
    %v1311 = vpack.c.b16 %v875, %v871
    %v1312 = vpack.c.b16 %v880, %v876
    %v1313 = vpack.c.b16 %v881, %v877
    %v1314 = vpack.c.b16 %v882, %v878
    %v1315 = vpack.c.b16 %v883, %v879
    %v1316 = vpack.c.b16 %v888, %v884
    %v1317 = vpack.c.b16 %v889, %v885
    %v1318 = vpack.c.b16 %v890, %v886
    %v1319 = vpack.c.b16 %v891, %v887
    %v1320 = vpack.c.b16 %v896, %v892
    %v1321 = vpack.c.b16 %v897, %v893
    %v1322 = vpack.c.b16 %v898, %v894
    %v1323 = vpack.c.b16 %v899, %v895
    %v1324 = vpack.c.b16 %v904, %v900
    %v1325 = vpack.c.b16 %v905, %v901
    %v1326 = vpack.c.b16 %v906, %v902
    %v1327 = vpack.c.b16 %v907, %v903
    %v1328 = vpack.c.b16 %v912, %v908
    %v1329 = vpack.c.b16 %v913, %v909
    %v1330 = vpack.c.b16 %v914, %v910
    %v1331 = vpack.c.b16 %v915, %v911
    %v1332 = vpack.c.b16 %v920, %v916
    %v1333 = vpack.c.b16 %v921, %v917
    %v1334 = vpack.c.b16 %v922, %v918
    %v1335 = vpack.c.b16 %v923, %v919
    %v1336 = vpack.c.b16 %v928, %v924
    %v1337 = vpack.c.b16 %v929, %v925
    %v1338 = vpack.c.b16 %v930, %v926
    %v1339 = vpack.c.b16 %v931, %v927
    %v1340 = vpack.c.b16 %v936, %v932
    %v1341 = vpack.c.b16 %v937, %v933
    %v1342 = vpack.c.b16 %v938, %v934
    %v1343 = vpack.c.b16 %v939, %v935
    %v1344 = vpack.c.b16 %v944, %v940
    %v1345 = vpack.c.b16 %v945, %v941
    %v1346 = vpack.c.b16 %v946, %v942
    %v1347 = vpack.c.b16 %v947, %v943
    %v1348 = vpack.c.b16 %v952, %v948
    %v1349 = vpack.c.b16 %v953, %v949
    %v1350 = vpack.c.b16 %v954, %v950
    %v1351 = vpack.c.b16 %v955, %v951
    %v1352 = vpack.c.b16 %v960, %v956
    %v1353 = vpack.c.b16 %v961, %v957
    %v1354 = vpack.c.b16 %v962, %v958
    %v1355 = vpack.c.b16 %v963, %v959
    %v1356 = vpack.c.b16 %v968, %v964
    %v1357 = vpack.c.b16 %v969, %v965
    %v1358 = vpack.c.b16 %v970, %v966
    %v1359 = vpack.c.b16 %v971, %v967
    %v1360 = vpack.c.b16 %v976, %v972
    %v1361 = vpack.c.b16 %v977, %v973
    %v1362 = vpack.c.b16 %v978, %v974
    %v1363 = vpack.c.b16 %v979, %v975
    %v1364 = vpack.c.b16 %v984, %v980
    %v1365 = vpack.c.b16 %v985, %v981
    %v1366 = vpack.c.b16 %v986, %v982
    %v1367 = vpack.c.b16 %v987, %v983
    %v1368 = vpack.c.b16 %v992, %v988
    %v1369 = vpack.c.b16 %v993, %v989
    %v1370 = vpack.c.b16 %v994, %v990
    %v1371 = vpack.c.b16 %v995, %v991
    %v1372 = vpack.c.b16 %v1000, %v996
    %v1373 = vpack.c.b16 %v1001, %v997
    %v1374 = vpack.c.b16 %v1002, %v998
    %v1375 = vpack.c.b16 %v1003, %v999
    %v1376 = vpack.c.b16 %v1008, %v1004
    %v1377 = vpack.c.b16 %v1009, %v1005
    %v1378 = vpack.c.b16 %v1010, %v1006
    %v1379 = vpack.c.b16 %v1011, %v1007
    %v1380 = vpack.c.b16 %v1016, %v1012
    %v1381 = vpack.c.b16 %v1017, %v1013
    %v1382 = vpack.c.b16 %v1018, %v1014
    %v1383 = vpack.c.b16 %v1019, %v1015
    %v1384 = vpack.c.b16 %v1024, %v1020
    %v1385 = vpack.c.b16 %v1025, %v1021
    %v1386 = vpack.c.b16 %v1026, %v1022
    %v1387 = vpack.c.b16 %v1027, %v1023
    %v1388 = vpack.c.b16 %v1032, %v1028
    %v1389 = vpack.c.b16 %v1033, %v1029
    %v1390 = vpack.c.b16 %v1034, %v1030
    %v1391 = vpack.c.b16 %v1035, %v1031
    %v1392 = vpack.c.b16 %v1040, %v1036
    %v1393 = vpack.c.b16 %v1041, %v1037
    %v1394 = vpack.c.b16 %v1042, %v1038
    %v1395 = vpack.c.b16 %v1043, %v1039
    %v1396 = vpack.c.b16 %v1048, %v1044
    %v1397 = vpack.c.b16 %v1049, %v1045
    %v1398 = vpack.c.b16 %v1050, %v1046
    %v1399 = vpack.c.b16 %v1051, %v1047
    %v1400 = vpack.c.b16 %v1056, %v1052
    %v1401 = vpack.c.b16 %v1057, %v1053
    %v1402 = vpack.c.b16 %v1058, %v1054
    %v1403 = vpack.c.b16 %v1059, %v1055
    %v1404 = vpack.c.b16 %v1064, %v1060
    %v1405 = vpack.c.b16 %v1065, %v1061
    %v1406 = vpack.c.b16 %v1066, %v1062
    %v1407 = vpack.c.b16 %v1067, %v1063
    %v1408 = vpack.c.b16 %v1072, %v1068
    %v1409 = vpack.c.b16 %v1073, %v1069
    %v1410 = vpack.c.b16 %v1074, %v1070
    %v1411 = vpack.c.b16 %v1075, %v1071
    %v1412 = vpack.c.b16 %v1080, %v1076
    %v1413 = vpack.c.b16 %v1081, %v1077
    %v1414 = vpack.c.b16 %v1082, %v1078
    %v1415 = vpack.c.b16 %v1083, %v1079
    %v1416 = vpack.c.b16 %v1088, %v1084
    %v1417 = vpack.c.b16 %v1089, %v1085
    %v1418 = vpack.c.b16 %v1090, %v1086
    %v1419 = vpack.c.b16 %v1091, %v1087
    %v1420 = vpack.c.b16 %v1096, %v1092
    %v1421 = vpack.c.b16 %v1097, %v1093
    %v1422 = vpack.c.b16 %v1098, %v1094
    %v1423 = vpack.c.b16 %v1099, %v1095
    %v1424 = vpack.c.b16 %v1104, %v1100
    %v1425 = vpack.c.b16 %v1105, %v1101
    %v1426 = vpack.c.b16 %v1106, %v1102
    %v1427 = vpack.c.b16 %v1107, %v1103
    %v1428 = vpack.c.b16 %v1112, %v1108
    %v1429 = vpack.c.b16 %v1113, %v1109
    %v1430 = vpack.c.b16 %v1114, %v1110
    %v1431 = vpack.c.b16 %v1115, %v1111
    %v1432 = vpack.c.b16 %v1120, %v1116
    %v1433 = vpack.c.b16 %v1121, %v1117
    %v1434 = vpack.c.b16 %v1122, %v1118
    %v1435 = vpack.c.b16 %v1123, %v1119
    %v1436 = vpack.c.b16 %v1128, %v1124
    %v1437 = vpack.c.b16 %v1129, %v1125
    %v1438 = vpack.c.b16 %v1130, %v1126
    %v1439 = vpack.c.b16 %v1131, %v1127
    %v1440 = vpack.c.b16 %v1136, %v1132
    %v1441 = vpack.c.b16 %v1137, %v1133
    %v1442 = vpack.c.b16 %v1138, %v1134
    %v1443 = vpack.c.b16 %v1139, %v1135
    %v1444 = vpack.c.b16 %v1144, %v1140
    %v1445 = vpack.c.b16 %v1145, %v1141
    %v1446 = vpack.c.b16 %v1146, %v1142
    %v1447 = vpack.c.b16 %v1147, %v1143
    %v1448 = vpack.c.b16 %v1152, %v1148
    %v1449 = vpack.c.b16 %v1153, %v1149
    %v1450 = vpack.c.b16 %v1154, %v1150
    %v1451 = vpack.c.b16 %v1155, %v1151
    %v1452 = vpack.c.b16 %v1160, %v1156
    %v1453 = vpack.c.b16 %v1161, %v1157
    %v1454 = vpack.c.b16 %v1162, %v1158
    %v1455 = vpack.c.b16 %v1163, %v1159
    %v1456 = vpack.c.b16 %v1168, %v1164
    %v1457 = vpack.c.b16 %v1169, %v1165
    %v1458 = vpack.c.b16 %v1170, %v1166
    %v1459 = vpack.c.b16 %v1171, %v1167
    %v1460 = vpack.c.b16 %v1176, %v1172
    %v1461 = vpack.c.b16 %v1177, %v1173
    %v1462 = vpack.c.b16 %v1178, %v1174
    %v1463 = vpack.c.b16 %v1179, %v1175
    %v1464 = vpack.c.b16 %v1184, %v1180
    %v1465 = vpack.c.b16 %v1185, %v1181
    %v1466 = vpack.c.b16 %v1186, %v1182
    %v1467 = vpack.c.b16 %v1187, %v1183
    %v1468 = vpack.c.b16 %v1192, %v1188
    %v1469 = vpack.c.b16 %v1193, %v1189
    %v1470 = vpack.c.b16 %v1194, %v1190
    %v1471 = vpack.c.b16 %v1195, %v1191
    %v1472 = vpack.c.b16 %v1200, %v1196
    %v1473 = vpack.c.b16 %v1201, %v1197
    %v1474 = vpack.c.b16 %v1202, %v1198
    %v1475 = vpack.c.b16 %v1203, %v1199
    %v1476 = vpack.c.b16 %v1208, %v1204
    %v1477 = vpack.c.b16 %v1209, %v1205
    %v1478 = vpack.c.b16 %v1210, %v1206
    %v1479 = vpack.c.b16 %v1211, %v1207
    %v1480 = vpack.c.b16 %v1216, %v1212
    %v1481 = vpack.c.b16 %v1217, %v1213
    %v1482 = vpack.c.b16 %v1218, %v1214
    %v1483 = vpack.c.b16 %v1219, %v1215
    %v1484 = vpack.c.b16 %v1224, %v1220
    %v1485 = vpack.c.b16 %v1225, %v1221
    %v1486 = vpack.c.b16 %v1226, %v1222
    %v1487 = vpack.c.b16 %v1227, %v1223
    %v1488 = vpack.c.b16 %v1232, %v1228
    %v1489 = vpack.c.b16 %v1233, %v1229
    %v1490 = vpack.c.b16 %v1234, %v1230
    %v1491 = vpack.c.b16 %v1235, %v1231
    %1748 = vmatpush.bf16.msra.mxu0 %v1264
    %1749 = vmatpush.bf16.msra.mxu0 %v1260
    %1750 = vmatpush.bf16.msra.mxu0 %v1256
    %1751 = vmatpush.bf16.msra.mxu0 %v1252
    %1752 = vmatpush.bf16.msra.mxu0 %v1248
    %1753 = vmatpush.bf16.msra.mxu0 %v1244
    %1754 = vmatpush.bf16.msra.mxu0 %v1240
    %1755 = vmatpush.bf16.msra.mxu0 %v1236
    %1756 = vmatmul.bf16.gmra.mxu0 %v194
    %v1757 = vpop.f32.mrf.mxu0
    %v1758 = vadd.f32 %v460, %v1757
    %v1759 = vpop.f32.mrf.mxu0
    %1760 = vdwg.mxu0
    %1761 = vmatpush.bf16.msra.mxu0 %v1296
    %1762 = vmatpush.bf16.msra.mxu0 %v1292
    %1763 = vmatpush.bf16.msra.mxu0 %v1288
    %1764 = vmatpush.bf16.msra.mxu0 %v1284
    %1765 = vmatpush.bf16.msra.mxu0 %v1280
    %1766 = vmatpush.bf16.msra.mxu0 %v1276
    %1767 = vmatpush.bf16.msra.mxu0 %v1272
    %1768 = vmatpush.bf16.msra.mxu0 %v1268
    %1769 = vmatmul.bf16.gmra.mxu0 %v195
    %v1770 = vpop.f32.mrf.mxu0
    %v1771 = vadd.f32 %v1758, %v1770
    %v1772 = vpop.f32.mrf.mxu0
    %1773 = vdwg.mxu0
    %1774 = vmatpush.bf16.msra.mxu0 %v1328
    %1775 = vmatpush.bf16.msra.mxu0 %v1324
    %1776 = vmatpush.bf16.msra.mxu0 %v1320
    %1777 = vmatpush.bf16.msra.mxu0 %v1316
    %1778 = vmatpush.bf16.msra.mxu0 %v1312
    %1779 = vmatpush.bf16.msra.mxu0 %v1308
    %1780 = vmatpush.bf16.msra.mxu0 %v1304
    %1781 = vmatpush.bf16.msra.mxu0 %v1300
    %1782 = vmatmul.bf16.gmra.mxu0 %v196
    %v1783 = vpop.f32.mrf.mxu0
    %v1784 = vadd.f32 %v1771, %v1783
    %v1785 = vpop.f32.mrf.mxu0
    %1786 = vdwg.mxu0
    %1787 = vmatpush.bf16.msra.mxu0 %v1360
    %1788 = vmatpush.bf16.msra.mxu0 %v1356
    %1789 = vmatpush.bf16.msra.mxu0 %v1352
    %1790 = vmatpush.bf16.msra.mxu0 %v1348
    %1791 = vmatpush.bf16.msra.mxu0 %v1344
    %1792 = vmatpush.bf16.msra.mxu0 %v1340
    %1793 = vmatpush.bf16.msra.mxu0 %v1336
    %1794 = vmatpush.bf16.msra.mxu0 %v1332
    %1795 = vmatmul.bf16.gmra.mxu0 %v197
    %v1796 = vpop.f32.mrf.mxu0
    %v1797 = vadd.f32 %v1784, %v1796
    %v1798 = vpop.f32.mrf.mxu0
    %1799 = vdwg.mxu0
    %1800 = vmatpush.bf16.msra.mxu0 %v1392
    %1801 = vmatpush.bf16.msra.mxu0 %v1388
    %1802 = vmatpush.bf16.msra.mxu0 %v1384
    %1803 = vmatpush.bf16.msra.mxu0 %v1380
    %1804 = vmatpush.bf16.msra.mxu0 %v1376
    %1805 = vmatpush.bf16.msra.mxu0 %v1372
    %1806 = vmatpush.bf16.msra.mxu0 %v1368
    %1807 = vmatpush.bf16.msra.mxu0 %v1364
    %1808 = vmatmul.bf16.gmra.mxu0 %v198
    %v1809 = vpop.f32.mrf.mxu0
    %v1810 = vadd.f32 %v1797, %v1809
    %v1811 = vpop.f32.mrf.mxu0
    %1812 = vdwg.mxu0
    %1813 = vmatpush.bf16.msra.mxu0 %v1424
    %1814 = vmatpush.bf16.msra.mxu0 %v1420
    %1815 = vmatpush.bf16.msra.mxu0 %v1416
    %1816 = vmatpush.bf16.msra.mxu0 %v1412
    %1817 = vmatpush.bf16.msra.mxu0 %v1408
    %1818 = vmatpush.bf16.msra.mxu0 %v1404
    %1819 = vmatpush.bf16.msra.mxu0 %v1400
    %1820 = vmatpush.bf16.msra.mxu0 %v1396
    %1821 = vmatmul.bf16.gmra.mxu0 %v199
    %v1822 = vpop.f32.mrf.mxu0
    %v1823 = vadd.f32 %v1810, %v1822
    %v1824 = vpop.f32.mrf.mxu0
    %1825 = vdwg.mxu0
    %1826 = vmatpush.bf16.msra.mxu0 %v1456
    %1827 = vmatpush.bf16.msra.mxu0 %v1452
    %1828 = vmatpush.bf16.msra.mxu0 %v1448
    %1829 = vmatpush.bf16.msra.mxu0 %v1444
    %1830 = vmatpush.bf16.msra.mxu0 %v1440
    %1831 = vmatpush.bf16.msra.mxu0 %v1436
    %1832 = vmatpush.bf16.msra.mxu0 %v1432
    %1833 = vmatpush.bf16.msra.mxu0 %v1428
    %1834 = vmatmul.bf16.gmra.mxu0 %v200
    %v1835 = vpop.f32.mrf.mxu0
    %v1836 = vadd.f32 %v1823, %v1835
    %v1837 = vpop.f32.mrf.mxu0
    %1838 = vdwg.mxu0
    %1839 = vmatpush.bf16.msra.mxu0 %v1488
    %1840 = vmatpush.bf16.msra.mxu0 %v1484
    %1841 = vmatpush.bf16.msra.mxu0 %v1480
    %1842 = vmatpush.bf16.msra.mxu0 %v1476
    %1843 = vmatpush.bf16.msra.mxu0 %v1472
    %1844 = vmatpush.bf16.msra.mxu0 %v1468
    %1845 = vmatpush.bf16.msra.mxu0 %v1464
    %1846 = vmatpush.bf16.msra.mxu0 %v1460
    %1847 = vmatmul.bf16.gmra.mxu0 %v201
    %v1848 = vpop.f32.mrf.mxu0
    %v1849 = vadd.f32 %v1836, %v1848
    %v1850 = vpop.f32.mrf.mxu0
    %1851 = vdwg.mxu0
    %1852 = vmatpush.bf16.msra.mxu0 %v1265
    %1853 = vmatpush.bf16.msra.mxu0 %v1261
    %1854 = vmatpush.bf16.msra.mxu0 %v1257
    %1855 = vmatpush.bf16.msra.mxu0 %v1253
    %1856 = vmatpush.bf16.msra.mxu0 %v1249
    %1857 = vmatpush.bf16.msra.mxu0 %v1245
    %1858 = vmatpush.bf16.msra.mxu0 %v1241
    %1859 = vmatpush.bf16.msra.mxu0 %v1237
    %1860 = vmatmul.bf16.gmra.mxu0 %v194
    %v1861 = vpop.f32.mrf.mxu0
    %v1862 = vadd.f32 %v461, %v1861
    %v1863 = vpop.f32.mrf.mxu0
    %1864 = vdwg.mxu0
    %1865 = vmatpush.bf16.msra.mxu0 %v1297
    %1866 = vmatpush.bf16.msra.mxu0 %v1293
    %1867 = vmatpush.bf16.msra.mxu0 %v1289
    %1868 = vmatpush.bf16.msra.mxu0 %v1285
    %1869 = vmatpush.bf16.msra.mxu0 %v1281
    %1870 = vmatpush.bf16.msra.mxu0 %v1277
    %1871 = vmatpush.bf16.msra.mxu0 %v1273
    %1872 = vmatpush.bf16.msra.mxu0 %v1269
    %1873 = vmatmul.bf16.gmra.mxu0 %v195
    %v1874 = vpop.f32.mrf.mxu0
    %v1875 = vadd.f32 %v1862, %v1874
    %v1876 = vpop.f32.mrf.mxu0
    %1877 = vdwg.mxu0
    %1878 = vmatpush.bf16.msra.mxu0 %v1329
    %1879 = vmatpush.bf16.msra.mxu0 %v1325
    %1880 = vmatpush.bf16.msra.mxu0 %v1321
    %1881 = vmatpush.bf16.msra.mxu0 %v1317
    %1882 = vmatpush.bf16.msra.mxu0 %v1313
    %1883 = vmatpush.bf16.msra.mxu0 %v1309
    %1884 = vmatpush.bf16.msra.mxu0 %v1305
    %1885 = vmatpush.bf16.msra.mxu0 %v1301
    %1886 = vmatmul.bf16.gmra.mxu0 %v196
    %v1887 = vpop.f32.mrf.mxu0
    %v1888 = vadd.f32 %v1875, %v1887
    %v1889 = vpop.f32.mrf.mxu0
    %1890 = vdwg.mxu0
    %1891 = vmatpush.bf16.msra.mxu0 %v1361
    %1892 = vmatpush.bf16.msra.mxu0 %v1357
    %1893 = vmatpush.bf16.msra.mxu0 %v1353
    %1894 = vmatpush.bf16.msra.mxu0 %v1349
    %1895 = vmatpush.bf16.msra.mxu0 %v1345
    %1896 = vmatpush.bf16.msra.mxu0 %v1341
    %1897 = vmatpush.bf16.msra.mxu0 %v1337
    %1898 = vmatpush.bf16.msra.mxu0 %v1333
    %1899 = vmatmul.bf16.gmra.mxu0 %v197
    %v1900 = vpop.f32.mrf.mxu0
    %v1901 = vadd.f32 %v1888, %v1900
    %v1902 = vpop.f32.mrf.mxu0
    %1903 = vdwg.mxu0
    %1904 = vmatpush.bf16.msra.mxu0 %v1393
    %1905 = vmatpush.bf16.msra.mxu0 %v1389
    %1906 = vmatpush.bf16.msra.mxu0 %v1385
    %1907 = vmatpush.bf16.msra.mxu0 %v1381
    %1908 = vmatpush.bf16.msra.mxu0 %v1377
    %1909 = vmatpush.bf16.msra.mxu0 %v1373
    %1910 = vmatpush.bf16.msra.mxu0 %v1369
    %1911 = vmatpush.bf16.msra.mxu0 %v1365
    %1912 = vmatmul.bf16.gmra.mxu0 %v198
    %v1913 = vpop.f32.mrf.mxu0
    %v1914 = vadd.f32 %v1901, %v1913
    %v1915 = vpop.f32.mrf.mxu0
    %1916 = vdwg.mxu0
    %1917 = vmatpush.bf16.msra.mxu0 %v1425
    %1918 = vmatpush.bf16.msra.mxu0 %v1421
    %1919 = vmatpush.bf16.msra.mxu0 %v1417
    %1920 = vmatpush.bf16.msra.mxu0 %v1413
    %1921 = vmatpush.bf16.msra.mxu0 %v1409
    %1922 = vmatpush.bf16.msra.mxu0 %v1405
    %1923 = vmatpush.bf16.msra.mxu0 %v1401
    %1924 = vmatpush.bf16.msra.mxu0 %v1397
    %1925 = vmatmul.bf16.gmra.mxu0 %v199
    %v1926 = vpop.f32.mrf.mxu0
    %v1927 = vadd.f32 %v1914, %v1926
    %v1928 = vpop.f32.mrf.mxu0
    %1929 = vdwg.mxu0
    %1930 = vmatpush.bf16.msra.mxu0 %v1457
    %1931 = vmatpush.bf16.msra.mxu0 %v1453
    %1932 = vmatpush.bf16.msra.mxu0 %v1449
    %1933 = vmatpush.bf16.msra.mxu0 %v1445
    %1934 = vmatpush.bf16.msra.mxu0 %v1441
    %1935 = vmatpush.bf16.msra.mxu0 %v1437
    %1936 = vmatpush.bf16.msra.mxu0 %v1433
    %1937 = vmatpush.bf16.msra.mxu0 %v1429
    %1938 = vmatmul.bf16.gmra.mxu0 %v200
    %v1939 = vpop.f32.mrf.mxu0
    %v1940 = vadd.f32 %v1927, %v1939
    %v1941 = vpop.f32.mrf.mxu0
    %1942 = vdwg.mxu0
    %1943 = vmatpush.bf16.msra.mxu0 %v1489
    %1944 = vmatpush.bf16.msra.mxu0 %v1485
    %1945 = vmatpush.bf16.msra.mxu0 %v1481
    %1946 = vmatpush.bf16.msra.mxu0 %v1477
    %1947 = vmatpush.bf16.msra.mxu0 %v1473
    %1948 = vmatpush.bf16.msra.mxu0 %v1469
    %1949 = vmatpush.bf16.msra.mxu0 %v1465
    %1950 = vmatpush.bf16.msra.mxu0 %v1461
    %1951 = vmatmul.bf16.gmra.mxu0 %v201
    %v1952 = vpop.f32.mrf.mxu0
    %v1953 = vadd.f32 %v1940, %v1952
    %v1954 = vpop.f32.mrf.mxu0
    %1955 = vdwg.mxu0
    %1956 = vmatpush.bf16.msra.mxu0 %v1266
    %1957 = vmatpush.bf16.msra.mxu0 %v1262
    %1958 = vmatpush.bf16.msra.mxu0 %v1258
    %1959 = vmatpush.bf16.msra.mxu0 %v1254
    %1960 = vmatpush.bf16.msra.mxu0 %v1250
    %1961 = vmatpush.bf16.msra.mxu0 %v1246
    %1962 = vmatpush.bf16.msra.mxu0 %v1242
    %1963 = vmatpush.bf16.msra.mxu0 %v1238
    %1964 = vmatmul.bf16.gmra.mxu0 %v194
    %v1965 = vpop.f32.mrf.mxu0
    %v1966 = vadd.f32 %v462, %v1965
    %v1967 = vpop.f32.mrf.mxu0
    %1968 = vdwg.mxu0
    %1969 = vmatpush.bf16.msra.mxu0 %v1298
    %1970 = vmatpush.bf16.msra.mxu0 %v1294
    %1971 = vmatpush.bf16.msra.mxu0 %v1290
    %1972 = vmatpush.bf16.msra.mxu0 %v1286
    %1973 = vmatpush.bf16.msra.mxu0 %v1282
    %1974 = vmatpush.bf16.msra.mxu0 %v1278
    %1975 = vmatpush.bf16.msra.mxu0 %v1274
    %1976 = vmatpush.bf16.msra.mxu0 %v1270
    %1977 = vmatmul.bf16.gmra.mxu0 %v195
    %v1978 = vpop.f32.mrf.mxu0
    %v1979 = vadd.f32 %v1966, %v1978
    %v1980 = vpop.f32.mrf.mxu0
    %1981 = vdwg.mxu0
    %1982 = vmatpush.bf16.msra.mxu0 %v1330
    %1983 = vmatpush.bf16.msra.mxu0 %v1326
    %1984 = vmatpush.bf16.msra.mxu0 %v1322
    %1985 = vmatpush.bf16.msra.mxu0 %v1318
    %1986 = vmatpush.bf16.msra.mxu0 %v1314
    %1987 = vmatpush.bf16.msra.mxu0 %v1310
    %1988 = vmatpush.bf16.msra.mxu0 %v1306
    %1989 = vmatpush.bf16.msra.mxu0 %v1302
    %1990 = vmatmul.bf16.gmra.mxu0 %v196
    %v1991 = vpop.f32.mrf.mxu0
    %v1992 = vadd.f32 %v1979, %v1991
    %v1993 = vpop.f32.mrf.mxu0
    %1994 = vdwg.mxu0
    %1995 = vmatpush.bf16.msra.mxu0 %v1362
    %1996 = vmatpush.bf16.msra.mxu0 %v1358
    %1997 = vmatpush.bf16.msra.mxu0 %v1354
    %1998 = vmatpush.bf16.msra.mxu0 %v1350
    %1999 = vmatpush.bf16.msra.mxu0 %v1346
    %2000 = vmatpush.bf16.msra.mxu0 %v1342
    %2001 = vmatpush.bf16.msra.mxu0 %v1338
    %2002 = vmatpush.bf16.msra.mxu0 %v1334
    %2003 = vmatmul.bf16.gmra.mxu0 %v197
    %v2004 = vpop.f32.mrf.mxu0
    %v2005 = vadd.f32 %v1992, %v2004
    %v2006 = vpop.f32.mrf.mxu0
    %2007 = vdwg.mxu0
    %2008 = vmatpush.bf16.msra.mxu0 %v1394
    %2009 = vmatpush.bf16.msra.mxu0 %v1390
    %2010 = vmatpush.bf16.msra.mxu0 %v1386
    %2011 = vmatpush.bf16.msra.mxu0 %v1382
    %2012 = vmatpush.bf16.msra.mxu0 %v1378
    %2013 = vmatpush.bf16.msra.mxu0 %v1374
    %2014 = vmatpush.bf16.msra.mxu0 %v1370
    %2015 = vmatpush.bf16.msra.mxu0 %v1366
    %2016 = vmatmul.bf16.gmra.mxu0 %v198
    %v2017 = vpop.f32.mrf.mxu0
    %v2018 = vadd.f32 %v2005, %v2017
    %v2019 = vpop.f32.mrf.mxu0
    %2020 = vdwg.mxu0
    %2021 = vmatpush.bf16.msra.mxu0 %v1426
    %2022 = vmatpush.bf16.msra.mxu0 %v1422
    %2023 = vmatpush.bf16.msra.mxu0 %v1418
    %2024 = vmatpush.bf16.msra.mxu0 %v1414
    %2025 = vmatpush.bf16.msra.mxu0 %v1410
    %2026 = vmatpush.bf16.msra.mxu0 %v1406
    %2027 = vmatpush.bf16.msra.mxu0 %v1402
    %2028 = vmatpush.bf16.msra.mxu0 %v1398
    %2029 = vmatmul.bf16.gmra.mxu0 %v199
    %v2030 = vpop.f32.mrf.mxu0
    %v2031 = vadd.f32 %v2018, %v2030
    %v2032 = vpop.f32.mrf.mxu0
    %2033 = vdwg.mxu0
    %2034 = vmatpush.bf16.msra.mxu0 %v1458
    %2035 = vmatpush.bf16.msra.mxu0 %v1454
    %2036 = vmatpush.bf16.msra.mxu0 %v1450
    %2037 = vmatpush.bf16.msra.mxu0 %v1446
    %2038 = vmatpush.bf16.msra.mxu0 %v1442
    %2039 = vmatpush.bf16.msra.mxu0 %v1438
    %2040 = vmatpush.bf16.msra.mxu0 %v1434
    %2041 = vmatpush.bf16.msra.mxu0 %v1430
    %2042 = vmatmul.bf16.gmra.mxu0 %v200
    %v2043 = vpop.f32.mrf.mxu0
    %v2044 = vadd.f32 %v2031, %v2043
    %v2045 = vpop.f32.mrf.mxu0
    %2046 = vdwg.mxu0
    %2047 = vmatpush.bf16.msra.mxu0 %v1490
    %2048 = vmatpush.bf16.msra.mxu0 %v1486
    %2049 = vmatpush.bf16.msra.mxu0 %v1482
    %2050 = vmatpush.bf16.msra.mxu0 %v1478
    %2051 = vmatpush.bf16.msra.mxu0 %v1474
    %2052 = vmatpush.bf16.msra.mxu0 %v1470
    %2053 = vmatpush.bf16.msra.mxu0 %v1466
    %2054 = vmatpush.bf16.msra.mxu0 %v1462
    %2055 = vmatmul.bf16.gmra.mxu0 %v201
    %v2056 = vpop.f32.mrf.mxu0
    %v2057 = vadd.f32 %v2044, %v2056
    %v2058 = vpop.f32.mrf.mxu0
    %2059 = vdwg.mxu0
    %2060 = vmatpush.bf16.msra.mxu0 %v1267
    %2061 = vmatpush.bf16.msra.mxu0 %v1263
    %2062 = vmatpush.bf16.msra.mxu0 %v1259
    %2063 = vmatpush.bf16.msra.mxu0 %v1255
    %2064 = vmatpush.bf16.msra.mxu0 %v1251
    %2065 = vmatpush.bf16.msra.mxu0 %v1247
    %2066 = vmatpush.bf16.msra.mxu0 %v1243
    %2067 = vmatpush.bf16.msra.mxu0 %v1239
    %2068 = vmatmul.bf16.gmra.mxu0 %v194
    %v2069 = vpop.f32.mrf.mxu0
    %v2070 = vadd.f32 %v463, %v2069
    %v2071 = vpop.f32.mrf.mxu0
    %2072 = vdwg.mxu0
    %2073 = vmatpush.bf16.msra.mxu0 %v1299
    %2074 = vmatpush.bf16.msra.mxu0 %v1295
    %2075 = vmatpush.bf16.msra.mxu0 %v1291
    %2076 = vmatpush.bf16.msra.mxu0 %v1287
    %2077 = vmatpush.bf16.msra.mxu0 %v1283
    %2078 = vmatpush.bf16.msra.mxu0 %v1279
    %2079 = vmatpush.bf16.msra.mxu0 %v1275
    %2080 = vmatpush.bf16.msra.mxu0 %v1271
    %2081 = vmatmul.bf16.gmra.mxu0 %v195
    %v2082 = vpop.f32.mrf.mxu0
    %v2083 = vadd.f32 %v2070, %v2082
    %v2084 = vpop.f32.mrf.mxu0
    %2085 = vdwg.mxu0
    %2086 = vmatpush.bf16.msra.mxu0 %v1331
    %2087 = vmatpush.bf16.msra.mxu0 %v1327
    %2088 = vmatpush.bf16.msra.mxu0 %v1323
    %2089 = vmatpush.bf16.msra.mxu0 %v1319
    %2090 = vmatpush.bf16.msra.mxu0 %v1315
    %2091 = vmatpush.bf16.msra.mxu0 %v1311
    %2092 = vmatpush.bf16.msra.mxu0 %v1307
    %2093 = vmatpush.bf16.msra.mxu0 %v1303
    %2094 = vmatmul.bf16.gmra.mxu0 %v196
    %v2095 = vpop.f32.mrf.mxu0
    %v2096 = vadd.f32 %v2083, %v2095
    %v2097 = vpop.f32.mrf.mxu0
    %2098 = vdwg.mxu0
    %2099 = vmatpush.bf16.msra.mxu0 %v1363
    %2100 = vmatpush.bf16.msra.mxu0 %v1359
    %2101 = vmatpush.bf16.msra.mxu0 %v1355
    %2102 = vmatpush.bf16.msra.mxu0 %v1351
    %2103 = vmatpush.bf16.msra.mxu0 %v1347
    %2104 = vmatpush.bf16.msra.mxu0 %v1343
    %2105 = vmatpush.bf16.msra.mxu0 %v1339
    %2106 = vmatpush.bf16.msra.mxu0 %v1335
    %2107 = vmatmul.bf16.gmra.mxu0 %v197
    %v2108 = vpop.f32.mrf.mxu0
    %v2109 = vadd.f32 %v2096, %v2108
    %v2110 = vpop.f32.mrf.mxu0
    %2111 = vdwg.mxu0
    %2112 = vmatpush.bf16.msra.mxu0 %v1395
    %2113 = vmatpush.bf16.msra.mxu0 %v1391
    %2114 = vmatpush.bf16.msra.mxu0 %v1387
    %2115 = vmatpush.bf16.msra.mxu0 %v1383
    %2116 = vmatpush.bf16.msra.mxu0 %v1379
    %2117 = vmatpush.bf16.msra.mxu0 %v1375
    %2118 = vmatpush.bf16.msra.mxu0 %v1371
    %2119 = vmatpush.bf16.msra.mxu0 %v1367
    %2120 = vmatmul.bf16.gmra.mxu0 %v198
    %v2121 = vpop.f32.mrf.mxu0
    %v2122 = vadd.f32 %v2109, %v2121
    %v2123 = vpop.f32.mrf.mxu0
    %2124 = vdwg.mxu0
    %2125 = vmatpush.bf16.msra.mxu0 %v1427
    %2126 = vmatpush.bf16.msra.mxu0 %v1423
    %2127 = vmatpush.bf16.msra.mxu0 %v1419
    %2128 = vmatpush.bf16.msra.mxu0 %v1415
    %2129 = vmatpush.bf16.msra.mxu0 %v1411
    %2130 = vmatpush.bf16.msra.mxu0 %v1407
    %2131 = vmatpush.bf16.msra.mxu0 %v1403
    %2132 = vmatpush.bf16.msra.mxu0 %v1399
    %2133 = vmatmul.bf16.gmra.mxu0 %v199
    %v2134 = vpop.f32.mrf.mxu0
    %v2135 = vadd.f32 %v2122, %v2134
    %v2136 = vpop.f32.mrf.mxu0
    %2137 = vdwg.mxu0
    %2138 = vmatpush.bf16.msra.mxu0 %v1459
    %2139 = vmatpush.bf16.msra.mxu0 %v1455
    %2140 = vmatpush.bf16.msra.mxu0 %v1451
    %2141 = vmatpush.bf16.msra.mxu0 %v1447
    %2142 = vmatpush.bf16.msra.mxu0 %v1443
    %2143 = vmatpush.bf16.msra.mxu0 %v1439
    %2144 = vmatpush.bf16.msra.mxu0 %v1435
    %2145 = vmatpush.bf16.msra.mxu0 %v1431
    %2146 = vmatmul.bf16.gmra.mxu0 %v200
    %v2147 = vpop.f32.mrf.mxu0
    %v2148 = vadd.f32 %v2135, %v2147
    %v2149 = vpop.f32.mrf.mxu0
    %2150 = vdwg.mxu0
    %2151 = vmatpush.bf16.msra.mxu0 %v1491
    %2152 = vmatpush.bf16.msra.mxu0 %v1487
    %2153 = vmatpush.bf16.msra.mxu0 %v1483
    %2154 = vmatpush.bf16.msra.mxu0 %v1479
    %2155 = vmatpush.bf16.msra.mxu0 %v1475
    %2156 = vmatpush.bf16.msra.mxu0 %v1471
    %2157 = vmatpush.bf16.msra.mxu0 %v1467
    %2158 = vmatpush.bf16.msra.mxu0 %v1463
    %2159 = vmatmul.bf16.gmra.mxu0 %v201
    %v2160 = vpop.f32.mrf.mxu0
    %v2161 = vadd.f32 %v2148, %v2160
    %v2162 = vpop.f32.mrf.mxu0
    %2163 = vdwg.mxu0
    %v2164 = vmax.f32 %v1849, 0.0
    %v2165 = vmax.f32 %v1953, 0.0
    %v2166 = vmax.f32 %v2057, 0.0
    %v2167 = vmax.f32 %v2161, 0.0
    %v2168 = vpack.c.bf16 %v2164, %v2164
    %v2169 = vpack.c.bf16 %v2165, %v2165
    %v2170 = vpack.c.bf16 %v2166, %v2166
    %v2171 = vpack.c.bf16 %v2167, %v2167
    %v2172 = vld [vmem:[#allocation5] sm:$0xff]
    %v2173 = vld [vmem:[#allocation5 + $0x8] sm:$0xff]
    %v2174 = vld [vmem:[#allocation5 + $0x10] sm:$0xff]
    %v2175 = vld [vmem:[#allocation5 + $0x18] sm:$0xff]
    %v2176 = vld [vmem:[#allocation5 + $0x20] sm:$0xff]
    %v2177 = vld [vmem:[#allocation5 + $0x28] sm:$0xff]
    %v2178 = vld [vmem:[#allocation5 + $0x30] sm:$0xff]
    %v2179 = vld [vmem:[#allocation5 + $0x38] sm:$0xff]
    %v2180 = vld [vmem:[#allocation5 + $0x40] sm:$0xff]
    %v2181 = vld [vmem:[#allocation5 + $0x48] sm:$0xff]
    %v2182 = vld [vmem:[#allocation5 + $0x50] sm:$0xff]
    %v2183 = vld [vmem:[#allocation5 + $0x58] sm:$0xff]
    %v2184 = vld [vmem:[#allocation5 + $0x60] sm:$0xff]
    %v2185 = vld [vmem:[#allocation5 + $0x68] sm:$0xff]
    %v2186 = vld [vmem:[#allocation5 + $0x70] sm:$0xff]
    %v2187 = vld [vmem:[#allocation5 + $0x78] sm:$0xff]
    %v2188 = vld [vmem:[#allocation5 + $0x80] sm:$0xff]
    %v2189 = vld [vmem:[#allocation5 + $0x88] sm:$0xff]
    %v2190 = vld [vmem:[#allocation5 + $0x90] sm:$0xff]
    %v2191 = vld [vmem:[#allocation5 + $0x98] sm:$0xff]
    %v2192 = vld [vmem:[#allocation5 + $0xa0] sm:$0xff]
    %v2193 = vld [vmem:[#allocation5 + $0xa8] sm:$0xff]
    %v2194 = vld [vmem:[#allocation5 + $0xb0] sm:$0xff]
    %v2195 = vld [vmem:[#allocation5 + $0xb8] sm:$0xff]
    %v2196 = vld [vmem:[#allocation5 + $0xc0] sm:$0xff]
    %v2197 = vld [vmem:[#allocation5 + $0xc8] sm:$0xff]
    %v2198 = vld [vmem:[#allocation5 + $0xd0] sm:$0xff]
    %v2199 = vld [vmem:[#allocation5 + $0xd8] sm:$0xff]
    %v2200 = vld [vmem:[#allocation5 + $0xe0] sm:$0xff]
    %v2201 = vld [vmem:[#allocation5 + $0xe8] sm:$0xff]
    %v2202 = vld [vmem:[#allocation5 + $0xf0] sm:$0xff]
    %v2203 = vld [vmem:[#allocation5 + $0xf8] sm:$0xff]
    %v2204 = vld [vmem:[#allocation5 + $0x100] sm:$0xff]
    %v2205 = vld [vmem:[#allocation5 + $0x108] sm:$0xff]
    %v2206 = vld [vmem:[#allocation5 + $0x110] sm:$0xff]
    %v2207 = vld [vmem:[#allocation5 + $0x118] sm:$0xff]
    %v2208 = vld [vmem:[#allocation5 + $0x120] sm:$0xff]
    %v2209 = vld [vmem:[#allocation5 + $0x128] sm:$0xff]
    %v2210 = vld [vmem:[#allocation5 + $0x130] sm:$0xff]
    %v2211 = vld [vmem:[#allocation5 + $0x138] sm:$0xff]
    %v2212 = vld [vmem:[#allocation5 + $0x140] sm:$0xff]
    %v2213 = vld [vmem:[#allocation5 + $0x148] sm:$0xff]
    %v2214 = vld [vmem:[#allocation5 + $0x150] sm:$0xff]
    %v2215 = vld [vmem:[#allocation5 + $0x158] sm:$0xff]
    %v2216 = vld [vmem:[#allocation5 + $0x160] sm:$0xff]
    %v2217 = vld [vmem:[#allocation5 + $0x168] sm:$0xff]
    %v2218 = vld [vmem:[#allocation5 + $0x170] sm:$0xff]
    %v2219 = vld [vmem:[#allocation5 + $0x178] sm:$0xff]
    %v2220 = vld [vmem:[#allocation5 + $0x180] sm:$0xff]
    %v2221 = vld [vmem:[#allocation5 + $0x188] sm:$0xff]
    %v2222 = vld [vmem:[#allocation5 + $0x190] sm:$0xff]
    %v2223 = vld [vmem:[#allocation5 + $0x198] sm:$0xff]
    %v2224 = vld [vmem:[#allocation5 + $0x1a0] sm:$0xff]
    %v2225 = vld [vmem:[#allocation5 + $0x1a8] sm:$0xff]
    %v2226 = vld [vmem:[#allocation5 + $0x1b0] sm:$0xff]
    %v2227 = vld [vmem:[#allocation5 + $0x1b8] sm:$0xff]
    %v2228 = vld [vmem:[#allocation5 + $0x1c0] sm:$0xff]
    %v2229 = vld [vmem:[#allocation5 + $0x1c8] sm:$0xff]
    %v2230 = vld [vmem:[#allocation5 + $0x1d0] sm:$0xff]
    %v2231 = vld [vmem:[#allocation5 + $0x1d8] sm:$0xff]
    %v2232 = vld [vmem:[#allocation5 + $0x1e0] sm:$0xff]
    %v2233 = vld [vmem:[#allocation5 + $0x1e8] sm:$0xff]
    %v2234 = vld [vmem:[#allocation5 + $0x1f0] sm:$0xff]
    %v2235 = vld [vmem:[#allocation5 + $0x1f8] sm:$0xff]
    %v2236 = vld [vmem:[%s4] sm:$0x3]
    %v2238 = vperm.slane %v2236, 0
    %v2239 = vperm.slane %v2236, 1
    %v2306 = vunpack.c.l.b16 %v2172
    %v2307 = vunpack.c.h.b16 %v2172
    %v2308 = vunpack.c.l.b16 %v2173
    %v2309 = vunpack.c.h.b16 %v2173
    %v2310 = vunpack.c.l.b16 %v2174
    %v2311 = vunpack.c.h.b16 %v2174
    %v2312 = vunpack.c.l.b16 %v2175
    %v2313 = vunpack.c.h.b16 %v2175
    %v2314 = vunpack.c.l.b16 %v2176
    %v2315 = vunpack.c.h.b16 %v2176
    %v2316 = vunpack.c.l.b16 %v2177
    %v2317 = vunpack.c.h.b16 %v2177
    %v2318 = vunpack.c.l.b16 %v2178
    %v2319 = vunpack.c.h.b16 %v2178
    %v2320 = vunpack.c.l.b16 %v2179
    %v2321 = vunpack.c.h.b16 %v2179
    %v2322 = vunpack.c.l.b16 %v2180
    %v2323 = vunpack.c.h.b16 %v2180
    %v2324 = vunpack.c.l.b16 %v2181
    %v2325 = vunpack.c.h.b16 %v2181
    %v2326 = vunpack.c.l.b16 %v2182
    %v2327 = vunpack.c.h.b16 %v2182
    %v2328 = vunpack.c.l.b16 %v2183
    %v2329 = vunpack.c.h.b16 %v2183
    %v2330 = vunpack.c.l.b16 %v2184
    %v2331 = vunpack.c.h.b16 %v2184
    %v2332 = vunpack.c.l.b16 %v2185
    %v2333 = vunpack.c.h.b16 %v2185
    %v2334 = vunpack.c.l.b16 %v2186
    %v2335 = vunpack.c.h.b16 %v2186
    %v2336 = vunpack.c.l.b16 %v2187
    %v2337 = vunpack.c.h.b16 %v2187
    %v2338 = vunpack.c.l.b16 %v2188
    %v2339 = vunpack.c.h.b16 %v2188
    %v2340 = vunpack.c.l.b16 %v2189
    %v2341 = vunpack.c.h.b16 %v2189
    %v2342 = vunpack.c.l.b16 %v2190
    %v2343 = vunpack.c.h.b16 %v2190
    %v2344 = vunpack.c.l.b16 %v2191
    %v2345 = vunpack.c.h.b16 %v2191
    %v2346 = vunpack.c.l.b16 %v2192
    %v2347 = vunpack.c.h.b16 %v2192
    %v2348 = vunpack.c.l.b16 %v2193
    %v2349 = vunpack.c.h.b16 %v2193
    %v2350 = vunpack.c.l.b16 %v2194
    %v2351 = vunpack.c.h.b16 %v2194
    %v2352 = vunpack.c.l.b16 %v2195
    %v2353 = vunpack.c.h.b16 %v2195
    %v2354 = vunpack.c.l.b16 %v2196
    %v2355 = vunpack.c.h.b16 %v2196
    %v2356 = vunpack.c.l.b16 %v2197
    %v2357 = vunpack.c.h.b16 %v2197
    %v2358 = vunpack.c.l.b16 %v2198
    %v2359 = vunpack.c.h.b16 %v2198
    %v2360 = vunpack.c.l.b16 %v2199
    %v2361 = vunpack.c.h.b16 %v2199
    %v2362 = vunpack.c.l.b16 %v2200
    %v2363 = vunpack.c.h.b16 %v2200
    %v2364 = vunpack.c.l.b16 %v2201
    %v2365 = vunpack.c.h.b16 %v2201
    %v2366 = vunpack.c.l.b16 %v2202
    %v2367 = vunpack.c.h.b16 %v2202
    %v2368 = vunpack.c.l.b16 %v2203
    %v2369 = vunpack.c.h.b16 %v2203
    %v2370 = vunpack.c.l.b16 %v2204
    %v2371 = vunpack.c.h.b16 %v2204
    %v2372 = vunpack.c.l.b16 %v2205
    %v2373 = vunpack.c.h.b16 %v2205
    %v2374 = vunpack.c.l.b16 %v2206
    %v2375 = vunpack.c.h.b16 %v2206
    %v2376 = vunpack.c.l.b16 %v2207
    %v2377 = vunpack.c.h.b16 %v2207
    %v2378 = vunpack.c.l.b16 %v2208
    %v2379 = vunpack.c.h.b16 %v2208
    %v2380 = vunpack.c.l.b16 %v2209
    %v2381 = vunpack.c.h.b16 %v2209
    %v2382 = vunpack.c.l.b16 %v2210
    %v2383 = vunpack.c.h.b16 %v2210
    %v2384 = vunpack.c.l.b16 %v2211
    %v2385 = vunpack.c.h.b16 %v2211
    %v2386 = vunpack.c.l.b16 %v2212
    %v2387 = vunpack.c.h.b16 %v2212
    %v2388 = vunpack.c.l.b16 %v2213
    %v2389 = vunpack.c.h.b16 %v2213
    %v2390 = vunpack.c.l.b16 %v2214
    %v2391 = vunpack.c.h.b16 %v2214
    %v2392 = vunpack.c.l.b16 %v2215
    %v2393 = vunpack.c.h.b16 %v2215
    %v2394 = vunpack.c.l.b16 %v2216
    %v2395 = vunpack.c.h.b16 %v2216
    %v2396 = vunpack.c.l.b16 %v2217
    %v2397 = vunpack.c.h.b16 %v2217
    %v2398 = vunpack.c.l.b16 %v2218
    %v2399 = vunpack.c.h.b16 %v2218
    %v2400 = vunpack.c.l.b16 %v2219
    %v2401 = vunpack.c.h.b16 %v2219
    %v2402 = vunpack.c.l.b16 %v2220
    %v2403 = vunpack.c.h.b16 %v2220
    %v2404 = vunpack.c.l.b16 %v2221
    %v2405 = vunpack.c.h.b16 %v2221
    %v2406 = vunpack.c.l.b16 %v2222
    %v2407 = vunpack.c.h.b16 %v2222
    %v2408 = vunpack.c.l.b16 %v2223
    %v2409 = vunpack.c.h.b16 %v2223
    %v2410 = vunpack.c.l.b16 %v2224
    %v2411 = vunpack.c.h.b16 %v2224
    %v2412 = vunpack.c.l.b16 %v2225
    %v2413 = vunpack.c.h.b16 %v2225
    %v2414 = vunpack.c.l.b16 %v2226
    %v2415 = vunpack.c.h.b16 %v2226
    %v2416 = vunpack.c.l.b16 %v2227
    %v2417 = vunpack.c.h.b16 %v2227
    %v2418 = vunpack.c.l.b16 %v2228
    %v2419 = vunpack.c.h.b16 %v2228
    %v2420 = vunpack.c.l.b16 %v2229
    %v2421 = vunpack.c.h.b16 %v2229
    %v2422 = vunpack.c.l.b16 %v2230
    %v2423 = vunpack.c.h.b16 %v2230
    %v2424 = vunpack.c.l.b16 %v2231
    %v2425 = vunpack.c.h.b16 %v2231
    %v2426 = vunpack.c.l.b16 %v2232
    %v2427 = vunpack.c.h.b16 %v2232
    %v2428 = vunpack.c.l.b16 %v2233
    %v2429 = vunpack.c.h.b16 %v2233
    %v2430 = vunpack.c.l.b16 %v2234
    %v2431 = vunpack.c.h.b16 %v2234
    %v2432 = vunpack.c.l.b16 %v2235
    %v2433 = vunpack.c.h.b16 %v2235
    %v2434 = vpack.c.b16 %v2308, %v2306
    %v2435 = vpack.c.b16 %v2309, %v2307
    %v2436 = vpack.c.b16 %v2312, %v2310
    %v2437 = vpack.c.b16 %v2313, %v2311
    %v2438 = vpack.c.b16 %v2316, %v2314
    %v2439 = vpack.c.b16 %v2317, %v2315
    %v2440 = vpack.c.b16 %v2320, %v2318
    %v2441 = vpack.c.b16 %v2321, %v2319
    %v2442 = vpack.c.b16 %v2324, %v2322
    %v2443 = vpack.c.b16 %v2325, %v2323
    %v2444 = vpack.c.b16 %v2328, %v2326
    %v2445 = vpack.c.b16 %v2329, %v2327
    %v2446 = vpack.c.b16 %v2332, %v2330
    %v2447 = vpack.c.b16 %v2333, %v2331
    %v2448 = vpack.c.b16 %v2336, %v2334
    %v2449 = vpack.c.b16 %v2337, %v2335
    %v2450 = vpack.c.b16 %v2340, %v2338
    %v2451 = vpack.c.b16 %v2341, %v2339
    %v2452 = vpack.c.b16 %v2344, %v2342
    %v2453 = vpack.c.b16 %v2345, %v2343
    %v2454 = vpack.c.b16 %v2348, %v2346
    %v2455 = vpack.c.b16 %v2349, %v2347
    %v2456 = vpack.c.b16 %v2352, %v2350
    %v2457 = vpack.c.b16 %v2353, %v2351
    %v2458 = vpack.c.b16 %v2356, %v2354
    %v2459 = vpack.c.b16 %v2357, %v2355
    %v2460 = vpack.c.b16 %v2360, %v2358
    %v2461 = vpack.c.b16 %v2361, %v2359
    %v2462 = vpack.c.b16 %v2364, %v2362
    %v2463 = vpack.c.b16 %v2365, %v2363
    %v2464 = vpack.c.b16 %v2368, %v2366
    %v2465 = vpack.c.b16 %v2369, %v2367
    %v2466 = vpack.c.b16 %v2372, %v2370
    %v2467 = vpack.c.b16 %v2373, %v2371
    %v2468 = vpack.c.b16 %v2376, %v2374
    %v2469 = vpack.c.b16 %v2377, %v2375
    %v2470 = vpack.c.b16 %v2380, %v2378
    %v2471 = vpack.c.b16 %v2381, %v2379
    %v2472 = vpack.c.b16 %v2384, %v2382
    %v2473 = vpack.c.b16 %v2385, %v2383
    %v2474 = vpack.c.b16 %v2388, %v2386
    %v2475 = vpack.c.b16 %v2389, %v2387
    %v2476 = vpack.c.b16 %v2392, %v2390
    %v2477 = vpack.c.b16 %v2393, %v2391
    %v2478 = vpack.c.b16 %v2396, %v2394
    %v2479 = vpack.c.b16 %v2397, %v2395
    %v2480 = vpack.c.b16 %v2400, %v2398
    %v2481 = vpack.c.b16 %v2401, %v2399
    %v2482 = vpack.c.b16 %v2404, %v2402
    %v2483 = vpack.c.b16 %v2405, %v2403
    %v2484 = vpack.c.b16 %v2408, %v2406
    %v2485 = vpack.c.b16 %v2409, %v2407
    %v2486 = vpack.c.b16 %v2412, %v2410
    %v2487 = vpack.c.b16 %v2413, %v2411
    %v2488 = vpack.c.b16 %v2416, %v2414
    %v2489 = vpack.c.b16 %v2417, %v2415
    %v2490 = vpack.c.b16 %v2420, %v2418
    %v2491 = vpack.c.b16 %v2421, %v2419
    %v2492 = vpack.c.b16 %v2424, %v2422
    %v2493 = vpack.c.b16 %v2425, %v2423
    %v2494 = vpack.c.b16 %v2428, %v2426
    %v2495 = vpack.c.b16 %v2429, %v2427
    %v2496 = vpack.c.b16 %v2432, %v2430
    %v2497 = vpack.c.b16 %v2433, %v2431
    %2562 = vmatpush.bf16.msra.mxu0 %v2448
    %2563 = vmatpush.bf16.msra.mxu0 %v2446
    %2564 = vmatpush.bf16.msra.mxu0 %v2444
    %2565 = vmatpush.bf16.msra.mxu0 %v2442
    %2566 = vmatpush.bf16.msra.mxu0 %v2440
    %2567 = vmatpush.bf16.msra.mxu0 %v2438
    %2568 = vmatpush.bf16.msra.mxu0 %v2436
    %2569 = vmatpush.bf16.msra.mxu0 %v2434
    %2570 = vmatmul.bf16.gmra.mxu0 %v2168
    %v2571 = vpop.f32.mrf.mxu0
    %v2572 = vadd.f32 %v2238, %v2571
    %v2573 = vpop.f32.mrf.mxu0
    %2574 = vdwg.mxu0
    %2575 = vmatpush.bf16.msra.mxu0 %v2464
    %2576 = vmatpush.bf16.msra.mxu0 %v2462
    %2577 = vmatpush.bf16.msra.mxu0 %v2460
    %2578 = vmatpush.bf16.msra.mxu0 %v2458
    %2579 = vmatpush.bf16.msra.mxu0 %v2456
    %2580 = vmatpush.bf16.msra.mxu0 %v2454
    %2581 = vmatpush.bf16.msra.mxu0 %v2452
    %2582 = vmatpush.bf16.msra.mxu0 %v2450
    %2583 = vmatmul.bf16.gmra.mxu0 %v2169
    %v2584 = vpop.f32.mrf.mxu0
    %v2585 = vadd.f32 %v2572, %v2584
    %v2586 = vpop.f32.mrf.mxu0
    %2587 = vdwg.mxu0
    %2588 = vmatpush.bf16.msra.mxu0 %v2480
    %2589 = vmatpush.bf16.msra.mxu0 %v2478
    %2590 = vmatpush.bf16.msra.mxu0 %v2476
    %2591 = vmatpush.bf16.msra.mxu0 %v2474
    %2592 = vmatpush.bf16.msra.mxu0 %v2472
    %2593 = vmatpush.bf16.msra.mxu0 %v2470
    %2594 = vmatpush.bf16.msra.mxu0 %v2468
    %2595 = vmatpush.bf16.msra.mxu0 %v2466
    %2596 = vmatmul.bf16.gmra.mxu0 %v2170
    %v2597 = vpop.f32.mrf.mxu0
    %v2598 = vadd.f32 %v2585, %v2597
    %v2599 = vpop.f32.mrf.mxu0
    %2600 = vdwg.mxu0
    %2601 = vmatpush.bf16.msra.mxu0 %v2496
    %2602 = vmatpush.bf16.msra.mxu0 %v2494
    %2603 = vmatpush.bf16.msra.mxu0 %v2492
    %2604 = vmatpush.bf16.msra.mxu0 %v2490
    %2605 = vmatpush.bf16.msra.mxu0 %v2488
    %2606 = vmatpush.bf16.msra.mxu0 %v2486
    %2607 = vmatpush.bf16.msra.mxu0 %v2484
    %2608 = vmatpush.bf16.msra.mxu0 %v2482
    %2609 = vmatmul.bf16.gmra.mxu0 %v2171
    %v2610 = vpop.f32.mrf.mxu0
    %v2611 = vadd.f32 %v2598, %v2610
    %v2612 = vpop.f32.mrf.mxu0
    %2613 = vdwg.mxu0
    %2614 = vmatpush.bf16.msra.mxu0 %v2449
    %2615 = vmatpush.bf16.msra.mxu0 %v2447
    %2616 = vmatpush.bf16.msra.mxu0 %v2445
    %2617 = vmatpush.bf16.msra.mxu0 %v2443
    %2618 = vmatpush.bf16.msra.mxu0 %v2441
    %2619 = vmatpush.bf16.msra.mxu0 %v2439
    %2620 = vmatpush.bf16.msra.mxu0 %v2437
    %2621 = vmatpush.bf16.msra.mxu0 %v2435
    %2622 = vmatmul.bf16.gmra.mxu0 %v2168
    %v2623 = vpop.f32.mrf.mxu0
    %v2624 = vadd.f32 %v2239, %v2623
    %v2625 = vpop.f32.mrf.mxu0
    %2626 = vdwg.mxu0
    %2627 = vmatpush.bf16.msra.mxu0 %v2465
    %2628 = vmatpush.bf16.msra.mxu0 %v2463
    %2629 = vmatpush.bf16.msra.mxu0 %v2461
    %2630 = vmatpush.bf16.msra.mxu0 %v2459
    %2631 = vmatpush.bf16.msra.mxu0 %v2457
    %2632 = vmatpush.bf16.msra.mxu0 %v2455
    %2633 = vmatpush.bf16.msra.mxu0 %v2453
    %2634 = vmatpush.bf16.msra.mxu0 %v2451
    %2635 = vmatmul.bf16.gmra.mxu0 %v2169
    %v2636 = vpop.f32.mrf.mxu0
    %v2637 = vadd.f32 %v2624, %v2636
    %v2638 = vpop.f32.mrf.mxu0
    %2639 = vdwg.mxu0
    %2640 = vmatpush.bf16.msra.mxu0 %v2481
    %2641 = vmatpush.bf16.msra.mxu0 %v2479
    %2642 = vmatpush.bf16.msra.mxu0 %v2477
    %2643 = vmatpush.bf16.msra.mxu0 %v2475
    %2644 = vmatpush.bf16.msra.mxu0 %v2473
    %2645 = vmatpush.bf16.msra.mxu0 %v2471
    %2646 = vmatpush.bf16.msra.mxu0 %v2469
    %2647 = vmatpush.bf16.msra.mxu0 %v2467
    %2648 = vmatmul.bf16.gmra.mxu0 %v2170
    %v2649 = vpop.f32.mrf.mxu0
    %v2650 = vadd.f32 %v2637, %v2649
    %v2651 = vpop.f32.mrf.mxu0
    %2652 = vdwg.mxu0
    %2653 = vmatpush.bf16.msra.mxu0 %v2497
    %2654 = vmatpush.bf16.msra.mxu0 %v2495
    %2655 = vmatpush.bf16.msra.mxu0 %v2493
    %2656 = vmatpush.bf16.msra.mxu0 %v2491
    %2657 = vmatpush.bf16.msra.mxu0 %v2489
    %2658 = vmatpush.bf16.msra.mxu0 %v2487
    %2659 = vmatpush.bf16.msra.mxu0 %v2485
    %2660 = vmatpush.bf16.msra.mxu0 %v2483
    %2661 = vmatmul.bf16.gmra.mxu0 %v2171
    %v2662 = vpop.f32.mrf.mxu0
    %v2663 = vadd.f32 %v2650, %v2662
    %v2664 = vpop.f32.mrf.mxu0
    %2665 = vdwg.mxu0
    %v2666 = vmax.f32 %v2611, 0.0
    %v2667 = vmax.f32 %v2663, 0.0
    %v2668 = vpack.c.bf16 %v2666, %v2666
    %v2669 = vpack.c.bf16 %v2667, %v2667
    %v2670 = vld [vmem:[%s5] sm:$0xf]
    %v2671 = vld [vmem:[%s5 + $0x4] sm:$0xf]
    %v2672 = vld [vmem:[%s5 + $0x8] sm:$0xf]
    %v2673 = vld [vmem:[%s5 + $0xc] sm:$0xf]
    %v2674 = vld [vmem:[%s5 + $0x10] sm:$0xf]
    %v2675 = vld [vmem:[%s5 + $0x14] sm:$0xf]
    %v2676 = vld [vmem:[%s5 + $0x18] sm:$0xf]
    %v2677 = vld [vmem:[%s5 + $0x1c] sm:$0xf]
    %v2678 = vld [vmem:[%s5 + $0x20] sm:$0xf]
    %v2679 = vld [vmem:[%s5 + $0x24] sm:$0xf]
    %v2680 = vld [vmem:[%s5 + $0x28] sm:$0xf]
    %v2681 = vld [vmem:[%s5 + $0x2c] sm:$0xf]
    %v2682 = vld [vmem:[%s5 + $0x30] sm:$0xf]
    %v2683 = vld [vmem:[%s5 + $0x34] sm:$0xf]
    %v2684 = vld [vmem:[%s5 + $0x38] sm:$0xf]
    %v2685 = vld [vmem:[%s5 + $0x3c] sm:$0xf]
    %v2686 = vld [vmem:[%s5 + $0x40] sm:$0xf]
    %v2687 = vld [vmem:[%s5 + $0x44] sm:$0xf]
    %v2688 = vld [vmem:[%s5 + $0x48] sm:$0xf]
    %v2689 = vld [vmem:[%s5 + $0x4c] sm:$0xf]
    %v2690 = vld [vmem:[%s5 + $0x50] sm:$0xf]
    %v2691 = vld [vmem:[%s5 + $0x54] sm:$0xf]
    %v2692 = vld [vmem:[%s5 + $0x58] sm:$0xf]
    %v2693 = vld [vmem:[%s5 + $0x5c] sm:$0xf]
    %v2694 = vld [vmem:[%s5 + $0x60] sm:$0xf]
    %v2695 = vld [vmem:[%s5 + $0x64] sm:$0xf]
    %v2696 = vld [vmem:[%s5 + $0x68] sm:$0xf]
    %v2697 = vld [vmem:[%s5 + $0x6c] sm:$0xf]
    %v2698 = vld [vmem:[%s5 + $0x70] sm:$0xf]
    %v2699 = vld [vmem:[%s5 + $0x74] sm:$0xf]
    %v2700 = vld [vmem:[%s5 + $0x78] sm:$0xf]
    %v2701 = vld [vmem:[%s5 + $0x7c] sm:$0xf]
    %v2702 = vld [vmem:[%s6] sm:$0x1]
    %v2704 = vperm.slane %v2702, 0
    %v2738 = vunpack.c.l.b16 %v2670
    %v2739 = vunpack.c.l.b16 %v2671
    %v2740 = vunpack.c.l.b16 %v2672
    %v2741 = vunpack.c.l.b16 %v2673
    %v2742 = vunpack.c.l.b16 %v2674
    %v2743 = vunpack.c.l.b16 %v2675
    %v2744 = vunpack.c.l.b16 %v2676
    %v2745 = vunpack.c.l.b16 %v2677
    %v2746 = vunpack.c.l.b16 %v2678
    %v2747 = vunpack.c.l.b16 %v2679
    %v2748 = vunpack.c.l.b16 %v2680
    %v2749 = vunpack.c.l.b16 %v2681
    %v2750 = vunpack.c.l.b16 %v2682
    %v2751 = vunpack.c.l.b16 %v2683
    %v2752 = vunpack.c.l.b16 %v2684
    %v2753 = vunpack.c.l.b16 %v2685
    %v2754 = vunpack.c.l.b16 %v2686
    %v2755 = vunpack.c.l.b16 %v2687
    %v2756 = vunpack.c.l.b16 %v2688
    %v2757 = vunpack.c.l.b16 %v2689
    %v2758 = vunpack.c.l.b16 %v2690
    %v2759 = vunpack.c.l.b16 %v2691
    %v2760 = vunpack.c.l.b16 %v2692
    %v2761 = vunpack.c.l.b16 %v2693
    %v2762 = vunpack.c.l.b16 %v2694
    %v2763 = vunpack.c.l.b16 %v2695
    %v2764 = vunpack.c.l.b16 %v2696
    %v2765 = vunpack.c.l.b16 %v2697
    %v2766 = vunpack.c.l.b16 %v2698
    %v2767 = vunpack.c.l.b16 %v2699
    %v2768 = vunpack.c.l.b16 %v2700
    %v2769 = vunpack.c.l.b16 %v2701
    %v2770 = vpack.c.b16 %v2739, %v2738
    %v2771 = vpack.c.b16 %v2741, %v2740
    %v2772 = vpack.c.b16 %v2743, %v2742
    %v2773 = vpack.c.b16 %v2745, %v2744
    %v2774 = vpack.c.b16 %v2747, %v2746
    %v2775 = vpack.c.b16 %v2749, %v2748
    %v2776 = vpack.c.b16 %v2751, %v2750
    %v2777 = vpack.c.b16 %v2753, %v2752
    %v2778 = vpack.c.b16 %v2755, %v2754
    %v2779 = vpack.c.b16 %v2757, %v2756
    %v2780 = vpack.c.b16 %v2759, %v2758
    %v2781 = vpack.c.b16 %v2761, %v2760
    %v2782 = vpack.c.b16 %v2763, %v2762
    %v2783 = vpack.c.b16 %v2765, %v2764
    %v2784 = vpack.c.b16 %v2767, %v2766
    %v2785 = vpack.c.b16 %v2769, %v2768
    %2802 = vmatpush.bf16.msra.mxu0 %v2777
    %2803 = vmatpush.bf16.msra.mxu0 %v2776
    %2804 = vmatpush.bf16.msra.mxu0 %v2775
    %2805 = vmatpush.bf16.msra.mxu0 %v2774
    %2806 = vmatpush.bf16.msra.mxu0 %v2773
    %2807 = vmatpush.bf16.msra.mxu0 %v2772
    %2808 = vmatpush.bf16.msra.mxu0 %v2771
    %2809 = vmatpush.bf16.msra.mxu0 %v2770
    %2810 = vmatmul.bf16.gmra.mxu0 %v2668
    %v2811 = vpop.f32.mrf.mxu0
    %v2812 = vadd.f32 %v2704, %v2811
    %v2813 = vpop.f32.mrf.mxu0
    %2814 = vdwg.mxu0
    %2815 = vmatpush.bf16.msra.mxu0 %v2785
    %2816 = vmatpush.bf16.msra.mxu0 %v2784
    %2817 = vmatpush.bf16.msra.mxu0 %v2783
    %2818 = vmatpush.bf16.msra.mxu0 %v2782
    %2819 = vmatpush.bf16.msra.mxu0 %v2781
    %2820 = vmatpush.bf16.msra.mxu0 %v2780
    %2821 = vmatpush.bf16.msra.mxu0 %v2779
    %2822 = vmatpush.bf16.msra.mxu0 %v2778
    %2823 = vmatmul.bf16.gmra.mxu0 %v2669
    %v2824 = vpop.f32.mrf.mxu0
    %v2825 = vadd.f32 %v2812, %v2824
    %v2826 = vpop.f32.mrf.mxu0
    %2827 = vdwg.mxu0
    %2828 = vst [vmem:[#allocation14] sm:$0x3] %v2825
    %v2829 = vpack.c.bf16 %v2825, %v2825
    %v2830 = vld [vmem:[#allocation7] sm:$0xff]
    %v2831 = vld [vmem:[#allocation7 + $0x8] sm:$0xff]
    %v2832 = vld [vmem:[#allocation7 + $0x10] sm:$0xff]
    %v2833 = vld [vmem:[#allocation7 + $0x18] sm:$0xff]
    %v2834 = vld [vmem:[#allocation7 + $0x20] sm:$0xff]
    %v2835 = vld [vmem:[#allocation7 + $0x28] sm:$0xff]
    %v2836 = vld [vmem:[#allocation7 + $0x30] sm:$0xff]
    %v2837 = vld [vmem:[#allocation7 + $0x38] sm:$0xff]
    %v2838 = vld [vmem:[#allocation7 + $0x40] sm:$0xff]
    %v2839 = vld [vmem:[#allocation7 + $0x48] sm:$0xff]
    %v2840 = vld [vmem:[#allocation7 + $0x50] sm:$0xff]
    %v2841 = vld [vmem:[#allocation7 + $0x58] sm:$0xff]
    %v2842 = vld [vmem:[#allocation7 + $0x60] sm:$0xff]
    %v2843 = vld [vmem:[#allocation7 + $0x68] sm:$0xff]
    %v2844 = vld [vmem:[#allocation7 + $0x70] sm:$0xff]
    %v2845 = vld [vmem:[#allocation7 + $0x78] sm:$0xff]
    %v2846 = vld [vmem:[%s8] sm:$0x3]
    %v2848 = vperm.slane %v2846, 0
    %v2849 = vperm.slane %v2846, 1
    %v2868 = vunpack.c.l.b16 %v2830
    %v2869 = vunpack.c.h.b16 %v2830
    %v2870 = vunpack.c.l.b16 %v2831
    %v2871 = vunpack.c.h.b16 %v2831
    %v2872 = vunpack.c.l.b16 %v2832
    %v2873 = vunpack.c.h.b16 %v2832
    %v2874 = vunpack.c.l.b16 %v2833
    %v2875 = vunpack.c.h.b16 %v2833
    %v2876 = vunpack.c.l.b16 %v2834
    %v2877 = vunpack.c.h.b16 %v2834
    %v2878 = vunpack.c.l.b16 %v2835
    %v2879 = vunpack.c.h.b16 %v2835
    %v2880 = vunpack.c.l.b16 %v2836
    %v2881 = vunpack.c.h.b16 %v2836
    %v2882 = vunpack.c.l.b16 %v2837
    %v2883 = vunpack.c.h.b16 %v2837
    %v2884 = vunpack.c.l.b16 %v2838
    %v2885 = vunpack.c.h.b16 %v2838
    %v2886 = vunpack.c.l.b16 %v2839
    %v2887 = vunpack.c.h.b16 %v2839
    %v2888 = vunpack.c.l.b16 %v2840
    %v2889 = vunpack.c.h.b16 %v2840
    %v2890 = vunpack.c.l.b16 %v2841
    %v2891 = vunpack.c.h.b16 %v2841
    %v2892 = vunpack.c.l.b16 %v2842
    %v2893 = vunpack.c.h.b16 %v2842
    %v2894 = vunpack.c.l.b16 %v2843
    %v2895 = vunpack.c.h.b16 %v2843
    %v2896 = vunpack.c.l.b16 %v2844
    %v2897 = vunpack.c.h.b16 %v2844
    %v2898 = vunpack.c.l.b16 %v2845
    %v2899 = vunpack.c.h.b16 %v2845
    %v2900 = vpack.c.b16 %v2870, %v2868
    %v2901 = vpack.c.b16 %v2871, %v2869
    %v2902 = vpack.c.b16 %v2874, %v2872
    %v2903 = vpack.c.b16 %v2875, %v2873
    %v2904 = vpack.c.b16 %v2878, %v2876
    %v2905 = vpack.c.b16 %v2879, %v2877
    %v2906 = vpack.c.b16 %v2882, %v2880
    %v2907 = vpack.c.b16 %v2883, %v2881
    %v2908 = vpack.c.b16 %v2886, %v2884
    %v2909 = vpack.c.b16 %v2887, %v2885
    %v2910 = vpack.c.b16 %v2890, %v2888
    %v2911 = vpack.c.b16 %v2891, %v2889
    %v2912 = vpack.c.b16 %v2894, %v2892
    %v2913 = vpack.c.b16 %v2895, %v2893
    %v2914 = vpack.c.b16 %v2898, %v2896
    %v2915 = vpack.c.b16 %v2899, %v2897
    %2932 = vmatpush.bf16.msra.mxu0 %v2914
    %2933 = vmatpush.bf16.msra.mxu0 %v2912
    %2934 = vmatpush.bf16.msra.mxu0 %v2910
    %2935 = vmatpush.bf16.msra.mxu0 %v2908
    %2936 = vmatpush.bf16.msra.mxu0 %v2906
    %2937 = vmatpush.bf16.msra.mxu0 %v2904
    %2938 = vmatpush.bf16.msra.mxu0 %v2902
    %2939 = vmatpush.bf16.msra.mxu0 %v2900
    %2940 = vmatmul.bf16.gmra.mxu0 %v2829
    %v2941 = vpop.f32.mrf.mxu0
    %v2942 = vadd.f32 %v2848, %v2941
    %v2943 = vpop.f32.mrf.mxu0
    %2944 = vdwg.mxu0
    %2945 = vmatpush.bf16.msra.mxu0 %v2915
    %2946 = vmatpush.bf16.msra.mxu0 %v2913
    %2947 = vmatpush.bf16.msra.mxu0 %v2911
    %2948 = vmatpush.bf16.msra.mxu0 %v2909
    %2949 = vmatpush.bf16.msra.mxu0 %v2907
    %2950 = vmatpush.bf16.msra.mxu0 %v2905
    %2951 = vmatpush.bf16.msra.mxu0 %v2903
    %2952 = vmatpush.bf16.msra.mxu0 %v2901
    %2953 = vmatmul.bf16.gmra.mxu0 %v2829
    %v2954 = vpop.f32.mrf.mxu0
    %v2955 = vadd.f32 %v2849, %v2954
    %v2956 = vpop.f32.mrf.mxu0
    %2957 = vdwg.mxu0
    %v2958 = vmax.f32 %v2942, 0.0
    %v2959 = vmax.f32 %v2955, 0.0
    %v2960 = vpack.c.bf16 %v2958, %v2958
    %v2961 = vpack.c.bf16 %v2959, %v2959
    %v2962 = vld [vmem:[#allocation8] sm:$0xff]
    %v2963 = vld [vmem:[#allocation8 + $0x8] sm:$0xff]
    %v2964 = vld [vmem:[#allocation8 + $0x10] sm:$0xff]
    %v2965 = vld [vmem:[#allocation8 + $0x18] sm:$0xff]
    %v2966 = vld [vmem:[#allocation8 + $0x20] sm:$0xff]
    %v2967 = vld [vmem:[#allocation8 + $0x28] sm:$0xff]
    %v2968 = vld [vmem:[#allocation8 + $0x30] sm:$0xff]
    %v2969 = vld [vmem:[#allocation8 + $0x38] sm:$0xff]
    %v2970 = vld [vmem:[#allocation8 + $0x40] sm:$0xff]
    %v2971 = vld [vmem:[#allocation8 + $0x48] sm:$0xff]
    %v2972 = vld [vmem:[#allocation8 + $0x50] sm:$0xff]
    %v2973 = vld [vmem:[#allocation8 + $0x58] sm:$0xff]
    %v2974 = vld [vmem:[#allocation8 + $0x60] sm:$0xff]
    %v2975 = vld [vmem:[#allocation8 + $0x68] sm:$0xff]
    %v2976 = vld [vmem:[#allocation8 + $0x70] sm:$0xff]
    %v2977 = vld [vmem:[#allocation8 + $0x78] sm:$0xff]
    %v2978 = vld [vmem:[#allocation8 + $0x80] sm:$0xff]
    %v2979 = vld [vmem:[#allocation8 + $0x88] sm:$0xff]
    %v2980 = vld [vmem:[#allocation8 + $0x90] sm:$0xff]
    %v2981 = vld [vmem:[#allocation8 + $0x98] sm:$0xff]
    %v2982 = vld [vmem:[#allocation8 + $0xa0] sm:$0xff]
    %v2983 = vld [vmem:[#allocation8 + $0xa8] sm:$0xff]
    %v2984 = vld [vmem:[#allocation8 + $0xb0] sm:$0xff]
    %v2985 = vld [vmem:[#allocation8 + $0xb8] sm:$0xff]
    %v2986 = vld [vmem:[#allocation8 + $0xc0] sm:$0xff]
    %v2987 = vld [vmem:[#allocation8 + $0xc8] sm:$0xff]
    %v2988 = vld [vmem:[#allocation8 + $0xd0] sm:$0xff]
    %v2989 = vld [vmem:[#allocation8 + $0xd8] sm:$0xff]
    %v2990 = vld [vmem:[#allocation8 + $0xe0] sm:$0xff]
    %v2991 = vld [vmem:[#allocation8 + $0xe8] sm:$0xff]
    %v2992 = vld [vmem:[#allocation8 + $0xf0] sm:$0xff]
    %v2993 = vld [vmem:[#allocation8 + $0xf8] sm:$0xff]
    %v2994 = vld [vmem:[#allocation8 + $0x100] sm:$0xff]
    %v2995 = vld [vmem:[#allocation8 + $0x108] sm:$0xff]
    %v2996 = vld [vmem:[#allocation8 + $0x110] sm:$0xff]
    %v2997 = vld [vmem:[#allocation8 + $0x118] sm:$0xff]
    %v2998 = vld [vmem:[#allocation8 + $0x120] sm:$0xff]
    %v2999 = vld [vmem:[#allocation8 + $0x128] sm:$0xff]
    %v3000 = vld [vmem:[#allocation8 + $0x130] sm:$0xff]
    %v3001 = vld [vmem:[#allocation8 + $0x138] sm:$0xff]
    %v3002 = vld [vmem:[#allocation8 + $0x140] sm:$0xff]
    %v3003 = vld [vmem:[#allocation8 + $0x148] sm:$0xff]
    %v3004 = vld [vmem:[#allocation8 + $0x150] sm:$0xff]
    %v3005 = vld [vmem:[#allocation8 + $0x158] sm:$0xff]
    %v3006 = vld [vmem:[#allocation8 + $0x160] sm:$0xff]
    %v3007 = vld [vmem:[#allocation8 + $0x168] sm:$0xff]
    %v3008 = vld [vmem:[#allocation8 + $0x170] sm:$0xff]
    %v3009 = vld [vmem:[#allocation8 + $0x178] sm:$0xff]
    %v3010 = vld [vmem:[#allocation8 + $0x180] sm:$0xff]
    %v3011 = vld [vmem:[#allocation8 + $0x188] sm:$0xff]
    %v3012 = vld [vmem:[#allocation8 + $0x190] sm:$0xff]
    %v3013 = vld [vmem:[#allocation8 + $0x198] sm:$0xff]
    %v3014 = vld [vmem:[#allocation8 + $0x1a0] sm:$0xff]
    %v3015 = vld [vmem:[#allocation8 + $0x1a8] sm:$0xff]
    %v3016 = vld [vmem:[#allocation8 + $0x1b0] sm:$0xff]
    %v3017 = vld [vmem:[#allocation8 + $0x1b8] sm:$0xff]
    %v3018 = vld [vmem:[#allocation8 + $0x1c0] sm:$0xff]
    %v3019 = vld [vmem:[#allocation8 + $0x1c8] sm:$0xff]
    %v3020 = vld [vmem:[#allocation8 + $0x1d0] sm:$0xff]
    %v3021 = vld [vmem:[#allocation8 + $0x1d8] sm:$0xff]
    %v3022 = vld [vmem:[#allocation8 + $0x1e0] sm:$0xff]
    %v3023 = vld [vmem:[#allocation8 + $0x1e8] sm:$0xff]
    %v3024 = vld [vmem:[#allocation8 + $0x1f0] sm:$0xff]
    %v3025 = vld [vmem:[#allocation8 + $0x1f8] sm:$0xff]
    %v3026 = vld [vmem:[%s10] sm:$0xf]
    %v3028 = vperm.slane %v3026, 0
    %v3029 = vperm.slane %v3026, 1
    %v3030 = vperm.slane %v3026, 2
    %v3031 = vperm.slane %v3026, 3
    %v3100 = vunpack.c.l.b16 %v2962
    %v3101 = vunpack.c.h.b16 %v2962
    %v3102 = vunpack.c.l.b16 %v2963
    %v3103 = vunpack.c.h.b16 %v2963
    %v3104 = vunpack.c.l.b16 %v2964
    %v3105 = vunpack.c.h.b16 %v2964
    %v3106 = vunpack.c.l.b16 %v2965
    %v3107 = vunpack.c.h.b16 %v2965
    %v3108 = vunpack.c.l.b16 %v2966
    %v3109 = vunpack.c.h.b16 %v2966
    %v3110 = vunpack.c.l.b16 %v2967
    %v3111 = vunpack.c.h.b16 %v2967
    %v3112 = vunpack.c.l.b16 %v2968
    %v3113 = vunpack.c.h.b16 %v2968
    %v3114 = vunpack.c.l.b16 %v2969
    %v3115 = vunpack.c.h.b16 %v2969
    %v3116 = vunpack.c.l.b16 %v2970
    %v3117 = vunpack.c.h.b16 %v2970
    %v3118 = vunpack.c.l.b16 %v2971
    %v3119 = vunpack.c.h.b16 %v2971
    %v3120 = vunpack.c.l.b16 %v2972
    %v3121 = vunpack.c.h.b16 %v2972
    %v3122 = vunpack.c.l.b16 %v2973
    %v3123 = vunpack.c.h.b16 %v2973
    %v3124 = vunpack.c.l.b16 %v2974
    %v3125 = vunpack.c.h.b16 %v2974
    %v3126 = vunpack.c.l.b16 %v2975
    %v3127 = vunpack.c.h.b16 %v2975
    %v3128 = vunpack.c.l.b16 %v2976
    %v3129 = vunpack.c.h.b16 %v2976
    %v3130 = vunpack.c.l.b16 %v2977
    %v3131 = vunpack.c.h.b16 %v2977
    %v3132 = vunpack.c.l.b16 %v2978
    %v3133 = vunpack.c.h.b16 %v2978
    %v3134 = vunpack.c.l.b16 %v2979
    %v3135 = vunpack.c.h.b16 %v2979
    %v3136 = vunpack.c.l.b16 %v2980
    %v3137 = vunpack.c.h.b16 %v2980
    %v3138 = vunpack.c.l.b16 %v2981
    %v3139 = vunpack.c.h.b16 %v2981
    %v3140 = vunpack.c.l.b16 %v2982
    %v3141 = vunpack.c.h.b16 %v2982
    %v3142 = vunpack.c.l.b16 %v2983
    %v3143 = vunpack.c.h.b16 %v2983
    %v3144 = vunpack.c.l.b16 %v2984
    %v3145 = vunpack.c.h.b16 %v2984
    %v3146 = vunpack.c.l.b16 %v2985
    %v3147 = vunpack.c.h.b16 %v2985
    %v3148 = vunpack.c.l.b16 %v2986
    %v3149 = vunpack.c.h.b16 %v2986
    %v3150 = vunpack.c.l.b16 %v2987
    %v3151 = vunpack.c.h.b16 %v2987
    %v3152 = vunpack.c.l.b16 %v2988
    %v3153 = vunpack.c.h.b16 %v2988
    %v3154 = vunpack.c.l.b16 %v2989
    %v3155 = vunpack.c.h.b16 %v2989
    %v3156 = vunpack.c.l.b16 %v2990
    %v3157 = vunpack.c.h.b16 %v2990
    %v3158 = vunpack.c.l.b16 %v2991
    %v3159 = vunpack.c.h.b16 %v2991
    %v3160 = vunpack.c.l.b16 %v2992
    %v3161 = vunpack.c.h.b16 %v2992
    %v3162 = vunpack.c.l.b16 %v2993
    %v3163 = vunpack.c.h.b16 %v2993
    %v3164 = vunpack.c.l.b16 %v2994
    %v3165 = vunpack.c.h.b16 %v2994
    %v3166 = vunpack.c.l.b16 %v2995
    %v3167 = vunpack.c.h.b16 %v2995
    %v3168 = vunpack.c.l.b16 %v2996
    %v3169 = vunpack.c.h.b16 %v2996
    %v3170 = vunpack.c.l.b16 %v2997
    %v3171 = vunpack.c.h.b16 %v2997
    %v3172 = vunpack.c.l.b16 %v2998
    %v3173 = vunpack.c.h.b16 %v2998
    %v3174 = vunpack.c.l.b16 %v2999
    %v3175 = vunpack.c.h.b16 %v2999
    %v3176 = vunpack.c.l.b16 %v3000
    %v3177 = vunpack.c.h.b16 %v3000
    %v3178 = vunpack.c.l.b16 %v3001
    %v3179 = vunpack.c.h.b16 %v3001
    %v3180 = vunpack.c.l.b16 %v3002
    %v3181 = vunpack.c.h.b16 %v3002
    %v3182 = vunpack.c.l.b16 %v3003
    %v3183 = vunpack.c.h.b16 %v3003
    %v3184 = vunpack.c.l.b16 %v3004
    %v3185 = vunpack.c.h.b16 %v3004
    %v3186 = vunpack.c.l.b16 %v3005
    %v3187 = vunpack.c.h.b16 %v3005
    %v3188 = vunpack.c.l.b16 %v3006
    %v3189 = vunpack.c.h.b16 %v3006
    %v3190 = vunpack.c.l.b16 %v3007
    %v3191 = vunpack.c.h.b16 %v3007
    %v3192 = vunpack.c.l.b16 %v3008
    %v3193 = vunpack.c.h.b16 %v3008
    %v3194 = vunpack.c.l.b16 %v3009
    %v3195 = vunpack.c.h.b16 %v3009
    %v3196 = vunpack.c.l.b16 %v3010
    %v3197 = vunpack.c.h.b16 %v3010
    %v3198 = vunpack.c.l.b16 %v3011
    %v3199 = vunpack.c.h.b16 %v3011
    %v3200 = vunpack.c.l.b16 %v3012
    %v3201 = vunpack.c.h.b16 %v3012
    %v3202 = vunpack.c.l.b16 %v3013
    %v3203 = vunpack.c.h.b16 %v3013
    %v3204 = vunpack.c.l.b16 %v3014
    %v3205 = vunpack.c.h.b16 %v3014
    %v3206 = vunpack.c.l.b16 %v3015
    %v3207 = vunpack.c.h.b16 %v3015
    %v3208 = vunpack.c.l.b16 %v3016
    %v3209 = vunpack.c.h.b16 %v3016
    %v3210 = vunpack.c.l.b16 %v3017
    %v3211 = vunpack.c.h.b16 %v3017
    %v3212 = vunpack.c.l.b16 %v3018
    %v3213 = vunpack.c.h.b16 %v3018
    %v3214 = vunpack.c.l.b16 %v3019
    %v3215 = vunpack.c.h.b16 %v3019
    %v3216 = vunpack.c.l.b16 %v3020
    %v3217 = vunpack.c.h.b16 %v3020
    %v3218 = vunpack.c.l.b16 %v3021
    %v3219 = vunpack.c.h.b16 %v3021
    %v3220 = vunpack.c.l.b16 %v3022
    %v3221 = vunpack.c.h.b16 %v3022
    %v3222 = vunpack.c.l.b16 %v3023
    %v3223 = vunpack.c.h.b16 %v3023
    %v3224 = vunpack.c.l.b16 %v3024
    %v3225 = vunpack.c.h.b16 %v3024
    %v3226 = vunpack.c.l.b16 %v3025
    %v3227 = vunpack.c.h.b16 %v3025
    %v3228 = vpack.c.b16 %v3104, %v3100
    %v3229 = vpack.c.b16 %v3105, %v3101
    %v3230 = vpack.c.b16 %v3106, %v3102
    %v3231 = vpack.c.b16 %v3107, %v3103
    %v3232 = vpack.c.b16 %v3112, %v3108
    %v3233 = vpack.c.b16 %v3113, %v3109
    %v3234 = vpack.c.b16 %v3114, %v3110
    %v3235 = vpack.c.b16 %v3115, %v3111
    %v3236 = vpack.c.b16 %v3120, %v3116
    %v3237 = vpack.c.b16 %v3121, %v3117
    %v3238 = vpack.c.b16 %v3122, %v3118
    %v3239 = vpack.c.b16 %v3123, %v3119
    %v3240 = vpack.c.b16 %v3128, %v3124
    %v3241 = vpack.c.b16 %v3129, %v3125
    %v3242 = vpack.c.b16 %v3130, %v3126
    %v3243 = vpack.c.b16 %v3131, %v3127
    %v3244 = vpack.c.b16 %v3136, %v3132
    %v3245 = vpack.c.b16 %v3137, %v3133
    %v3246 = vpack.c.b16 %v3138, %v3134
    %v3247 = vpack.c.b16 %v3139, %v3135
    %v3248 = vpack.c.b16 %v3144, %v3140
    %v3249 = vpack.c.b16 %v3145, %v3141
    %v3250 = vpack.c.b16 %v3146, %v3142
    %v3251 = vpack.c.b16 %v3147, %v3143
    %v3252 = vpack.c.b16 %v3152, %v3148
    %v3253 = vpack.c.b16 %v3153, %v3149
    %v3254 = vpack.c.b16 %v3154, %v3150
    %v3255 = vpack.c.b16 %v3155, %v3151
    %v3256 = vpack.c.b16 %v3160, %v3156
    %v3257 = vpack.c.b16 %v3161, %v3157
    %v3258 = vpack.c.b16 %v3162, %v3158
    %v3259 = vpack.c.b16 %v3163, %v3159
    %v3260 = vpack.c.b16 %v3168, %v3164
    %v3261 = vpack.c.b16 %v3169, %v3165
    %v3262 = vpack.c.b16 %v3170, %v3166
    %v3263 = vpack.c.b16 %v3171, %v3167
    %v3264 = vpack.c.b16 %v3176, %v3172
    %v3265 = vpack.c.b16 %v3177, %v3173
    %v3266 = vpack.c.b16 %v3178, %v3174
    %v3267 = vpack.c.b16 %v3179, %v3175
    %v3268 = vpack.c.b16 %v3184, %v3180
    %v3269 = vpack.c.b16 %v3185, %v3181
    %v3270 = vpack.c.b16 %v3186, %v3182
    %v3271 = vpack.c.b16 %v3187, %v3183
    %v3272 = vpack.c.b16 %v3192, %v3188
    %v3273 = vpack.c.b16 %v3193, %v3189
    %v3274 = vpack.c.b16 %v3194, %v3190
    %v3275 = vpack.c.b16 %v3195, %v3191
    %v3276 = vpack.c.b16 %v3200, %v3196
    %v3277 = vpack.c.b16 %v3201, %v3197
    %v3278 = vpack.c.b16 %v3202, %v3198
    %v3279 = vpack.c.b16 %v3203, %v3199
    %v3280 = vpack.c.b16 %v3208, %v3204
    %v3281 = vpack.c.b16 %v3209, %v3205
    %v3282 = vpack.c.b16 %v3210, %v3206
    %v3283 = vpack.c.b16 %v3211, %v3207
    %v3284 = vpack.c.b16 %v3216, %v3212
    %v3285 = vpack.c.b16 %v3217, %v3213
    %v3286 = vpack.c.b16 %v3218, %v3214
    %v3287 = vpack.c.b16 %v3219, %v3215
    %v3288 = vpack.c.b16 %v3224, %v3220
    %v3289 = vpack.c.b16 %v3225, %v3221
    %v3290 = vpack.c.b16 %v3226, %v3222
    %v3291 = vpack.c.b16 %v3227, %v3223
    %3356 = vmatpush.bf16.msra.mxu0 %v3256
    %3357 = vmatpush.bf16.msra.mxu0 %v3252
    %3358 = vmatpush.bf16.msra.mxu0 %v3248
    %3359 = vmatpush.bf16.msra.mxu0 %v3244
    %3360 = vmatpush.bf16.msra.mxu0 %v3240
    %3361 = vmatpush.bf16.msra.mxu0 %v3236
    %3362 = vmatpush.bf16.msra.mxu0 %v3232
    %3363 = vmatpush.bf16.msra.mxu0 %v3228
    %3364 = vmatmul.bf16.gmra.mxu0 %v2960
    %v3365 = vpop.f32.mrf.mxu0
    %v3366 = vadd.f32 %v3028, %v3365
    %v3367 = vpop.f32.mrf.mxu0
    %3368 = vdwg.mxu0
    %3369 = vmatpush.bf16.msra.mxu0 %v3288
    %3370 = vmatpush.bf16.msra.mxu0 %v3284
    %3371 = vmatpush.bf16.msra.mxu0 %v3280
    %3372 = vmatpush.bf16.msra.mxu0 %v3276
    %3373 = vmatpush.bf16.msra.mxu0 %v3272
    %3374 = vmatpush.bf16.msra.mxu0 %v3268
    %3375 = vmatpush.bf16.msra.mxu0 %v3264
    %3376 = vmatpush.bf16.msra.mxu0 %v3260
    %3377 = vmatmul.bf16.gmra.mxu0 %v2961
    %v3378 = vpop.f32.mrf.mxu0
    %v3379 = vadd.f32 %v3366, %v3378
    %v3380 = vpop.f32.mrf.mxu0
    %3381 = vdwg.mxu0
    %3382 = vmatpush.bf16.msra.mxu0 %v3257
    %3383 = vmatpush.bf16.msra.mxu0 %v3253
    %3384 = vmatpush.bf16.msra.mxu0 %v3249
    %3385 = vmatpush.bf16.msra.mxu0 %v3245
    %3386 = vmatpush.bf16.msra.mxu0 %v3241
    %3387 = vmatpush.bf16.msra.mxu0 %v3237
    %3388 = vmatpush.bf16.msra.mxu0 %v3233
    %3389 = vmatpush.bf16.msra.mxu0 %v3229
    %3390 = vmatmul.bf16.gmra.mxu0 %v2960
    %v3391 = vpop.f32.mrf.mxu0
    %v3392 = vadd.f32 %v3029, %v3391
    %v3393 = vpop.f32.mrf.mxu0
    %3394 = vdwg.mxu0
    %3395 = vmatpush.bf16.msra.mxu0 %v3289
    %3396 = vmatpush.bf16.msra.mxu0 %v3285
    %3397 = vmatpush.bf16.msra.mxu0 %v3281
    %3398 = vmatpush.bf16.msra.mxu0 %v3277
    %3399 = vmatpush.bf16.msra.mxu0 %v3273
    %3400 = vmatpush.bf16.msra.mxu0 %v3269
    %3401 = vmatpush.bf16.msra.mxu0 %v3265
    %3402 = vmatpush.bf16.msra.mxu0 %v3261
    %3403 = vmatmul.bf16.gmra.mxu0 %v2961
    %v3404 = vpop.f32.mrf.mxu0
    %v3405 = vadd.f32 %v3392, %v3404
    %v3406 = vpop.f32.mrf.mxu0
    %3407 = vdwg.mxu0
    %3408 = vmatpush.bf16.msra.mxu0 %v3258
    %3409 = vmatpush.bf16.msra.mxu0 %v3254
    %3410 = vmatpush.bf16.msra.mxu0 %v3250
    %3411 = vmatpush.bf16.msra.mxu0 %v3246
    %3412 = vmatpush.bf16.msra.mxu0 %v3242
    %3413 = vmatpush.bf16.msra.mxu0 %v3238
    %3414 = vmatpush.bf16.msra.mxu0 %v3234
    %3415 = vmatpush.bf16.msra.mxu0 %v3230
    %3416 = vmatmul.bf16.gmra.mxu0 %v2960
    %v3417 = vpop.f32.mrf.mxu0
    %v3418 = vadd.f32 %v3030, %v3417
    %v3419 = vpop.f32.mrf.mxu0
    %3420 = vdwg.mxu0
    %3421 = vmatpush.bf16.msra.mxu0 %v3290
    %3422 = vmatpush.bf16.msra.mxu0 %v3286
    %3423 = vmatpush.bf16.msra.mxu0 %v3282
    %3424 = vmatpush.bf16.msra.mxu0 %v3278
    %3425 = vmatpush.bf16.msra.mxu0 %v3274
    %3426 = vmatpush.bf16.msra.mxu0 %v3270
    %3427 = vmatpush.bf16.msra.mxu0 %v3266
    %3428 = vmatpush.bf16.msra.mxu0 %v3262
    %3429 = vmatmul.bf16.gmra.mxu0 %v2961
    %v3430 = vpop.f32.mrf.mxu0
    %v3431 = vadd.f32 %v3418, %v3430
    %v3432 = vpop.f32.mrf.mxu0
    %3433 = vdwg.mxu0
    %3434 = vmatpush.bf16.msra.mxu0 %v3259
    %3435 = vmatpush.bf16.msra.mxu0 %v3255
    %3436 = vmatpush.bf16.msra.mxu0 %v3251
    %3437 = vmatpush.bf16.msra.mxu0 %v3247
    %3438 = vmatpush.bf16.msra.mxu0 %v3243
    %3439 = vmatpush.bf16.msra.mxu0 %v3239
    %3440 = vmatpush.bf16.msra.mxu0 %v3235
    %3441 = vmatpush.bf16.msra.mxu0 %v3231
    %3442 = vmatmul.bf16.gmra.mxu0 %v2960
    %v3443 = vpop.f32.mrf.mxu0
    %v3444 = vadd.f32 %v3031, %v3443
    %v3445 = vpop.f32.mrf.mxu0
    %3446 = vdwg.mxu0
    %3447 = vmatpush.bf16.msra.mxu0 %v3291
    %3448 = vmatpush.bf16.msra.mxu0 %v3287
    %3449 = vmatpush.bf16.msra.mxu0 %v3283
    %3450 = vmatpush.bf16.msra.mxu0 %v3279
    %3451 = vmatpush.bf16.msra.mxu0 %v3275
    %3452 = vmatpush.bf16.msra.mxu0 %v3271
    %3453 = vmatpush.bf16.msra.mxu0 %v3267
    %3454 = vmatpush.bf16.msra.mxu0 %v3263
    %3455 = vmatmul.bf16.gmra.mxu0 %v2961
    %v3456 = vpop.f32.mrf.mxu0
    %v3457 = vadd.f32 %v3444, %v3456
    %v3458 = vpop.f32.mrf.mxu0
    %3459 = vdwg.mxu0
    %v3460 = vmax.f32 %v3379, 0.0
    %v3461 = vmax.f32 %v3405, 0.0
    %v3462 = vmax.f32 %v3431, 0.0
    %v3463 = vmax.f32 %v3457, 0.0
    %v3464 = vpack.c.bf16 %v3460, %v3460
    %v3465 = vpack.c.bf16 %v3461, %v3461
    %v3466 = vpack.c.bf16 %v3462, %v3462
    %v3467 = vpack.c.bf16 %v3463, %v3463
    %v3468 = vld [vmem:[#allocation10] sm:$0xff]
    %v3469 = vld [vmem:[#allocation10 + $0x8] sm:$0xff]
    %v3470 = vld [vmem:[#allocation10 + $0x10] sm:$0xff]
    %v3471 = vld [vmem:[#allocation10 + $0x18] sm:$0xff]
    %v3472 = vld [vmem:[#allocation10 + $0x20] sm:$0xff]
    %v3473 = vld [vmem:[#allocation10 + $0x28] sm:$0xff]
    %v3474 = vld [vmem:[#allocation10 + $0x30] sm:$0xff]
    %v3475 = vld [vmem:[#allocation10 + $0x38] sm:$0xff]
    %v3476 = vld [vmem:[#allocation10 + $0x40] sm:$0xff]
    %v3477 = vld [vmem:[#allocation10 + $0x48] sm:$0xff]
    %v3478 = vld [vmem:[#allocation10 + $0x50] sm:$0xff]
    %v3479 = vld [vmem:[#allocation10 + $0x58] sm:$0xff]
    %v3480 = vld [vmem:[#allocation10 + $0x60] sm:$0xff]
    %v3481 = vld [vmem:[#allocation10 + $0x68] sm:$0xff]
    %v3482 = vld [vmem:[#allocation10 + $0x70] sm:$0xff]
    %v3483 = vld [vmem:[#allocation10 + $0x78] sm:$0xff]
    %v3484 = vld [vmem:[#allocation10 + $0x80] sm:$0xff]
    %v3485 = vld [vmem:[#allocation10 + $0x88] sm:$0xff]
    %v3486 = vld [vmem:[#allocation10 + $0x90] sm:$0xff]
    %v3487 = vld [vmem:[#allocation10 + $0x98] sm:$0xff]
    %v3488 = vld [vmem:[#allocation10 + $0xa0] sm:$0xff]
    %v3489 = vld [vmem:[#allocation10 + $0xa8] sm:$0xff]
    %v3490 = vld [vmem:[#allocation10 + $0xb0] sm:$0xff]
    %v3491 = vld [vmem:[#allocation10 + $0xb8] sm:$0xff]
    %v3492 = vld [vmem:[#allocation10 + $0xc0] sm:$0xff]
    %v3493 = vld [vmem:[#allocation10 + $0xc8] sm:$0xff]
    %v3494 = vld [vmem:[#allocation10 + $0xd0] sm:$0xff]
    %v3495 = vld [vmem:[#allocation10 + $0xd8] sm:$0xff]
    %v3496 = vld [vmem:[#allocation10 + $0xe0] sm:$0xff]
    %v3497 = vld [vmem:[#allocation10 + $0xe8] sm:$0xff]
    %v3498 = vld [vmem:[#allocation10 + $0xf0] sm:$0xff]
    %v3499 = vld [vmem:[#allocation10 + $0xf8] sm:$0xff]
    %v3500 = vld [vmem:[#allocation10 + $0x100] sm:$0xff]
    %v3501 = vld [vmem:[#allocation10 + $0x108] sm:$0xff]
    %v3502 = vld [vmem:[#allocation10 + $0x110] sm:$0xff]
    %v3503 = vld [vmem:[#allocation10 + $0x118] sm:$0xff]
    %v3504 = vld [vmem:[#allocation10 + $0x120] sm:$0xff]
    %v3505 = vld [vmem:[#allocation10 + $0x128] sm:$0xff]
    %v3506 = vld [vmem:[#allocation10 + $0x130] sm:$0xff]
    %v3507 = vld [vmem:[#allocation10 + $0x138] sm:$0xff]
    %v3508 = vld [vmem:[#allocation10 + $0x140] sm:$0xff]
    %v3509 = vld [vmem:[#allocation10 + $0x148] sm:$0xff]
    %v3510 = vld [vmem:[#allocation10 + $0x150] sm:$0xff]
    %v3511 = vld [vmem:[#allocation10 + $0x158] sm:$0xff]
    %v3512 = vld [vmem:[#allocation10 + $0x160] sm:$0xff]
    %v3513 = vld [vmem:[#allocation10 + $0x168] sm:$0xff]
    %v3514 = vld [vmem:[#allocation10 + $0x170] sm:$0xff]
    %v3515 = vld [vmem:[#allocation10 + $0x178] sm:$0xff]
    %v3516 = vld [vmem:[#allocation10 + $0x180] sm:$0xff]
    %v3517 = vld [vmem:[#allocation10 + $0x188] sm:$0xff]
    %v3518 = vld [vmem:[#allocation10 + $0x190] sm:$0xff]
    %v3519 = vld [vmem:[#allocation10 + $0x198] sm:$0xff]
    %v3520 = vld [vmem:[#allocation10 + $0x1a0] sm:$0xff]
    %v3521 = vld [vmem:[#allocation10 + $0x1a8] sm:$0xff]
    %v3522 = vld [vmem:[#allocation10 + $0x1b0] sm:$0xff]
    %v3523 = vld [vmem:[#allocation10 + $0x1b8] sm:$0xff]
    %v3524 = vld [vmem:[#allocation10 + $0x1c0] sm:$0xff]
    %v3525 = vld [vmem:[#allocation10 + $0x1c8] sm:$0xff]
    %v3526 = vld [vmem:[#allocation10 + $0x1d0] sm:$0xff]
    %v3527 = vld [vmem:[#allocation10 + $0x1d8] sm:$0xff]
    %v3528 = vld [vmem:[#allocation10 + $0x1e0] sm:$0xff]
    %v3529 = vld [vmem:[#allocation10 + $0x1e8] sm:$0xff]
    %v3530 = vld [vmem:[#allocation10 + $0x1f0] sm:$0xff]
    %v3531 = vld [vmem:[#allocation10 + $0x1f8] sm:$0xff]
    %v3532 = vld [vmem:[#allocation10 + $0x200] sm:$0xff]
    %v3533 = vld [vmem:[#allocation10 + $0x208] sm:$0xff]
    %v3534 = vld [vmem:[#allocation10 + $0x210] sm:$0xff]
    %v3535 = vld [vmem:[#allocation10 + $0x218] sm:$0xff]
    %v3536 = vld [vmem:[#allocation10 + $0x220] sm:$0xff]
    %v3537 = vld [vmem:[#allocation10 + $0x228] sm:$0xff]
    %v3538 = vld [vmem:[#allocation10 + $0x230] sm:$0xff]
    %v3539 = vld [vmem:[#allocation10 + $0x238] sm:$0xff]
    %v3540 = vld [vmem:[#allocation10 + $0x240] sm:$0xff]
    %v3541 = vld [vmem:[#allocation10 + $0x248] sm:$0xff]
    %v3542 = vld [vmem:[#allocation10 + $0x250] sm:$0xff]
    %v3543 = vld [vmem:[#allocation10 + $0x258] sm:$0xff]
    %v3544 = vld [vmem:[#allocation10 + $0x260] sm:$0xff]
    %v3545 = vld [vmem:[#allocation10 + $0x268] sm:$0xff]
    %v3546 = vld [vmem:[#allocation10 + $0x270] sm:$0xff]
    %v3547 = vld [vmem:[#allocation10 + $0x278] sm:$0xff]
    %v3548 = vld [vmem:[#allocation10 + $0x280] sm:$0xff]
    %v3549 = vld [vmem:[#allocation10 + $0x288] sm:$0xff]
    %v3550 = vld [vmem:[#allocation10 + $0x290] sm:$0xff]
    %v3551 = vld [vmem:[#allocation10 + $0x298] sm:$0xff]
    %v3552 = vld [vmem:[#allocation10 + $0x2a0] sm:$0xff]
    %v3553 = vld [vmem:[#allocation10 + $0x2a8] sm:$0xff]
    %v3554 = vld [vmem:[#allocation10 + $0x2b0] sm:$0xff]
    %v3555 = vld [vmem:[#allocation10 + $0x2b8] sm:$0xff]
    %v3556 = vld [vmem:[#allocation10 + $0x2c0] sm:$0xff]
    %v3557 = vld [vmem:[#allocation10 + $0x2c8] sm:$0xff]
    %v3558 = vld [vmem:[#allocation10 + $0x2d0] sm:$0xff]
    %v3559 = vld [vmem:[#allocation10 + $0x2d8] sm:$0xff]
    %v3560 = vld [vmem:[#allocation10 + $0x2e0] sm:$0xff]
    %v3561 = vld [vmem:[#allocation10 + $0x2e8] sm:$0xff]
    %v3562 = vld [vmem:[#allocation10 + $0x2f0] sm:$0xff]
    %v3563 = vld [vmem:[#allocation10 + $0x2f8] sm:$0xff]
    %v3564 = vld [vmem:[#allocation10 + $0x300] sm:$0xff]
    %v3565 = vld [vmem:[#allocation10 + $0x308] sm:$0xff]
    %v3566 = vld [vmem:[#allocation10 + $0x310] sm:$0xff]
    %v3567 = vld [vmem:[#allocation10 + $0x318] sm:$0xff]
    %v3568 = vld [vmem:[#allocation10 + $0x320] sm:$0xff]
    %v3569 = vld [vmem:[#allocation10 + $0x328] sm:$0xff]
    %v3570 = vld [vmem:[#allocation10 + $0x330] sm:$0xff]
    %v3571 = vld [vmem:[#allocation10 + $0x338] sm:$0xff]
    %v3572 = vld [vmem:[#allocation10 + $0x340] sm:$0xff]
    %v3573 = vld [vmem:[#allocation10 + $0x348] sm:$0xff]
    %v3574 = vld [vmem:[#allocation10 + $0x350] sm:$0xff]
    %v3575 = vld [vmem:[#allocation10 + $0x358] sm:$0xff]
    %v3576 = vld [vmem:[#allocation10 + $0x360] sm:$0xff]
    %v3577 = vld [vmem:[#allocation10 + $0x368] sm:$0xff]
    %v3578 = vld [vmem:[#allocation10 + $0x370] sm:$0xff]
    %v3579 = vld [vmem:[#allocation10 + $0x378] sm:$0xff]
    %v3580 = vld [vmem:[#allocation10 + $0x380] sm:$0xff]
    %v3581 = vld [vmem:[#allocation10 + $0x388] sm:$0xff]
    %v3582 = vld [vmem:[#allocation10 + $0x390] sm:$0xff]
    %v3583 = vld [vmem:[#allocation10 + $0x398] sm:$0xff]
    %v3584 = vld [vmem:[#allocation10 + $0x3a0] sm:$0xff]
    %v3585 = vld [vmem:[#allocation10 + $0x3a8] sm:$0xff]
    %v3586 = vld [vmem:[#allocation10 + $0x3b0] sm:$0xff]
    %v3587 = vld [vmem:[#allocation10 + $0x3b8] sm:$0xff]
    %v3588 = vld [vmem:[#allocation10 + $0x3c0] sm:$0xff]
    %v3589 = vld [vmem:[#allocation10 + $0x3c8] sm:$0xff]
    %v3590 = vld [vmem:[#allocation10 + $0x3d0] sm:$0xff]
    %v3591 = vld [vmem:[#allocation10 + $0x3d8] sm:$0xff]
    %v3592 = vld [vmem:[#allocation10 + $0x3e0] sm:$0xff]
    %v3593 = vld [vmem:[#allocation10 + $0x3e8] sm:$0xff]
    %v3594 = vld [vmem:[#allocation10 + $0x3f0] sm:$0xff]
    %v3595 = vld [vmem:[#allocation10 + $0x3f8] sm:$0xff]
    %v3596 = vld [vmem:[#allocation10 + $0x400] sm:$0xff]
    %v3597 = vld [vmem:[#allocation10 + $0x408] sm:$0xff]
    %v3598 = vld [vmem:[#allocation10 + $0x410] sm:$0xff]
    %v3599 = vld [vmem:[#allocation10 + $0x418] sm:$0xff]
    %v3600 = vld [vmem:[#allocation10 + $0x420] sm:$0xff]
    %v3601 = vld [vmem:[#allocation10 + $0x428] sm:$0xff]
    %v3602 = vld [vmem:[#allocation10 + $0x430] sm:$0xff]
    %v3603 = vld [vmem:[#allocation10 + $0x438] sm:$0xff]
    %v3604 = vld [vmem:[#allocation10 + $0x440] sm:$0xff]
    %v3605 = vld [vmem:[#allocation10 + $0x448] sm:$0xff]
    %v3606 = vld [vmem:[#allocation10 + $0x450] sm:$0xff]
    %v3607 = vld [vmem:[#allocation10 + $0x458] sm:$0xff]
    %v3608 = vld [vmem:[#allocation10 + $0x460] sm:$0xff]
    %v3609 = vld [vmem:[#allocation10 + $0x468] sm:$0xff]
    %v3610 = vld [vmem:[#allocation10 + $0x470] sm:$0xff]
    %v3611 = vld [vmem:[#allocation10 + $0x478] sm:$0xff]
    %v3612 = vld [vmem:[#allocation10 + $0x480] sm:$0xff]
    %v3613 = vld [vmem:[#allocation10 + $0x488] sm:$0xff]
    %v3614 = vld [vmem:[#allocation10 + $0x490] sm:$0xff]
    %v3615 = vld [vmem:[#allocation10 + $0x498] sm:$0xff]
    %v3616 = vld [vmem:[#allocation10 + $0x4a0] sm:$0xff]
    %v3617 = vld [vmem:[#allocation10 + $0x4a8] sm:$0xff]
    %v3618 = vld [vmem:[#allocation10 + $0x4b0] sm:$0xff]
    %v3619 = vld [vmem:[#allocation10 + $0x4b8] sm:$0xff]
    %v3620 = vld [vmem:[#allocation10 + $0x4c0] sm:$0xff]
    %v3621 = vld [vmem:[#allocation10 + $0x4c8] sm:$0xff]
    %v3622 = vld [vmem:[#allocation10 + $0x4d0] sm:$0xff]
    %v3623 = vld [vmem:[#allocation10 + $0x4d8] sm:$0xff]
    %v3624 = vld [vmem:[#allocation10 + $0x4e0] sm:$0xff]
    %v3625 = vld [vmem:[#allocation10 + $0x4e8] sm:$0xff]
    %v3626 = vld [vmem:[#allocation10 + $0x4f0] sm:$0xff]
    %v3627 = vld [vmem:[#allocation10 + $0x4f8] sm:$0xff]
    %v3628 = vld [vmem:[#allocation10 + $0x500] sm:$0xff]
    %v3629 = vld [vmem:[#allocation10 + $0x508] sm:$0xff]
    %v3630 = vld [vmem:[#allocation10 + $0x510] sm:$0xff]
    %v3631 = vld [vmem:[#allocation10 + $0x518] sm:$0xff]
    %v3632 = vld [vmem:[#allocation10 + $0x520] sm:$0xff]
    %v3633 = vld [vmem:[#allocation10 + $0x528] sm:$0xff]
    %v3634 = vld [vmem:[#allocation10 + $0x530] sm:$0xff]
    %v3635 = vld [vmem:[#allocation10 + $0x538] sm:$0xff]
    %v3636 = vld [vmem:[#allocation10 + $0x540] sm:$0xff]
    %v3637 = vld [vmem:[#allocation10 + $0x548] sm:$0xff]
    %v3638 = vld [vmem:[#allocation10 + $0x550] sm:$0xff]
    %v3639 = vld [vmem:[#allocation10 + $0x558] sm:$0xff]
    %v3640 = vld [vmem:[#allocation10 + $0x560] sm:$0xff]
    %v3641 = vld [vmem:[#allocation10 + $0x568] sm:$0xff]
    %v3642 = vld [vmem:[#allocation10 + $0x570] sm:$0xff]
    %v3643 = vld [vmem:[#allocation10 + $0x578] sm:$0xff]
    %v3644 = vld [vmem:[#allocation10 + $0x580] sm:$0xff]
    %v3645 = vld [vmem:[#allocation10 + $0x588] sm:$0xff]
    %v3646 = vld [vmem:[#allocation10 + $0x590] sm:$0xff]
    %v3647 = vld [vmem:[#allocation10 + $0x598] sm:$0xff]
    %v3648 = vld [vmem:[#allocation10 + $0x5a0] sm:$0xff]
    %v3649 = vld [vmem:[#allocation10 + $0x5a8] sm:$0xff]
    %v3650 = vld [vmem:[#allocation10 + $0x5b0] sm:$0xff]
    %v3651 = vld [vmem:[#allocation10 + $0x5b8] sm:$0xff]
    %v3652 = vld [vmem:[#allocation10 + $0x5c0] sm:$0xff]
    %v3653 = vld [vmem:[#allocation10 + $0x5c8] sm:$0xff]
    %v3654 = vld [vmem:[#allocation10 + $0x5d0] sm:$0xff]
    %v3655 = vld [vmem:[#allocation10 + $0x5d8] sm:$0xff]
    %v3656 = vld [vmem:[#allocation10 + $0x5e0] sm:$0xff]
    %v3657 = vld [vmem:[#allocation10 + $0x5e8] sm:$0xff]
    %v3658 = vld [vmem:[#allocation10 + $0x5f0] sm:$0xff]
    %v3659 = vld [vmem:[#allocation10 + $0x5f8] sm:$0xff]
    %v3660 = vld [vmem:[#allocation10 + $0x600] sm:$0xff]
    %v3661 = vld [vmem:[#allocation10 + $0x608] sm:$0xff]
    %v3662 = vld [vmem:[#allocation10 + $0x610] sm:$0xff]
    %v3663 = vld [vmem:[#allocation10 + $0x618] sm:$0xff]
    %v3664 = vld [vmem:[#allocation10 + $0x620] sm:$0xff]
    %v3665 = vld [vmem:[#allocation10 + $0x628] sm:$0xff]
    %v3666 = vld [vmem:[#allocation10 + $0x630] sm:$0xff]
    %v3667 = vld [vmem:[#allocation10 + $0x638] sm:$0xff]
    %v3668 = vld [vmem:[#allocation10 + $0x640] sm:$0xff]
    %v3669 = vld [vmem:[#allocation10 + $0x648] sm:$0xff]
    %v3670 = vld [vmem:[#allocation10 + $0x650] sm:$0xff]
    %v3671 = vld [vmem:[#allocation10 + $0x658] sm:$0xff]
    %v3672 = vld [vmem:[#allocation10 + $0x660] sm:$0xff]
    %v3673 = vld [vmem:[#allocation10 + $0x668] sm:$0xff]
    %v3674 = vld [vmem:[#allocation10 + $0x670] sm:$0xff]
    %v3675 = vld [vmem:[#allocation10 + $0x678] sm:$0xff]
    %v3676 = vld [vmem:[#allocation10 + $0x680] sm:$0xff]
    %v3677 = vld [vmem:[#allocation10 + $0x688] sm:$0xff]
    %v3678 = vld [vmem:[#allocation10 + $0x690] sm:$0xff]
    %v3679 = vld [vmem:[#allocation10 + $0x698] sm:$0xff]
    %v3680 = vld [vmem:[#allocation10 + $0x6a0] sm:$0xff]
    %v3681 = vld [vmem:[#allocation10 + $0x6a8] sm:$0xff]
    %v3682 = vld [vmem:[#allocation10 + $0x6b0] sm:$0xff]
    %v3683 = vld [vmem:[#allocation10 + $0x6b8] sm:$0xff]
    %v3684 = vld [vmem:[#allocation10 + $0x6c0] sm:$0xff]
    %v3685 = vld [vmem:[#allocation10 + $0x6c8] sm:$0xff]
    %v3686 = vld [vmem:[#allocation10 + $0x6d0] sm:$0xff]
    %v3687 = vld [vmem:[#allocation10 + $0x6d8] sm:$0xff]
    %v3688 = vld [vmem:[#allocation10 + $0x6e0] sm:$0xff]
    %v3689 = vld [vmem:[#allocation10 + $0x6e8] sm:$0xff]
    %v3690 = vld [vmem:[#allocation10 + $0x6f0] sm:$0xff]
    %v3691 = vld [vmem:[#allocation10 + $0x6f8] sm:$0xff]
    %v3692 = vld [vmem:[#allocation10 + $0x700] sm:$0xff]
    %v3693 = vld [vmem:[#allocation10 + $0x708] sm:$0xff]
    %v3694 = vld [vmem:[#allocation10 + $0x710] sm:$0xff]
    %v3695 = vld [vmem:[#allocation10 + $0x718] sm:$0xff]
    %v3696 = vld [vmem:[#allocation10 + $0x720] sm:$0xff]
    %v3697 = vld [vmem:[#allocation10 + $0x728] sm:$0xff]
    %v3698 = vld [vmem:[#allocation10 + $0x730] sm:$0xff]
    %v3699 = vld [vmem:[#allocation10 + $0x738] sm:$0xff]
    %v3700 = vld [vmem:[#allocation10 + $0x740] sm:$0xff]
    %v3701 = vld [vmem:[#allocation10 + $0x748] sm:$0xff]
    %v3702 = vld [vmem:[#allocation10 + $0x750] sm:$0xff]
    %v3703 = vld [vmem:[#allocation10 + $0x758] sm:$0xff]
    %v3704 = vld [vmem:[#allocation10 + $0x760] sm:$0xff]
    %v3705 = vld [vmem:[#allocation10 + $0x768] sm:$0xff]
    %v3706 = vld [vmem:[#allocation10 + $0x770] sm:$0xff]
    %v3707 = vld [vmem:[#allocation10 + $0x778] sm:$0xff]
    %v3708 = vld [vmem:[#allocation10 + $0x780] sm:$0xff]
    %v3709 = vld [vmem:[#allocation10 + $0x788] sm:$0xff]
    %v3710 = vld [vmem:[#allocation10 + $0x790] sm:$0xff]
    %v3711 = vld [vmem:[#allocation10 + $0x798] sm:$0xff]
    %v3712 = vld [vmem:[#allocation10 + $0x7a0] sm:$0xff]
    %v3713 = vld [vmem:[#allocation10 + $0x7a8] sm:$0xff]
    %v3714 = vld [vmem:[#allocation10 + $0x7b0] sm:$0xff]
    %v3715 = vld [vmem:[#allocation10 + $0x7b8] sm:$0xff]
    %v3716 = vld [vmem:[#allocation10 + $0x7c0] sm:$0xff]
    %v3717 = vld [vmem:[#allocation10 + $0x7c8] sm:$0xff]
    %v3718 = vld [vmem:[#allocation10 + $0x7d0] sm:$0xff]
    %v3719 = vld [vmem:[#allocation10 + $0x7d8] sm:$0xff]
    %v3720 = vld [vmem:[#allocation10 + $0x7e0] sm:$0xff]
    %v3721 = vld [vmem:[#allocation10 + $0x7e8] sm:$0xff]
    %v3722 = vld [vmem:[#allocation10 + $0x7f0] sm:$0xff]
    %v3723 = vld [vmem:[#allocation10 + $0x7f8] sm:$0xff]
    %v3724 = vld [vmem:[%s12] sm:$0xff]
    %v3726 = vperm.slane %v3724, 0
    %v3727 = vperm.slane %v3724, 1
    %v3728 = vperm.slane %v3724, 2
    %v3729 = vperm.slane %v3724, 3
    %v3730 = vperm.slane %v3724, 4
    %v3731 = vperm.slane %v3724, 5
    %v3732 = vperm.slane %v3724, 6
    %v3733 = vperm.slane %v3724, 7
    %v3998 = vunpack.c.l.b16 %v3468
    %v3999 = vunpack.c.h.b16 %v3468
    %v4000 = vunpack.c.l.b16 %v3469
    %v4001 = vunpack.c.h.b16 %v3469
    %v4002 = vunpack.c.l.b16 %v3470
    %v4003 = vunpack.c.h.b16 %v3470
    %v4004 = vunpack.c.l.b16 %v3471
    %v4005 = vunpack.c.h.b16 %v3471
    %v4006 = vunpack.c.l.b16 %v3472
    %v4007 = vunpack.c.h.b16 %v3472
    %v4008 = vunpack.c.l.b16 %v3473
    %v4009 = vunpack.c.h.b16 %v3473
    %v4010 = vunpack.c.l.b16 %v3474
    %v4011 = vunpack.c.h.b16 %v3474
    %v4012 = vunpack.c.l.b16 %v3475
    %v4013 = vunpack.c.h.b16 %v3475
    %v4014 = vunpack.c.l.b16 %v3476
    %v4015 = vunpack.c.h.b16 %v3476
    %v4016 = vunpack.c.l.b16 %v3477
    %v4017 = vunpack.c.h.b16 %v3477
    %v4018 = vunpack.c.l.b16 %v3478
    %v4019 = vunpack.c.h.b16 %v3478
    %v4020 = vunpack.c.l.b16 %v3479
    %v4021 = vunpack.c.h.b16 %v3479
    %v4022 = vunpack.c.l.b16 %v3480
    %v4023 = vunpack.c.h.b16 %v3480
    %v4024 = vunpack.c.l.b16 %v3481
    %v4025 = vunpack.c.h.b16 %v3481
    %v4026 = vunpack.c.l.b16 %v3482
    %v4027 = vunpack.c.h.b16 %v3482
    %v4028 = vunpack.c.l.b16 %v3483
    %v4029 = vunpack.c.h.b16 %v3483
    %v4030 = vunpack.c.l.b16 %v3484
    %v4031 = vunpack.c.h.b16 %v3484
    %v4032 = vunpack.c.l.b16 %v3485
    %v4033 = vunpack.c.h.b16 %v3485
    %v4034 = vunpack.c.l.b16 %v3486
    %v4035 = vunpack.c.h.b16 %v3486
    %v4036 = vunpack.c.l.b16 %v3487
    %v4037 = vunpack.c.h.b16 %v3487
    %v4038 = vunpack.c.l.b16 %v3488
    %v4039 = vunpack.c.h.b16 %v3488
    %v4040 = vunpack.c.l.b16 %v3489
    %v4041 = vunpack.c.h.b16 %v3489
    %v4042 = vunpack.c.l.b16 %v3490
    %v4043 = vunpack.c.h.b16 %v3490
    %v4044 = vunpack.c.l.b16 %v3491
    %v4045 = vunpack.c.h.b16 %v3491
    %v4046 = vunpack.c.l.b16 %v3492
    %v4047 = vunpack.c.h.b16 %v3492
    %v4048 = vunpack.c.l.b16 %v3493
    %v4049 = vunpack.c.h.b16 %v3493
    %v4050 = vunpack.c.l.b16 %v3494
    %v4051 = vunpack.c.h.b16 %v3494
    %v4052 = vunpack.c.l.b16 %v3495
    %v4053 = vunpack.c.h.b16 %v3495
    %v4054 = vunpack.c.l.b16 %v3496
    %v4055 = vunpack.c.h.b16 %v3496
    %v4056 = vunpack.c.l.b16 %v3497
    %v4057 = vunpack.c.h.b16 %v3497
    %v4058 = vunpack.c.l.b16 %v3498
    %v4059 = vunpack.c.h.b16 %v3498
    %v4060 = vunpack.c.l.b16 %v3499
    %v4061 = vunpack.c.h.b16 %v3499
    %v4062 = vunpack.c.l.b16 %v3500
    %v4063 = vunpack.c.h.b16 %v3500
    %v4064 = vunpack.c.l.b16 %v3501
    %v4065 = vunpack.c.h.b16 %v3501
    %v4066 = vunpack.c.l.b16 %v3502
    %v4067 = vunpack.c.h.b16 %v3502
    %v4068 = vunpack.c.l.b16 %v3503
    %v4069 = vunpack.c.h.b16 %v3503
    %v4070 = vunpack.c.l.b16 %v3504
    %v4071 = vunpack.c.h.b16 %v3504
    %v4072 = vunpack.c.l.b16 %v3505
    %v4073 = vunpack.c.h.b16 %v3505
    %v4074 = vunpack.c.l.b16 %v3506
    %v4075 = vunpack.c.h.b16 %v3506
    %v4076 = vunpack.c.l.b16 %v3507
    %v4077 = vunpack.c.h.b16 %v3507
    %v4078 = vunpack.c.l.b16 %v3508
    %v4079 = vunpack.c.h.b16 %v3508
    %v4080 = vunpack.c.l.b16 %v3509
    %v4081 = vunpack.c.h.b16 %v3509
    %v4082 = vunpack.c.l.b16 %v3510
    %v4083 = vunpack.c.h.b16 %v3510
    %v4084 = vunpack.c.l.b16 %v3511
    %v4085 = vunpack.c.h.b16 %v3511
    %v4086 = vunpack.c.l.b16 %v3512
    %v4087 = vunpack.c.h.b16 %v3512
    %v4088 = vunpack.c.l.b16 %v3513
    %v4089 = vunpack.c.h.b16 %v3513
    %v4090 = vunpack.c.l.b16 %v3514
    %v4091 = vunpack.c.h.b16 %v3514
    %v4092 = vunpack.c.l.b16 %v3515
    %v4093 = vunpack.c.h.b16 %v3515
    %v4094 = vunpack.c.l.b16 %v3516
    %v4095 = vunpack.c.h.b16 %v3516
    %v4096 = vunpack.c.l.b16 %v3517
    %v4097 = vunpack.c.h.b16 %v3517
    %v4098 = vunpack.c.l.b16 %v3518
    %v4099 = vunpack.c.h.b16 %v3518
    %v4100 = vunpack.c.l.b16 %v3519
    %v4101 = vunpack.c.h.b16 %v3519
    %v4102 = vunpack.c.l.b16 %v3520
    %v4103 = vunpack.c.h.b16 %v3520
    %v4104 = vunpack.c.l.b16 %v3521
    %v4105 = vunpack.c.h.b16 %v3521
    %v4106 = vunpack.c.l.b16 %v3522
    %v4107 = vunpack.c.h.b16 %v3522
    %v4108 = vunpack.c.l.b16 %v3523
    %v4109 = vunpack.c.h.b16 %v3523
    %v4110 = vunpack.c.l.b16 %v3524
    %v4111 = vunpack.c.h.b16 %v3524
    %v4112 = vunpack.c.l.b16 %v3525
    %v4113 = vunpack.c.h.b16 %v3525
    %v4114 = vunpack.c.l.b16 %v3526
    %v4115 = vunpack.c.h.b16 %v3526
    %v4116 = vunpack.c.l.b16 %v3527
    %v4117 = vunpack.c.h.b16 %v3527
    %v4118 = vunpack.c.l.b16 %v3528
    %v4119 = vunpack.c.h.b16 %v3528
    %v4120 = vunpack.c.l.b16 %v3529
    %v4121 = vunpack.c.h.b16 %v3529
    %v4122 = vunpack.c.l.b16 %v3530
    %v4123 = vunpack.c.h.b16 %v3530
    %v4124 = vunpack.c.l.b16 %v3531
    %v4125 = vunpack.c.h.b16 %v3531
    %v4126 = vunpack.c.l.b16 %v3532
    %v4127 = vunpack.c.h.b16 %v3532
    %v4128 = vunpack.c.l.b16 %v3533
    %v4129 = vunpack.c.h.b16 %v3533
    %v4130 = vunpack.c.l.b16 %v3534
    %v4131 = vunpack.c.h.b16 %v3534
    %v4132 = vunpack.c.l.b16 %v3535
    %v4133 = vunpack.c.h.b16 %v3535
    %v4134 = vunpack.c.l.b16 %v3536
    %v4135 = vunpack.c.h.b16 %v3536
    %v4136 = vunpack.c.l.b16 %v3537
    %v4137 = vunpack.c.h.b16 %v3537
    %v4138 = vunpack.c.l.b16 %v3538
    %v4139 = vunpack.c.h.b16 %v3538
    %v4140 = vunpack.c.l.b16 %v3539
    %v4141 = vunpack.c.h.b16 %v3539
    %v4142 = vunpack.c.l.b16 %v3540
    %v4143 = vunpack.c.h.b16 %v3540
    %v4144 = vunpack.c.l.b16 %v3541
    %v4145 = vunpack.c.h.b16 %v3541
    %v4146 = vunpack.c.l.b16 %v3542
    %v4147 = vunpack.c.h.b16 %v3542
    %v4148 = vunpack.c.l.b16 %v3543
    %v4149 = vunpack.c.h.b16 %v3543
    %v4150 = vunpack.c.l.b16 %v3544
    %v4151 = vunpack.c.h.b16 %v3544
    %v4152 = vunpack.c.l.b16 %v3545
    %v4153 = vunpack.c.h.b16 %v3545
    %v4154 = vunpack.c.l.b16 %v3546
    %v4155 = vunpack.c.h.b16 %v3546
    %v4156 = vunpack.c.l.b16 %v3547
    %v4157 = vunpack.c.h.b16 %v3547
    %v4158 = vunpack.c.l.b16 %v3548
    %v4159 = vunpack.c.h.b16 %v3548
    %v4160 = vunpack.c.l.b16 %v3549
    %v4161 = vunpack.c.h.b16 %v3549
    %v4162 = vunpack.c.l.b16 %v3550
    %v4163 = vunpack.c.h.b16 %v3550
    %v4164 = vunpack.c.l.b16 %v3551
    %v4165 = vunpack.c.h.b16 %v3551
    %v4166 = vunpack.c.l.b16 %v3552
    %v4167 = vunpack.c.h.b16 %v3552
    %v4168 = vunpack.c.l.b16 %v3553
    %v4169 = vunpack.c.h.b16 %v3553
    %v4170 = vunpack.c.l.b16 %v3554
    %v4171 = vunpack.c.h.b16 %v3554
    %v4172 = vunpack.c.l.b16 %v3555
    %v4173 = vunpack.c.h.b16 %v3555
    %v4174 = vunpack.c.l.b16 %v3556
    %v4175 = vunpack.c.h.b16 %v3556
    %v4176 = vunpack.c.l.b16 %v3557
    %v4177 = vunpack.c.h.b16 %v3557
    %v4178 = vunpack.c.l.b16 %v3558
    %v4179 = vunpack.c.h.b16 %v3558
    %v4180 = vunpack.c.l.b16 %v3559
    %v4181 = vunpack.c.h.b16 %v3559
    %v4182 = vunpack.c.l.b16 %v3560
    %v4183 = vunpack.c.h.b16 %v3560
    %v4184 = vunpack.c.l.b16 %v3561
    %v4185 = vunpack.c.h.b16 %v3561
    %v4186 = vunpack.c.l.b16 %v3562
    %v4187 = vunpack.c.h.b16 %v3562
    %v4188 = vunpack.c.l.b16 %v3563
    %v4189 = vunpack.c.h.b16 %v3563
    %v4190 = vunpack.c.l.b16 %v3564
    %v4191 = vunpack.c.h.b16 %v3564
    %v4192 = vunpack.c.l.b16 %v3565
    %v4193 = vunpack.c.h.b16 %v3565
    %v4194 = vunpack.c.l.b16 %v3566
    %v4195 = vunpack.c.h.b16 %v3566
    %v4196 = vunpack.c.l.b16 %v3567
    %v4197 = vunpack.c.h.b16 %v3567
    %v4198 = vunpack.c.l.b16 %v3568
    %v4199 = vunpack.c.h.b16 %v3568
    %v4200 = vunpack.c.l.b16 %v3569
    %v4201 = vunpack.c.h.b16 %v3569
    %v4202 = vunpack.c.l.b16 %v3570
    %v4203 = vunpack.c.h.b16 %v3570
    %v4204 = vunpack.c.l.b16 %v3571
    %v4205 = vunpack.c.h.b16 %v3571
    %v4206 = vunpack.c.l.b16 %v3572
    %v4207 = vunpack.c.h.b16 %v3572
    %v4208 = vunpack.c.l.b16 %v3573
    %v4209 = vunpack.c.h.b16 %v3573
    %v4210 = vunpack.c.l.b16 %v3574
    %v4211 = vunpack.c.h.b16 %v3574
    %v4212 = vunpack.c.l.b16 %v3575
    %v4213 = vunpack.c.h.b16 %v3575
    %v4214 = vunpack.c.l.b16 %v3576
    %v4215 = vunpack.c.h.b16 %v3576
    %v4216 = vunpack.c.l.b16 %v3577
    %v4217 = vunpack.c.h.b16 %v3577
    %v4218 = vunpack.c.l.b16 %v3578
    %v4219 = vunpack.c.h.b16 %v3578
    %v4220 = vunpack.c.l.b16 %v3579
    %v4221 = vunpack.c.h.b16 %v3579
    %v4222 = vunpack.c.l.b16 %v3580
    %v4223 = vunpack.c.h.b16 %v3580
    %v4224 = vunpack.c.l.b16 %v3581
    %v4225 = vunpack.c.h.b16 %v3581
    %v4226 = vunpack.c.l.b16 %v3582
    %v4227 = vunpack.c.h.b16 %v3582
    %v4228 = vunpack.c.l.b16 %v3583
    %v4229 = vunpack.c.h.b16 %v3583
    %v4230 = vunpack.c.l.b16 %v3584
    %v4231 = vunpack.c.h.b16 %v3584
    %v4232 = vunpack.c.l.b16 %v3585
    %v4233 = vunpack.c.h.b16 %v3585
    %v4234 = vunpack.c.l.b16 %v3586
    %v4235 = vunpack.c.h.b16 %v3586
    %v4236 = vunpack.c.l.b16 %v3587
    %v4237 = vunpack.c.h.b16 %v3587
    %v4238 = vunpack.c.l.b16 %v3588
    %v4239 = vunpack.c.h.b16 %v3588
    %v4240 = vunpack.c.l.b16 %v3589
    %v4241 = vunpack.c.h.b16 %v3589
    %v4242 = vunpack.c.l.b16 %v3590
    %v4243 = vunpack.c.h.b16 %v3590
    %v4244 = vunpack.c.l.b16 %v3591
    %v4245 = vunpack.c.h.b16 %v3591
    %v4246 = vunpack.c.l.b16 %v3592
    %v4247 = vunpack.c.h.b16 %v3592
    %v4248 = vunpack.c.l.b16 %v3593
    %v4249 = vunpack.c.h.b16 %v3593
    %v4250 = vunpack.c.l.b16 %v3594
    %v4251 = vunpack.c.h.b16 %v3594
    %v4252 = vunpack.c.l.b16 %v3595
    %v4253 = vunpack.c.h.b16 %v3595
    %v4254 = vunpack.c.l.b16 %v3596
    %v4255 = vunpack.c.h.b16 %v3596
    %v4256 = vunpack.c.l.b16 %v3597
    %v4257 = vunpack.c.h.b16 %v3597
    %v4258 = vunpack.c.l.b16 %v3598
    %v4259 = vunpack.c.h.b16 %v3598
    %v4260 = vunpack.c.l.b16 %v3599
    %v4261 = vunpack.c.h.b16 %v3599
    %v4262 = vunpack.c.l.b16 %v3600
    %v4263 = vunpack.c.h.b16 %v3600
    %v4264 = vunpack.c.l.b16 %v3601
    %v4265 = vunpack.c.h.b16 %v3601
    %v4266 = vunpack.c.l.b16 %v3602
    %v4267 = vunpack.c.h.b16 %v3602
    %v4268 = vunpack.c.l.b16 %v3603
    %v4269 = vunpack.c.h.b16 %v3603
    %v4270 = vunpack.c.l.b16 %v3604
    %v4271 = vunpack.c.h.b16 %v3604
    %v4272 = vunpack.c.l.b16 %v3605
    %v4273 = vunpack.c.h.b16 %v3605
    %v4274 = vunpack.c.l.b16 %v3606
    %v4275 = vunpack.c.h.b16 %v3606
    %v4276 = vunpack.c.l.b16 %v3607
    %v4277 = vunpack.c.h.b16 %v3607
    %v4278 = vunpack.c.l.b16 %v3608
    %v4279 = vunpack.c.h.b16 %v3608
    %v4280 = vunpack.c.l.b16 %v3609
    %v4281 = vunpack.c.h.b16 %v3609
    %v4282 = vunpack.c.l.b16 %v3610
    %v4283 = vunpack.c.h.b16 %v3610
    %v4284 = vunpack.c.l.b16 %v3611
    %v4285 = vunpack.c.h.b16 %v3611
    %v4286 = vunpack.c.l.b16 %v3612
    %v4287 = vunpack.c.h.b16 %v3612
    %v4288 = vunpack.c.l.b16 %v3613
    %v4289 = vunpack.c.h.b16 %v3613
    %v4290 = vunpack.c.l.b16 %v3614
    %v4291 = vunpack.c.h.b16 %v3614
    %v4292 = vunpack.c.l.b16 %v3615
    %v4293 = vunpack.c.h.b16 %v3615
    %v4294 = vunpack.c.l.b16 %v3616
    %v4295 = vunpack.c.h.b16 %v3616
    %v4296 = vunpack.c.l.b16 %v3617
    %v4297 = vunpack.c.h.b16 %v3617
    %v4298 = vunpack.c.l.b16 %v3618
    %v4299 = vunpack.c.h.b16 %v3618
    %v4300 = vunpack.c.l.b16 %v3619
    %v4301 = vunpack.c.h.b16 %v3619
    %v4302 = vunpack.c.l.b16 %v3620
    %v4303 = vunpack.c.h.b16 %v3620
    %v4304 = vunpack.c.l.b16 %v3621
    %v4305 = vunpack.c.h.b16 %v3621
    %v4306 = vunpack.c.l.b16 %v3622
    %v4307 = vunpack.c.h.b16 %v3622
    %v4308 = vunpack.c.l.b16 %v3623
    %v4309 = vunpack.c.h.b16 %v3623
    %v4310 = vunpack.c.l.b16 %v3624
    %v4311 = vunpack.c.h.b16 %v3624
    %v4312 = vunpack.c.l.b16 %v3625
    %v4313 = vunpack.c.h.b16 %v3625
    %v4314 = vunpack.c.l.b16 %v3626
    %v4315 = vunpack.c.h.b16 %v3626
    %v4316 = vunpack.c.l.b16 %v3627
    %v4317 = vunpack.c.h.b16 %v3627
    %v4318 = vunpack.c.l.b16 %v3628
    %v4319 = vunpack.c.h.b16 %v3628
    %v4320 = vunpack.c.l.b16 %v3629
    %v4321 = vunpack.c.h.b16 %v3629
    %v4322 = vunpack.c.l.b16 %v3630
    %v4323 = vunpack.c.h.b16 %v3630
    %v4324 = vunpack.c.l.b16 %v3631
    %v4325 = vunpack.c.h.b16 %v3631
    %v4326 = vunpack.c.l.b16 %v3632
    %v4327 = vunpack.c.h.b16 %v3632
    %v4328 = vunpack.c.l.b16 %v3633
    %v4329 = vunpack.c.h.b16 %v3633
    %v4330 = vunpack.c.l.b16 %v3634
    %v4331 = vunpack.c.h.b16 %v3634
    %v4332 = vunpack.c.l.b16 %v3635
    %v4333 = vunpack.c.h.b16 %v3635
    %v4334 = vunpack.c.l.b16 %v3636
    %v4335 = vunpack.c.h.b16 %v3636
    %v4336 = vunpack.c.l.b16 %v3637
    %v4337 = vunpack.c.h.b16 %v3637
    %v4338 = vunpack.c.l.b16 %v3638
    %v4339 = vunpack.c.h.b16 %v3638
    %v4340 = vunpack.c.l.b16 %v3639
    %v4341 = vunpack.c.h.b16 %v3639
    %v4342 = vunpack.c.l.b16 %v3640
    %v4343 = vunpack.c.h.b16 %v3640
    %v4344 = vunpack.c.l.b16 %v3641
    %v4345 = vunpack.c.h.b16 %v3641
    %v4346 = vunpack.c.l.b16 %v3642
    %v4347 = vunpack.c.h.b16 %v3642
    %v4348 = vunpack.c.l.b16 %v3643
    %v4349 = vunpack.c.h.b16 %v3643
    %v4350 = vunpack.c.l.b16 %v3644
    %v4351 = vunpack.c.h.b16 %v3644
    %v4352 = vunpack.c.l.b16 %v3645
    %v4353 = vunpack.c.h.b16 %v3645
    %v4354 = vunpack.c.l.b16 %v3646
    %v4355 = vunpack.c.h.b16 %v3646
    %v4356 = vunpack.c.l.b16 %v3647
    %v4357 = vunpack.c.h.b16 %v3647
    %v4358 = vunpack.c.l.b16 %v3648
    %v4359 = vunpack.c.h.b16 %v3648
    %v4360 = vunpack.c.l.b16 %v3649
    %v4361 = vunpack.c.h.b16 %v3649
    %v4362 = vunpack.c.l.b16 %v3650
    %v4363 = vunpack.c.h.b16 %v3650
    %v4364 = vunpack.c.l.b16 %v3651
    %v4365 = vunpack.c.h.b16 %v3651
    %v4366 = vunpack.c.l.b16 %v3652
    %v4367 = vunpack.c.h.b16 %v3652
    %v4368 = vunpack.c.l.b16 %v3653
    %v4369 = vunpack.c.h.b16 %v3653
    %v4370 = vunpack.c.l.b16 %v3654
    %v4371 = vunpack.c.h.b16 %v3654
    %v4372 = vunpack.c.l.b16 %v3655
    %v4373 = vunpack.c.h.b16 %v3655
    %v4374 = vunpack.c.l.b16 %v3656
    %v4375 = vunpack.c.h.b16 %v3656
    %v4376 = vunpack.c.l.b16 %v3657
    %v4377 = vunpack.c.h.b16 %v3657
    %v4378 = vunpack.c.l.b16 %v3658
    %v4379 = vunpack.c.h.b16 %v3658
    %v4380 = vunpack.c.l.b16 %v3659
    %v4381 = vunpack.c.h.b16 %v3659
    %v4382 = vunpack.c.l.b16 %v3660
    %v4383 = vunpack.c.h.b16 %v3660
    %v4384 = vunpack.c.l.b16 %v3661
    %v4385 = vunpack.c.h.b16 %v3661
    %v4386 = vunpack.c.l.b16 %v3662
    %v4387 = vunpack.c.h.b16 %v3662
    %v4388 = vunpack.c.l.b16 %v3663
    %v4389 = vunpack.c.h.b16 %v3663
    %v4390 = vunpack.c.l.b16 %v3664
    %v4391 = vunpack.c.h.b16 %v3664
    %v4392 = vunpack.c.l.b16 %v3665
    %v4393 = vunpack.c.h.b16 %v3665
    %v4394 = vunpack.c.l.b16 %v3666
    %v4395 = vunpack.c.h.b16 %v3666
    %v4396 = vunpack.c.l.b16 %v3667
    %v4397 = vunpack.c.h.b16 %v3667
    %v4398 = vunpack.c.l.b16 %v3668
    %v4399 = vunpack.c.h.b16 %v3668
    %v4400 = vunpack.c.l.b16 %v3669
    %v4401 = vunpack.c.h.b16 %v3669
    %v4402 = vunpack.c.l.b16 %v3670
    %v4403 = vunpack.c.h.b16 %v3670
    %v4404 = vunpack.c.l.b16 %v3671
    %v4405 = vunpack.c.h.b16 %v3671
    %v4406 = vunpack.c.l.b16 %v3672
    %v4407 = vunpack.c.h.b16 %v3672
    %v4408 = vunpack.c.l.b16 %v3673
    %v4409 = vunpack.c.h.b16 %v3673
    %v4410 = vunpack.c.l.b16 %v3674
    %v4411 = vunpack.c.h.b16 %v3674
    %v4412 = vunpack.c.l.b16 %v3675
    %v4413 = vunpack.c.h.b16 %v3675
    %v4414 = vunpack.c.l.b16 %v3676
    %v4415 = vunpack.c.h.b16 %v3676
    %v4416 = vunpack.c.l.b16 %v3677
    %v4417 = vunpack.c.h.b16 %v3677
    %v4418 = vunpack.c.l.b16 %v3678
    %v4419 = vunpack.c.h.b16 %v3678
    %v4420 = vunpack.c.l.b16 %v3679
    %v4421 = vunpack.c.h.b16 %v3679
    %v4422 = vunpack.c.l.b16 %v3680
    %v4423 = vunpack.c.h.b16 %v3680
    %v4424 = vunpack.c.l.b16 %v3681
    %v4425 = vunpack.c.h.b16 %v3681
    %v4426 = vunpack.c.l.b16 %v3682
    %v4427 = vunpack.c.h.b16 %v3682
    %v4428 = vunpack.c.l.b16 %v3683
    %v4429 = vunpack.c.h.b16 %v3683
    %v4430 = vunpack.c.l.b16 %v3684
    %v4431 = vunpack.c.h.b16 %v3684
    %v4432 = vunpack.c.l.b16 %v3685
    %v4433 = vunpack.c.h.b16 %v3685
    %v4434 = vunpack.c.l.b16 %v3686
    %v4435 = vunpack.c.h.b16 %v3686
    %v4436 = vunpack.c.l.b16 %v3687
    %v4437 = vunpack.c.h.b16 %v3687
    %v4438 = vunpack.c.l.b16 %v3688
    %v4439 = vunpack.c.h.b16 %v3688
    %v4440 = vunpack.c.l.b16 %v3689
    %v4441 = vunpack.c.h.b16 %v3689
    %v4442 = vunpack.c.l.b16 %v3690
    %v4443 = vunpack.c.h.b16 %v3690
    %v4444 = vunpack.c.l.b16 %v3691
    %v4445 = vunpack.c.h.b16 %v3691
    %v4446 = vunpack.c.l.b16 %v3692
    %v4447 = vunpack.c.h.b16 %v3692
    %v4448 = vunpack.c.l.b16 %v3693
    %v4449 = vunpack.c.h.b16 %v3693
    %v4450 = vunpack.c.l.b16 %v3694
    %v4451 = vunpack.c.h.b16 %v3694
    %v4452 = vunpack.c.l.b16 %v3695
    %v4453 = vunpack.c.h.b16 %v3695
    %v4454 = vunpack.c.l.b16 %v3696
    %v4455 = vunpack.c.h.b16 %v3696
    %v4456 = vunpack.c.l.b16 %v3697
    %v4457 = vunpack.c.h.b16 %v3697
    %v4458 = vunpack.c.l.b16 %v3698
    %v4459 = vunpack.c.h.b16 %v3698
    %v4460 = vunpack.c.l.b16 %v3699
    %v4461 = vunpack.c.h.b16 %v3699
    %v4462 = vunpack.c.l.b16 %v3700
    %v4463 = vunpack.c.h.b16 %v3700
    %v4464 = vunpack.c.l.b16 %v3701
    %v4465 = vunpack.c.h.b16 %v3701
    %v4466 = vunpack.c.l.b16 %v3702
    %v4467 = vunpack.c.h.b16 %v3702
    %v4468 = vunpack.c.l.b16 %v3703
    %v4469 = vunpack.c.h.b16 %v3703
    %v4470 = vunpack.c.l.b16 %v3704
    %v4471 = vunpack.c.h.b16 %v3704
    %v4472 = vunpack.c.l.b16 %v3705
    %v4473 = vunpack.c.h.b16 %v3705
    %v4474 = vunpack.c.l.b16 %v3706
    %v4475 = vunpack.c.h.b16 %v3706
    %v4476 = vunpack.c.l.b16 %v3707
    %v4477 = vunpack.c.h.b16 %v3707
    %v4478 = vunpack.c.l.b16 %v3708
    %v4479 = vunpack.c.h.b16 %v3708
    %v4480 = vunpack.c.l.b16 %v3709
    %v4481 = vunpack.c.h.b16 %v3709
    %v4482 = vunpack.c.l.b16 %v3710
    %v4483 = vunpack.c.h.b16 %v3710
    %v4484 = vunpack.c.l.b16 %v3711
    %v4485 = vunpack.c.h.b16 %v3711
    %v4486 = vunpack.c.l.b16 %v3712
    %v4487 = vunpack.c.h.b16 %v3712
    %v4488 = vunpack.c.l.b16 %v3713
    %v4489 = vunpack.c.h.b16 %v3713
    %v4490 = vunpack.c.l.b16 %v3714
    %v4491 = vunpack.c.h.b16 %v3714
    %v4492 = vunpack.c.l.b16 %v3715
    %v4493 = vunpack.c.h.b16 %v3715
    %v4494 = vunpack.c.l.b16 %v3716
    %v4495 = vunpack.c.h.b16 %v3716
    %v4496 = vunpack.c.l.b16 %v3717
    %v4497 = vunpack.c.h.b16 %v3717
    %v4498 = vunpack.c.l.b16 %v3718
    %v4499 = vunpack.c.h.b16 %v3718
    %v4500 = vunpack.c.l.b16 %v3719
    %v4501 = vunpack.c.h.b16 %v3719
    %v4502 = vunpack.c.l.b16 %v3720
    %v4503 = vunpack.c.h.b16 %v3720
    %v4504 = vunpack.c.l.b16 %v3721
    %v4505 = vunpack.c.h.b16 %v3721
    %v4506 = vunpack.c.l.b16 %v3722
    %v4507 = vunpack.c.h.b16 %v3722
    %v4508 = vunpack.c.l.b16 %v3723
    %v4509 = vunpack.c.h.b16 %v3723
    %v4510 = vpack.c.b16 %v4006, %v3998
    %v4511 = vpack.c.b16 %v4007, %v3999
    %v4512 = vpack.c.b16 %v4008, %v4000
    %v4513 = vpack.c.b16 %v4009, %v4001
    %v4514 = vpack.c.b16 %v4010, %v4002
    %v4515 = vpack.c.b16 %v4011, %v4003
    %v4516 = vpack.c.b16 %v4012, %v4004
    %v4517 = vpack.c.b16 %v4013, %v4005
    %v4518 = vpack.c.b16 %v4022, %v4014
    %v4519 = vpack.c.b16 %v4023, %v4015
    %v4520 = vpack.c.b16 %v4024, %v4016
    %v4521 = vpack.c.b16 %v4025, %v4017
    %v4522 = vpack.c.b16 %v4026, %v4018
    %v4523 = vpack.c.b16 %v4027, %v4019
    %v4524 = vpack.c.b16 %v4028, %v4020
    %v4525 = vpack.c.b16 %v4029, %v4021
    %v4526 = vpack.c.b16 %v4038, %v4030
    %v4527 = vpack.c.b16 %v4039, %v4031
    %v4528 = vpack.c.b16 %v4040, %v4032
    %v4529 = vpack.c.b16 %v4041, %v4033
    %v4530 = vpack.c.b16 %v4042, %v4034
    %v4531 = vpack.c.b16 %v4043, %v4035
    %v4532 = vpack.c.b16 %v4044, %v4036
    %v4533 = vpack.c.b16 %v4045, %v4037
    %v4534 = vpack.c.b16 %v4054, %v4046
    %v4535 = vpack.c.b16 %v4055, %v4047
    %v4536 = vpack.c.b16 %v4056, %v4048
    %v4537 = vpack.c.b16 %v4057, %v4049
    %v4538 = vpack.c.b16 %v4058, %v4050
    %v4539 = vpack.c.b16 %v4059, %v4051
    %v4540 = vpack.c.b16 %v4060, %v4052
    %v4541 = vpack.c.b16 %v4061, %v4053
    %v4542 = vpack.c.b16 %v4070, %v4062
    %v4543 = vpack.c.b16 %v4071, %v4063
    %v4544 = vpack.c.b16 %v4072, %v4064
    %v4545 = vpack.c.b16 %v4073, %v4065
    %v4546 = vpack.c.b16 %v4074, %v4066
    %v4547 = vpack.c.b16 %v4075, %v4067
    %v4548 = vpack.c.b16 %v4076, %v4068
    %v4549 = vpack.c.b16 %v4077, %v4069
    %v4550 = vpack.c.b16 %v4086, %v4078
    %v4551 = vpack.c.b16 %v4087, %v4079
    %v4552 = vpack.c.b16 %v4088, %v4080
    %v4553 = vpack.c.b16 %v4089, %v4081
    %v4554 = vpack.c.b16 %v4090, %v4082
    %v4555 = vpack.c.b16 %v4091, %v4083
    %v4556 = vpack.c.b16 %v4092, %v4084
    %v4557 = vpack.c.b16 %v4093, %v4085
    %v4558 = vpack.c.b16 %v4102, %v4094
    %v4559 = vpack.c.b16 %v4103, %v4095
    %v4560 = vpack.c.b16 %v4104, %v4096
    %v4561 = vpack.c.b16 %v4105, %v4097
    %v4562 = vpack.c.b16 %v4106, %v4098
    %v4563 = vpack.c.b16 %v4107, %v4099
    %v4564 = vpack.c.b16 %v4108, %v4100
    %v4565 = vpack.c.b16 %v4109, %v4101
    %v4566 = vpack.c.b16 %v4118, %v4110
    %v4567 = vpack.c.b16 %v4119, %v4111
    %v4568 = vpack.c.b16 %v4120, %v4112
    %v4569 = vpack.c.b16 %v4121, %v4113
    %v4570 = vpack.c.b16 %v4122, %v4114
    %v4571 = vpack.c.b16 %v4123, %v4115
    %v4572 = vpack.c.b16 %v4124, %v4116
    %v4573 = vpack.c.b16 %v4125, %v4117
    %v4574 = vpack.c.b16 %v4134, %v4126
    %v4575 = vpack.c.b16 %v4135, %v4127
    %v4576 = vpack.c.b16 %v4136, %v4128
    %v4577 = vpack.c.b16 %v4137, %v4129
    %v4578 = vpack.c.b16 %v4138, %v4130
    %v4579 = vpack.c.b16 %v4139, %v4131
    %v4580 = vpack.c.b16 %v4140, %v4132
    %v4581 = vpack.c.b16 %v4141, %v4133
    %v4582 = vpack.c.b16 %v4150, %v4142
    %v4583 = vpack.c.b16 %v4151, %v4143
    %v4584 = vpack.c.b16 %v4152, %v4144
    %v4585 = vpack.c.b16 %v4153, %v4145
    %v4586 = vpack.c.b16 %v4154, %v4146
    %v4587 = vpack.c.b16 %v4155, %v4147
    %v4588 = vpack.c.b16 %v4156, %v4148
    %v4589 = vpack.c.b16 %v4157, %v4149
    %v4590 = vpack.c.b16 %v4166, %v4158
    %v4591 = vpack.c.b16 %v4167, %v4159
    %v4592 = vpack.c.b16 %v4168, %v4160
    %v4593 = vpack.c.b16 %v4169, %v4161
    %v4594 = vpack.c.b16 %v4170, %v4162
    %v4595 = vpack.c.b16 %v4171, %v4163
    %v4596 = vpack.c.b16 %v4172, %v4164
    %v4597 = vpack.c.b16 %v4173, %v4165
    %v4598 = vpack.c.b16 %v4182, %v4174
    %v4599 = vpack.c.b16 %v4183, %v4175
    %v4600 = vpack.c.b16 %v4184, %v4176
    %v4601 = vpack.c.b16 %v4185, %v4177
    %v4602 = vpack.c.b16 %v4186, %v4178
    %v4603 = vpack.c.b16 %v4187, %v4179
    %v4604 = vpack.c.b16 %v4188, %v4180
    %v4605 = vpack.c.b16 %v4189, %v4181
    %v4606 = vpack.c.b16 %v4198, %v4190
    %v4607 = vpack.c.b16 %v4199, %v4191
    %v4608 = vpack.c.b16 %v4200, %v4192
    %v4609 = vpack.c.b16 %v4201, %v4193
    %v4610 = vpack.c.b16 %v4202, %v4194
    %v4611 = vpack.c.b16 %v4203, %v4195
    %v4612 = vpack.c.b16 %v4204, %v4196
    %v4613 = vpack.c.b16 %v4205, %v4197
    %v4614 = vpack.c.b16 %v4214, %v4206
    %v4615 = vpack.c.b16 %v4215, %v4207
    %v4616 = vpack.c.b16 %v4216, %v4208
    %v4617 = vpack.c.b16 %v4217, %v4209
    %v4618 = vpack.c.b16 %v4218, %v4210
    %v4619 = vpack.c.b16 %v4219, %v4211
    %v4620 = vpack.c.b16 %v4220, %v4212
    %v4621 = vpack.c.b16 %v4221, %v4213
    %v4622 = vpack.c.b16 %v4230, %v4222
    %v4623 = vpack.c.b16 %v4231, %v4223
    %v4624 = vpack.c.b16 %v4232, %v4224
    %v4625 = vpack.c.b16 %v4233, %v4225
    %v4626 = vpack.c.b16 %v4234, %v4226
    %v4627 = vpack.c.b16 %v4235, %v4227
    %v4628 = vpack.c.b16 %v4236, %v4228
    %v4629 = vpack.c.b16 %v4237, %v4229
    %v4630 = vpack.c.b16 %v4246, %v4238
    %v4631 = vpack.c.b16 %v4247, %v4239
    %v4632 = vpack.c.b16 %v4248, %v4240
    %v4633 = vpack.c.b16 %v4249, %v4241
    %v4634 = vpack.c.b16 %v4250, %v4242
    %v4635 = vpack.c.b16 %v4251, %v4243
    %v4636 = vpack.c.b16 %v4252, %v4244
    %v4637 = vpack.c.b16 %v4253, %v4245
    %v4638 = vpack.c.b16 %v4262, %v4254
    %v4639 = vpack.c.b16 %v4263, %v4255
    %v4640 = vpack.c.b16 %v4264, %v4256
    %v4641 = vpack.c.b16 %v4265, %v4257
    %v4642 = vpack.c.b16 %v4266, %v4258
    %v4643 = vpack.c.b16 %v4267, %v4259
    %v4644 = vpack.c.b16 %v4268, %v4260
    %v4645 = vpack.c.b16 %v4269, %v4261
    %v4646 = vpack.c.b16 %v4278, %v4270
    %v4647 = vpack.c.b16 %v4279, %v4271
    %v4648 = vpack.c.b16 %v4280, %v4272
    %v4649 = vpack.c.b16 %v4281, %v4273
    %v4650 = vpack.c.b16 %v4282, %v4274
    %v4651 = vpack.c.b16 %v4283, %v4275
    %v4652 = vpack.c.b16 %v4284, %v4276
    %v4653 = vpack.c.b16 %v4285, %v4277
    %v4654 = vpack.c.b16 %v4294, %v4286
    %v4655 = vpack.c.b16 %v4295, %v4287
    %v4656 = vpack.c.b16 %v4296, %v4288
    %v4657 = vpack.c.b16 %v4297, %v4289
    %v4658 = vpack.c.b16 %v4298, %v4290
    %v4659 = vpack.c.b16 %v4299, %v4291
    %v4660 = vpack.c.b16 %v4300, %v4292
    %v4661 = vpack.c.b16 %v4301, %v4293
    %v4662 = vpack.c.b16 %v4310, %v4302
    %v4663 = vpack.c.b16 %v4311, %v4303
    %v4664 = vpack.c.b16 %v4312, %v4304
    %v4665 = vpack.c.b16 %v4313, %v4305
    %v4666 = vpack.c.b16 %v4314, %v4306
    %v4667 = vpack.c.b16 %v4315, %v4307
    %v4668 = vpack.c.b16 %v4316, %v4308
    %v4669 = vpack.c.b16 %v4317, %v4309
    %v4670 = vpack.c.b16 %v4326, %v4318
    %v4671 = vpack.c.b16 %v4327, %v4319
    %v4672 = vpack.c.b16 %v4328, %v4320
    %v4673 = vpack.c.b16 %v4329, %v4321
    %v4674 = vpack.c.b16 %v4330, %v4322
    %v4675 = vpack.c.b16 %v4331, %v4323
    %v4676 = vpack.c.b16 %v4332, %v4324
    %v4677 = vpack.c.b16 %v4333, %v4325
    %v4678 = vpack.c.b16 %v4342, %v4334
    %v4679 = vpack.c.b16 %v4343, %v4335
    %v4680 = vpack.c.b16 %v4344, %v4336
    %v4681 = vpack.c.b16 %v4345, %v4337
    %v4682 = vpack.c.b16 %v4346, %v4338
    %v4683 = vpack.c.b16 %v4347, %v4339
    %v4684 = vpack.c.b16 %v4348, %v4340
    %v4685 = vpack.c.b16 %v4349, %v4341
    %v4686 = vpack.c.b16 %v4358, %v4350
    %v4687 = vpack.c.b16 %v4359, %v4351
    %v4688 = vpack.c.b16 %v4360, %v4352
    %v4689 = vpack.c.b16 %v4361, %v4353
    %v4690 = vpack.c.b16 %v4362, %v4354
    %v4691 = vpack.c.b16 %v4363, %v4355
    %v4692 = vpack.c.b16 %v4364, %v4356
    %v4693 = vpack.c.b16 %v4365, %v4357
    %v4694 = vpack.c.b16 %v4374, %v4366
    %v4695 = vpack.c.b16 %v4375, %v4367
    %v4696 = vpack.c.b16 %v4376, %v4368
    %v4697 = vpack.c.b16 %v4377, %v4369
    %v4698 = vpack.c.b16 %v4378, %v4370
    %v4699 = vpack.c.b16 %v4379, %v4371
    %v4700 = vpack.c.b16 %v4380, %v4372
    %v4701 = vpack.c.b16 %v4381, %v4373
    %v4702 = vpack.c.b16 %v4390, %v4382
    %v4703 = vpack.c.b16 %v4391, %v4383
    %v4704 = vpack.c.b16 %v4392, %v4384
    %v4705 = vpack.c.b16 %v4393, %v4385
    %v4706 = vpack.c.b16 %v4394, %v4386
    %v4707 = vpack.c.b16 %v4395, %v4387
    %v4708 = vpack.c.b16 %v4396, %v4388
    %v4709 = vpack.c.b16 %v4397, %v4389
    %v4710 = vpack.c.b16 %v4406, %v4398
    %v4711 = vpack.c.b16 %v4407, %v4399
    %v4712 = vpack.c.b16 %v4408, %v4400
    %v4713 = vpack.c.b16 %v4409, %v4401
    %v4714 = vpack.c.b16 %v4410, %v4402
    %v4715 = vpack.c.b16 %v4411, %v4403
    %v4716 = vpack.c.b16 %v4412, %v4404
    %v4717 = vpack.c.b16 %v4413, %v4405
    %v4718 = vpack.c.b16 %v4422, %v4414
    %v4719 = vpack.c.b16 %v4423, %v4415
    %v4720 = vpack.c.b16 %v4424, %v4416
    %v4721 = vpack.c.b16 %v4425, %v4417
    %v4722 = vpack.c.b16 %v4426, %v4418
    %v4723 = vpack.c.b16 %v4427, %v4419
    %v4724 = vpack.c.b16 %v4428, %v4420
    %v4725 = vpack.c.b16 %v4429, %v4421
    %v4726 = vpack.c.b16 %v4438, %v4430
    %v4727 = vpack.c.b16 %v4439, %v4431
    %v4728 = vpack.c.b16 %v4440, %v4432
    %v4729 = vpack.c.b16 %v4441, %v4433
    %v4730 = vpack.c.b16 %v4442, %v4434
    %v4731 = vpack.c.b16 %v4443, %v4435
    %v4732 = vpack.c.b16 %v4444, %v4436
    %v4733 = vpack.c.b16 %v4445, %v4437
    %v4734 = vpack.c.b16 %v4454, %v4446
    %v4735 = vpack.c.b16 %v4455, %v4447
    %v4736 = vpack.c.b16 %v4456, %v4448
    %v4737 = vpack.c.b16 %v4457, %v4449
    %v4738 = vpack.c.b16 %v4458, %v4450
    %v4739 = vpack.c.b16 %v4459, %v4451
    %v4740 = vpack.c.b16 %v4460, %v4452
    %v4741 = vpack.c.b16 %v4461, %v4453
    %v4742 = vpack.c.b16 %v4470, %v4462
    %v4743 = vpack.c.b16 %v4471, %v4463
    %v4744 = vpack.c.b16 %v4472, %v4464
    %v4745 = vpack.c.b16 %v4473, %v4465
    %v4746 = vpack.c.b16 %v4474, %v4466
    %v4747 = vpack.c.b16 %v4475, %v4467
    %v4748 = vpack.c.b16 %v4476, %v4468
    %v4749 = vpack.c.b16 %v4477, %v4469
    %v4750 = vpack.c.b16 %v4486, %v4478
    %v4751 = vpack.c.b16 %v4487, %v4479
    %v4752 = vpack.c.b16 %v4488, %v4480
    %v4753 = vpack.c.b16 %v4489, %v4481
    %v4754 = vpack.c.b16 %v4490, %v4482
    %v4755 = vpack.c.b16 %v4491, %v4483
    %v4756 = vpack.c.b16 %v4492, %v4484
    %v4757 = vpack.c.b16 %v4493, %v4485
    %v4758 = vpack.c.b16 %v4502, %v4494
    %v4759 = vpack.c.b16 %v4503, %v4495
    %v4760 = vpack.c.b16 %v4504, %v4496
    %v4761 = vpack.c.b16 %v4505, %v4497
    %v4762 = vpack.c.b16 %v4506, %v4498
    %v4763 = vpack.c.b16 %v4507, %v4499
    %v4764 = vpack.c.b16 %v4508, %v4500
    %v4765 = vpack.c.b16 %v4509, %v4501
    %5022 = vmatpush.bf16.msra.mxu0 %v4566
    %5023 = vmatpush.bf16.msra.mxu0 %v4558
    %5024 = vmatpush.bf16.msra.mxu0 %v4550
    %5025 = vmatpush.bf16.msra.mxu0 %v4542
    %5026 = vmatpush.bf16.msra.mxu0 %v4534
    %5027 = vmatpush.bf16.msra.mxu0 %v4526
    %5028 = vmatpush.bf16.msra.mxu0 %v4518
    %5029 = vmatpush.bf16.msra.mxu0 %v4510
    %5030 = vmatmul.bf16.gmra.mxu0 %v3464
    %v5031 = vpop.f32.mrf.mxu0
    %v5032 = vadd.f32 %v3726, %v5031
    %v5033 = vpop.f32.mrf.mxu0
    %5034 = vdwg.mxu0
    %5035 = vmatpush.bf16.msra.mxu0 %v4630
    %5036 = vmatpush.bf16.msra.mxu0 %v4622
    %5037 = vmatpush.bf16.msra.mxu0 %v4614
    %5038 = vmatpush.bf16.msra.mxu0 %v4606
    %5039 = vmatpush.bf16.msra.mxu0 %v4598
    %5040 = vmatpush.bf16.msra.mxu0 %v4590
    %5041 = vmatpush.bf16.msra.mxu0 %v4582
    %5042 = vmatpush.bf16.msra.mxu0 %v4574
    %5043 = vmatmul.bf16.gmra.mxu0 %v3465
    %v5044 = vpop.f32.mrf.mxu0
    %v5045 = vadd.f32 %v5032, %v5044
    %v5046 = vpop.f32.mrf.mxu0
    %5047 = vdwg.mxu0
    %5048 = vmatpush.bf16.msra.mxu0 %v4694
    %5049 = vmatpush.bf16.msra.mxu0 %v4686
    %5050 = vmatpush.bf16.msra.mxu0 %v4678
    %5051 = vmatpush.bf16.msra.mxu0 %v4670
    %5052 = vmatpush.bf16.msra.mxu0 %v4662
    %5053 = vmatpush.bf16.msra.mxu0 %v4654
    %5054 = vmatpush.bf16.msra.mxu0 %v4646
    %5055 = vmatpush.bf16.msra.mxu0 %v4638
    %5056 = vmatmul.bf16.gmra.mxu0 %v3466
    %v5057 = vpop.f32.mrf.mxu0
    %v5058 = vadd.f32 %v5045, %v5057
    %v5059 = vpop.f32.mrf.mxu0
    %5060 = vdwg.mxu0
    %5061 = vmatpush.bf16.msra.mxu0 %v4758
    %5062 = vmatpush.bf16.msra.mxu0 %v4750
    %5063 = vmatpush.bf16.msra.mxu0 %v4742
    %5064 = vmatpush.bf16.msra.mxu0 %v4734
    %5065 = vmatpush.bf16.msra.mxu0 %v4726
    %5066 = vmatpush.bf16.msra.mxu0 %v4718
    %5067 = vmatpush.bf16.msra.mxu0 %v4710
    %5068 = vmatpush.bf16.msra.mxu0 %v4702
    %5069 = vmatmul.bf16.gmra.mxu0 %v3467
    %v5070 = vpop.f32.mrf.mxu0
    %v5071 = vadd.f32 %v5058, %v5070
    %v5072 = vpop.f32.mrf.mxu0
    %5073 = vdwg.mxu0
    %5074 = vmatpush.bf16.msra.mxu0 %v4567
    %5075 = vmatpush.bf16.msra.mxu0 %v4559
    %5076 = vmatpush.bf16.msra.mxu0 %v4551
    %5077 = vmatpush.bf16.msra.mxu0 %v4543
    %5078 = vmatpush.bf16.msra.mxu0 %v4535
    %5079 = vmatpush.bf16.msra.mxu0 %v4527
    %5080 = vmatpush.bf16.msra.mxu0 %v4519
    %5081 = vmatpush.bf16.msra.mxu0 %v4511
    %5082 = vmatmul.bf16.gmra.mxu0 %v3464
    %v5083 = vpop.f32.mrf.mxu0
    %v5084 = vadd.f32 %v3727, %v5083
    %v5085 = vpop.f32.mrf.mxu0
    %5086 = vdwg.mxu0
    %5087 = vmatpush.bf16.msra.mxu0 %v4631
    %5088 = vmatpush.bf16.msra.mxu0 %v4623
    %5089 = vmatpush.bf16.msra.mxu0 %v4615
    %5090 = vmatpush.bf16.msra.mxu0 %v4607
    %5091 = vmatpush.bf16.msra.mxu0 %v4599
    %5092 = vmatpush.bf16.msra.mxu0 %v4591
    %5093 = vmatpush.bf16.msra.mxu0 %v4583
    %5094 = vmatpush.bf16.msra.mxu0 %v4575
    %5095 = vmatmul.bf16.gmra.mxu0 %v3465
    %v5096 = vpop.f32.mrf.mxu0
    %v5097 = vadd.f32 %v5084, %v5096
    %v5098 = vpop.f32.mrf.mxu0
    %5099 = vdwg.mxu0
    %5100 = vmatpush.bf16.msra.mxu0 %v4695
    %5101 = vmatpush.bf16.msra.mxu0 %v4687
    %5102 = vmatpush.bf16.msra.mxu0 %v4679
    %5103 = vmatpush.bf16.msra.mxu0 %v4671
    %5104 = vmatpush.bf16.msra.mxu0 %v4663
    %5105 = vmatpush.bf16.msra.mxu0 %v4655
    %5106 = vmatpush.bf16.msra.mxu0 %v4647
    %5107 = vmatpush.bf16.msra.mxu0 %v4639
    %5108 = vmatmul.bf16.gmra.mxu0 %v3466
    %v5109 = vpop.f32.mrf.mxu0
    %v5110 = vadd.f32 %v5097, %v5109
    %v5111 = vpop.f32.mrf.mxu0
    %5112 = vdwg.mxu0
    %5113 = vmatpush.bf16.msra.mxu0 %v4759
    %5114 = vmatpush.bf16.msra.mxu0 %v4751
    %5115 = vmatpush.bf16.msra.mxu0 %v4743
    %5116 = vmatpush.bf16.msra.mxu0 %v4735
    %5117 = vmatpush.bf16.msra.mxu0 %v4727
    %5118 = vmatpush.bf16.msra.mxu0 %v4719
    %5119 = vmatpush.bf16.msra.mxu0 %v4711
    %5120 = vmatpush.bf16.msra.mxu0 %v4703
    %5121 = vmatmul.bf16.gmra.mxu0 %v3467
    %v5122 = vpop.f32.mrf.mxu0
    %v5123 = vadd.f32 %v5110, %v5122
    %v5124 = vpop.f32.mrf.mxu0
    %5125 = vdwg.mxu0
    %5126 = vmatpush.bf16.msra.mxu0 %v4568
    %5127 = vmatpush.bf16.msra.mxu0 %v4560
    %5128 = vmatpush.bf16.msra.mxu0 %v4552
    %5129 = vmatpush.bf16.msra.mxu0 %v4544
    %5130 = vmatpush.bf16.msra.mxu0 %v4536
    %5131 = vmatpush.bf16.msra.mxu0 %v4528
    %5132 = vmatpush.bf16.msra.mxu0 %v4520
    %5133 = vmatpush.bf16.msra.mxu0 %v4512
    %5134 = vmatmul.bf16.gmra.mxu0 %v3464
    %v5135 = vpop.f32.mrf.mxu0
    %v5136 = vadd.f32 %v3728, %v5135
    %v5137 = vpop.f32.mrf.mxu0
    %5138 = vdwg.mxu0
    %5139 = vmatpush.bf16.msra.mxu0 %v4632
    %5140 = vmatpush.bf16.msra.mxu0 %v4624
    %5141 = vmatpush.bf16.msra.mxu0 %v4616
    %5142 = vmatpush.bf16.msra.mxu0 %v4608
    %5143 = vmatpush.bf16.msra.mxu0 %v4600
    %5144 = vmatpush.bf16.msra.mxu0 %v4592
    %5145 = vmatpush.bf16.msra.mxu0 %v4584
    %5146 = vmatpush.bf16.msra.mxu0 %v4576
    %5147 = vmatmul.bf16.gmra.mxu0 %v3465
    %v5148 = vpop.f32.mrf.mxu0
    %v5149 = vadd.f32 %v5136, %v5148
    %v5150 = vpop.f32.mrf.mxu0
    %5151 = vdwg.mxu0
    %5152 = vmatpush.bf16.msra.mxu0 %v4696
    %5153 = vmatpush.bf16.msra.mxu0 %v4688
    %5154 = vmatpush.bf16.msra.mxu0 %v4680
    %5155 = vmatpush.bf16.msra.mxu0 %v4672
    %5156 = vmatpush.bf16.msra.mxu0 %v4664
    %5157 = vmatpush.bf16.msra.mxu0 %v4656
    %5158 = vmatpush.bf16.msra.mxu0 %v4648
    %5159 = vmatpush.bf16.msra.mxu0 %v4640
    %5160 = vmatmul.bf16.gmra.mxu0 %v3466
    %v5161 = vpop.f32.mrf.mxu0
    %v5162 = vadd.f32 %v5149, %v5161
    %v5163 = vpop.f32.mrf.mxu0
    %5164 = vdwg.mxu0
    %5165 = vmatpush.bf16.msra.mxu0 %v4760
    %5166 = vmatpush.bf16.msra.mxu0 %v4752
    %5167 = vmatpush.bf16.msra.mxu0 %v4744
    %5168 = vmatpush.bf16.msra.mxu0 %v4736
    %5169 = vmatpush.bf16.msra.mxu0 %v4728
    %5170 = vmatpush.bf16.msra.mxu0 %v4720
    %5171 = vmatpush.bf16.msra.mxu0 %v4712
    %5172 = vmatpush.bf16.msra.mxu0 %v4704
    %5173 = vmatmul.bf16.gmra.mxu0 %v3467
    %v5174 = vpop.f32.mrf.mxu0
    %v5175 = vadd.f32 %v5162, %v5174
    %v5176 = vpop.f32.mrf.mxu0
    %5177 = vdwg.mxu0
    %5178 = vmatpush.bf16.msra.mxu0 %v4569
    %5179 = vmatpush.bf16.msra.mxu0 %v4561
    %5180 = vmatpush.bf16.msra.mxu0 %v4553
    %5181 = vmatpush.bf16.msra.mxu0 %v4545
    %5182 = vmatpush.bf16.msra.mxu0 %v4537
    %5183 = vmatpush.bf16.msra.mxu0 %v4529
    %5184 = vmatpush.bf16.msra.mxu0 %v4521
    %5185 = vmatpush.bf16.msra.mxu0 %v4513
    %5186 = vmatmul.bf16.gmra.mxu0 %v3464
    %v5187 = vpop.f32.mrf.mxu0
    %v5188 = vadd.f32 %v3729, %v5187
    %v5189 = vpop.f32.mrf.mxu0
    %5190 = vdwg.mxu0
    %5191 = vmatpush.bf16.msra.mxu0 %v4633
    %5192 = vmatpush.bf16.msra.mxu0 %v4625
    %5193 = vmatpush.bf16.msra.mxu0 %v4617
    %5194 = vmatpush.bf16.msra.mxu0 %v4609
    %5195 = vmatpush.bf16.msra.mxu0 %v4601
    %5196 = vmatpush.bf16.msra.mxu0 %v4593
    %5197 = vmatpush.bf16.msra.mxu0 %v4585
    %5198 = vmatpush.bf16.msra.mxu0 %v4577
    %5199 = vmatmul.bf16.gmra.mxu0 %v3465
    %v5200 = vpop.f32.mrf.mxu0
    %v5201 = vadd.f32 %v5188, %v5200
    %v5202 = vpop.f32.mrf.mxu0
    %5203 = vdwg.mxu0
    %5204 = vmatpush.bf16.msra.mxu0 %v4697
    %5205 = vmatpush.bf16.msra.mxu0 %v4689
    %5206 = vmatpush.bf16.msra.mxu0 %v4681
    %5207 = vmatpush.bf16.msra.mxu0 %v4673
    %5208 = vmatpush.bf16.msra.mxu0 %v4665
    %5209 = vmatpush.bf16.msra.mxu0 %v4657
    %5210 = vmatpush.bf16.msra.mxu0 %v4649
    %5211 = vmatpush.bf16.msra.mxu0 %v4641
    %5212 = vmatmul.bf16.gmra.mxu0 %v3466
    %v5213 = vpop.f32.mrf.mxu0
    %v5214 = vadd.f32 %v5201, %v5213
    %v5215 = vpop.f32.mrf.mxu0
    %5216 = vdwg.mxu0
    %5217 = vmatpush.bf16.msra.mxu0 %v4761
    %5218 = vmatpush.bf16.msra.mxu0 %v4753
    %5219 = vmatpush.bf16.msra.mxu0 %v4745
    %5220 = vmatpush.bf16.msra.mxu0 %v4737
    %5221 = vmatpush.bf16.msra.mxu0 %v4729
    %5222 = vmatpush.bf16.msra.mxu0 %v4721
    %5223 = vmatpush.bf16.msra.mxu0 %v4713
    %5224 = vmatpush.bf16.msra.mxu0 %v4705
    %5225 = vmatmul.bf16.gmra.mxu0 %v3467
    %v5226 = vpop.f32.mrf.mxu0
    %v5227 = vadd.f32 %v5214, %v5226
    %v5228 = vpop.f32.mrf.mxu0
    %5229 = vdwg.mxu0
    %5230 = vmatpush.bf16.msra.mxu0 %v4570
    %5231 = vmatpush.bf16.msra.mxu0 %v4562
    %5232 = vmatpush.bf16.msra.mxu0 %v4554
    %5233 = vmatpush.bf16.msra.mxu0 %v4546
    %5234 = vmatpush.bf16.msra.mxu0 %v4538
    %5235 = vmatpush.bf16.msra.mxu0 %v4530
    %5236 = vmatpush.bf16.msra.mxu0 %v4522
    %5237 = vmatpush.bf16.msra.mxu0 %v4514
    %5238 = vmatmul.bf16.gmra.mxu0 %v3464
    %v5239 = vpop.f32.mrf.mxu0
    %v5240 = vadd.f32 %v3730, %v5239
    %v5241 = vpop.f32.mrf.mxu0
    %5242 = vdwg.mxu0
    %5243 = vmatpush.bf16.msra.mxu0 %v4634
    %5244 = vmatpush.bf16.msra.mxu0 %v4626
    %5245 = vmatpush.bf16.msra.mxu0 %v4618
    %5246 = vmatpush.bf16.msra.mxu0 %v4610
    %5247 = vmatpush.bf16.msra.mxu0 %v4602
    %5248 = vmatpush.bf16.msra.mxu0 %v4594
    %5249 = vmatpush.bf16.msra.mxu0 %v4586
    %5250 = vmatpush.bf16.msra.mxu0 %v4578
    %5251 = vmatmul.bf16.gmra.mxu0 %v3465
    %v5252 = vpop.f32.mrf.mxu0
    %v5253 = vadd.f32 %v5240, %v5252
    %v5254 = vpop.f32.mrf.mxu0
    %5255 = vdwg.mxu0
    %5256 = vmatpush.bf16.msra.mxu0 %v4698
    %5257 = vmatpush.bf16.msra.mxu0 %v4690
    %5258 = vmatpush.bf16.msra.mxu0 %v4682
    %5259 = vmatpush.bf16.msra.mxu0 %v4674
    %5260 = vmatpush.bf16.msra.mxu0 %v4666
    %5261 = vmatpush.bf16.msra.mxu0 %v4658
    %5262 = vmatpush.bf16.msra.mxu0 %v4650
    %5263 = vmatpush.bf16.msra.mxu0 %v4642
    %5264 = vmatmul.bf16.gmra.mxu0 %v3466
    %v5265 = vpop.f32.mrf.mxu0
    %v5266 = vadd.f32 %v5253, %v5265
    %v5267 = vpop.f32.mrf.mxu0
    %5268 = vdwg.mxu0
    %5269 = vmatpush.bf16.msra.mxu0 %v4762
    %5270 = vmatpush.bf16.msra.mxu0 %v4754
    %5271 = vmatpush.bf16.msra.mxu0 %v4746
    %5272 = vmatpush.bf16.msra.mxu0 %v4738
    %5273 = vmatpush.bf16.msra.mxu0 %v4730
    %5274 = vmatpush.bf16.msra.mxu0 %v4722
    %5275 = vmatpush.bf16.msra.mxu0 %v4714
    %5276 = vmatpush.bf16.msra.mxu0 %v4706
    %5277 = vmatmul.bf16.gmra.mxu0 %v3467
    %v5278 = vpop.f32.mrf.mxu0
    %v5279 = vadd.f32 %v5266, %v5278
    %v5280 = vpop.f32.mrf.mxu0
    %5281 = vdwg.mxu0
    %5282 = vmatpush.bf16.msra.mxu0 %v4571
    %5283 = vmatpush.bf16.msra.mxu0 %v4563
    %5284 = vmatpush.bf16.msra.mxu0 %v4555
    %5285 = vmatpush.bf16.msra.mxu0 %v4547
    %5286 = vmatpush.bf16.msra.mxu0 %v4539
    %5287 = vmatpush.bf16.msra.mxu0 %v4531
    %5288 = vmatpush.bf16.msra.mxu0 %v4523
    %5289 = vmatpush.bf16.msra.mxu0 %v4515
    %5290 = vmatmul.bf16.gmra.mxu0 %v3464
    %v5291 = vpop.f32.mrf.mxu0
    %v5292 = vadd.f32 %v3731, %v5291
    %v5293 = vpop.f32.mrf.mxu0
    %5294 = vdwg.mxu0
    %5295 = vmatpush.bf16.msra.mxu0 %v4635
    %5296 = vmatpush.bf16.msra.mxu0 %v4627
    %5297 = vmatpush.bf16.msra.mxu0 %v4619
    %5298 = vmatpush.bf16.msra.mxu0 %v4611
    %5299 = vmatpush.bf16.msra.mxu0 %v4603
    %5300 = vmatpush.bf16.msra.mxu0 %v4595
    %5301 = vmatpush.bf16.msra.mxu0 %v4587
    %5302 = vmatpush.bf16.msra.mxu0 %v4579
    %5303 = vmatmul.bf16.gmra.mxu0 %v3465
    %v5304 = vpop.f32.mrf.mxu0
    %v5305 = vadd.f32 %v5292, %v5304
    %v5306 = vpop.f32.mrf.mxu0
    %5307 = vdwg.mxu0
    %5308 = vmatpush.bf16.msra.mxu0 %v4699
    %5309 = vmatpush.bf16.msra.mxu0 %v4691
    %5310 = vmatpush.bf16.msra.mxu0 %v4683
    %5311 = vmatpush.bf16.msra.mxu0 %v4675
    %5312 = vmatpush.bf16.msra.mxu0 %v4667
    %5313 = vmatpush.bf16.msra.mxu0 %v4659
    %5314 = vmatpush.bf16.msra.mxu0 %v4651
    %5315 = vmatpush.bf16.msra.mxu0 %v4643
    %5316 = vmatmul.bf16.gmra.mxu0 %v3466
    %v5317 = vpop.f32.mrf.mxu0
    %v5318 = vadd.f32 %v5305, %v5317
    %v5319 = vpop.f32.mrf.mxu0
    %5320 = vdwg.mxu0
    %5321 = vmatpush.bf16.msra.mxu0 %v4763
    %5322 = vmatpush.bf16.msra.mxu0 %v4755
    %5323 = vmatpush.bf16.msra.mxu0 %v4747
    %5324 = vmatpush.bf16.msra.mxu0 %v4739
    %5325 = vmatpush.bf16.msra.mxu0 %v4731
    %5326 = vmatpush.bf16.msra.mxu0 %v4723
    %5327 = vmatpush.bf16.msra.mxu0 %v4715
    %5328 = vmatpush.bf16.msra.mxu0 %v4707
    %5329 = vmatmul.bf16.gmra.mxu0 %v3467
    %v5330 = vpop.f32.mrf.mxu0
    %v5331 = vadd.f32 %v5318, %v5330
    %v5332 = vpop.f32.mrf.mxu0
    %5333 = vdwg.mxu0
    %5334 = vmatpush.bf16.msra.mxu0 %v4572
    %5335 = vmatpush.bf16.msra.mxu0 %v4564
    %5336 = vmatpush.bf16.msra.mxu0 %v4556
    %5337 = vmatpush.bf16.msra.mxu0 %v4548
    %5338 = vmatpush.bf16.msra.mxu0 %v4540
    %5339 = vmatpush.bf16.msra.mxu0 %v4532
    %5340 = vmatpush.bf16.msra.mxu0 %v4524
    %5341 = vmatpush.bf16.msra.mxu0 %v4516
    %5342 = vmatmul.bf16.gmra.mxu0 %v3464
    %v5343 = vpop.f32.mrf.mxu0
    %v5344 = vadd.f32 %v3732, %v5343
    %v5345 = vpop.f32.mrf.mxu0
    %5346 = vdwg.mxu0
    %5347 = vmatpush.bf16.msra.mxu0 %v4636
    %5348 = vmatpush.bf16.msra.mxu0 %v4628
    %5349 = vmatpush.bf16.msra.mxu0 %v4620
    %5350 = vmatpush.bf16.msra.mxu0 %v4612
    %5351 = vmatpush.bf16.msra.mxu0 %v4604
    %5352 = vmatpush.bf16.msra.mxu0 %v4596
    %5353 = vmatpush.bf16.msra.mxu0 %v4588
    %5354 = vmatpush.bf16.msra.mxu0 %v4580
    %5355 = vmatmul.bf16.gmra.mxu0 %v3465
    %v5356 = vpop.f32.mrf.mxu0
    %v5357 = vadd.f32 %v5344, %v5356
    %v5358 = vpop.f32.mrf.mxu0
    %5359 = vdwg.mxu0
    %5360 = vmatpush.bf16.msra.mxu0 %v4700
    %5361 = vmatpush.bf16.msra.mxu0 %v4692
    %5362 = vmatpush.bf16.msra.mxu0 %v4684
    %5363 = vmatpush.bf16.msra.mxu0 %v4676
    %5364 = vmatpush.bf16.msra.mxu0 %v4668
    %5365 = vmatpush.bf16.msra.mxu0 %v4660
    %5366 = vmatpush.bf16.msra.mxu0 %v4652
    %5367 = vmatpush.bf16.msra.mxu0 %v4644
    %5368 = vmatmul.bf16.gmra.mxu0 %v3466
    %v5369 = vpop.f32.mrf.mxu0
    %v5370 = vadd.f32 %v5357, %v5369
    %v5371 = vpop.f32.mrf.mxu0
    %5372 = vdwg.mxu0
    %5373 = vmatpush.bf16.msra.mxu0 %v4764
    %5374 = vmatpush.bf16.msra.mxu0 %v4756
    %5375 = vmatpush.bf16.msra.mxu0 %v4748
    %5376 = vmatpush.bf16.msra.mxu0 %v4740
    %5377 = vmatpush.bf16.msra.mxu0 %v4732
    %5378 = vmatpush.bf16.msra.mxu0 %v4724
    %5379 = vmatpush.bf16.msra.mxu0 %v4716
    %5380 = vmatpush.bf16.msra.mxu0 %v4708
    %5381 = vmatmul.bf16.gmra.mxu0 %v3467
    %v5382 = vpop.f32.mrf.mxu0
    %v5383 = vadd.f32 %v5370, %v5382
    %v5384 = vpop.f32.mrf.mxu0
    %5385 = vdwg.mxu0
    %5386 = vmatpush.bf16.msra.mxu0 %v4573
    %5387 = vmatpush.bf16.msra.mxu0 %v4565
    %5388 = vmatpush.bf16.msra.mxu0 %v4557
    %5389 = vmatpush.bf16.msra.mxu0 %v4549
    %5390 = vmatpush.bf16.msra.mxu0 %v4541
    %5391 = vmatpush.bf16.msra.mxu0 %v4533
    %5392 = vmatpush.bf16.msra.mxu0 %v4525
    %5393 = vmatpush.bf16.msra.mxu0 %v4517
    %5394 = vmatmul.bf16.gmra.mxu0 %v3464
    %v5395 = vpop.f32.mrf.mxu0
    %v5396 = vadd.f32 %v3733, %v5395
    %v5397 = vpop.f32.mrf.mxu0
    %5398 = vdwg.mxu0
    %5399 = vmatpush.bf16.msra.mxu0 %v4637
    %5400 = vmatpush.bf16.msra.mxu0 %v4629
    %5401 = vmatpush.bf16.msra.mxu0 %v4621
    %5402 = vmatpush.bf16.msra.mxu0 %v4613
    %5403 = vmatpush.bf16.msra.mxu0 %v4605
    %5404 = vmatpush.bf16.msra.mxu0 %v4597
    %5405 = vmatpush.bf16.msra.mxu0 %v4589
    %5406 = vmatpush.bf16.msra.mxu0 %v4581
    %5407 = vmatmul.bf16.gmra.mxu0 %v3465
    %v5408 = vpop.f32.mrf.mxu0
    %v5409 = vadd.f32 %v5396, %v5408
    %v5410 = vpop.f32.mrf.mxu0
    %5411 = vdwg.mxu0
    %5412 = vmatpush.bf16.msra.mxu0 %v4701
    %5413 = vmatpush.bf16.msra.mxu0 %v4693
    %5414 = vmatpush.bf16.msra.mxu0 %v4685
    %5415 = vmatpush.bf16.msra.mxu0 %v4677
    %5416 = vmatpush.bf16.msra.mxu0 %v4669
    %5417 = vmatpush.bf16.msra.mxu0 %v4661
    %5418 = vmatpush.bf16.msra.mxu0 %v4653
    %5419 = vmatpush.bf16.msra.mxu0 %v4645
    %5420 = vmatmul.bf16.gmra.mxu0 %v3466
    %v5421 = vpop.f32.mrf.mxu0
    %v5422 = vadd.f32 %v5409, %v5421
    %v5423 = vpop.f32.mrf.mxu0
    %5424 = vdwg.mxu0
    %5425 = vmatpush.bf16.msra.mxu0 %v4765
    %5426 = vmatpush.bf16.msra.mxu0 %v4757
    %5427 = vmatpush.bf16.msra.mxu0 %v4749
    %5428 = vmatpush.bf16.msra.mxu0 %v4741
    %5429 = vmatpush.bf16.msra.mxu0 %v4733
    %5430 = vmatpush.bf16.msra.mxu0 %v4725
    %5431 = vmatpush.bf16.msra.mxu0 %v4717
    %5432 = vmatpush.bf16.msra.mxu0 %v4709
    %5433 = vmatmul.bf16.gmra.mxu0 %v3467
    %v5434 = vpop.f32.mrf.mxu0
    %v5435 = vadd.f32 %v5422, %v5434
    %v5436 = vpop.f32.mrf.mxu0
    %5437 = vdwg.mxu0
    %v5438 = vsub.f32 0.0, %v5071
    %v5439 = vsub.f32 0.0, %v5123
    %v5440 = vsub.f32 0.0, %v5175
    %v5441 = vsub.f32 0.0, %v5227
    %v5442 = vsub.f32 0.0, %v5279
    %v5443 = vsub.f32 0.0, %v5331
    %v5444 = vsub.f32 0.0, %v5383
    %v5445 = vsub.f32 0.0, %v5435
    %v5446 = vmul.f32 %v5438, 1.442695
    %v5447 = vpow.pop %v5446
    %v5448 = vmul.f32 %v5439, 1.442695
    %v5449 = vpow.pop %v5448
    %v5450 = vmul.f32 %v5440, 1.442695
    %v5451 = vpow.pop %v5450
    %v5452 = vmul.f32 %v5441, 1.442695
    %v5453 = vpow.pop %v5452
    %v5454 = vmul.f32 %v5442, 1.442695
    %v5455 = vpow.pop %v5454
    %v5456 = vmul.f32 %v5443, 1.442695
    %v5457 = vpow.pop %v5456
    %v5458 = vmul.f32 %v5444, 1.442695
    %v5459 = vpow.pop %v5458
    %v5460 = vmul.f32 %v5445, 1.442695
    %v5461 = vpow.pop %v5460
    %v5462 = vadd.f32 %v5447, 1.0
    %v5463 = vadd.f32 %v5449, 1.0
    %v5464 = vadd.f32 %v5451, 1.0
    %v5465 = vadd.f32 %v5453, 1.0
    %v5466 = vadd.f32 %v5455, 1.0
    %v5467 = vadd.f32 %v5457, 1.0
    %v5468 = vadd.f32 %v5459, 1.0
    %v5469 = vadd.f32 %v5461, 1.0
    %v5470 = vrcp.pop %v5462
    %v5471 = vrcp.pop %v5463
    %v5472 = vrcp.pop %v5464
    %v5473 = vrcp.pop %v5465
    %v5474 = vrcp.pop %v5466
    %v5475 = vrcp.pop %v5467
    %v5476 = vrcp.pop %v5468
    %v5477 = vrcp.pop %v5469
    %v5486 = vrot.slane %v5471, 6
    %v5487 = vrot.slane %v5472, 4
    %v5488 = vrot.slane %v5473, 2
    %v5489 = vrot.slane %v5475, 6
    %v5490 = vrot.slane %v5476, 4
    %v5491 = vrot.slane %v5477, 2
    %vm5492 = vcmask 1041408
    %v5493 = vsel %vm5492, %v5470, %v5486
    %vm5494 = vcmask 1045508
    %v5495 = vsel %vm5494, %v5487, %v5488
    %vm5496 = vcmask 1043456
    %v5497 = vsel %vm5496, %v5493, %v5495
    %v5498 = vsel %vm5492, %v5474, %v5489
    %v5499 = vsel %vm5494, %v5490, %v5491
    %v5500 = vsel %vm5496, %v5498, %v5499
    %5503 = vst [vmem:[%s17] sm:$0xff] %v5497
    %5504 = vst [vmem:[%s17 + $0x8] sm:$0xff] %v5500
    %v5505 = vmul.f32 %v2825, %v2825
    %v5506 = vsel %vm5492, %v5505, 0.0
    %5507 = vadd.xlane.f32.xlu0 %v5506
    %v5508 = vpop.xlane.xlu0 %5507
    %v5509 = vld [vmem:[%s14] sm:$0x1]
    %v5511 = vperm.slane %v5509, 0
    %v5513 = vadd.f32 %v5508, %v5511
    %v5514 = vld [vmem:[#allocation11] sm:$0xff]
    %v5515 = vld [vmem:[#allocation11 + $0x8] sm:$0xff]
    %v5516 = vld [vmem:[#allocation11 + $0x10] sm:$0xff]
    %v5517 = vld [vmem:[#allocation11 + $0x18] sm:$0xff]
    %v5518 = vld [vmem:[#allocation11 + $0x20] sm:$0xff]
    %v5519 = vld [vmem:[#allocation11 + $0x28] sm:$0xff]
    %v5520 = vld [vmem:[#allocation11 + $0x30] sm:$0xff]
    %v5521 = vld [vmem:[#allocation11 + $0x38] sm:$0xff]
    %v5522 = vld [vmem:[#allocation11 + $0x40] sm:$0xff]
    %v5523 = vld [vmem:[#allocation11 + $0x48] sm:$0xff]
    %v5524 = vld [vmem:[#allocation11 + $0x50] sm:$0xff]
    %v5525 = vld [vmem:[#allocation11 + $0x58] sm:$0xff]
    %v5526 = vld [vmem:[#allocation11 + $0x60] sm:$0xff]
    %v5527 = vld [vmem:[#allocation11 + $0x68] sm:$0xff]
    %v5528 = vld [vmem:[#allocation11 + $0x70] sm:$0xff]
    %v5529 = vld [vmem:[#allocation11 + $0x78] sm:$0xff]
    %5530 = vmatpush.msra.mxu0 %v5529
    %5531 = vmatpush.msra.mxu0 %v5528
    %5532 = vmatpush.msra.mxu0 %v5527
    %5533 = vmatpush.msra.mxu0 %v5526
    %5534 = vmatpush.msra.mxu0 %v5525
    %5535 = vmatpush.msra.mxu0 %v5524
    %5536 = vmatpush.msra.mxu0 %v5523
    %5537 = vmatpush.msra.mxu0 %v5522
    %5538 = vmatpush.msra.mxu0 %v5521
    %5539 = vmatpush.msra.mxu0 %v5520
    %5540 = vmatpush.msra.mxu0 %v5519
    %5541 = vmatpush.msra.mxu0 %v5518
    %5542 = vmatpush.msra.mxu0 %v5517
    %5543 = vmatpush.msra.mxu0 %v5516
    %5544 = vmatpush.msra.mxu0 %v5515
    %5545 = vmatpush.msra.mxu0 %v5514
    %5546 = vmatmul.f32.gmra.mxu0 %v2825
    %v5547 = vpop.f32.mrf.mxu0
    %v5548 = vadd.f32 0.0, %v5547
    %5549 = vdwg.mxu0
    %v5550 = vmul.f32 %v5548, 2.0
    %v5551 = vsub.f32 %v5513, %v5550
    %v5552 = vmax.f32 %v5551, 0.0
    %5553 = vst [vmem:[#allocation15] sm:$0x3] %v5552
    %v5554 = vld [vmem:[#allocation13] sm:$0xff]
    %v5555 = vld [vmem:[#allocation13 + $0x8] sm:$0xff]
    %v5556 = vld [vmem:[#allocation13 + $0x10] sm:$0xff]
    %v5557 = vld [vmem:[#allocation13 + $0x18] sm:$0xff]
    %v5558 = vld [vmem:[#allocation13 + $0x20] sm:$0xff]
    %v5559 = vld [vmem:[#allocation13 + $0x28] sm:$0xff]
    %v5560 = vld [vmem:[#allocation13 + $0x30] sm:$0xff]
    %v5561 = vld [vmem:[#allocation13 + $0x38] sm:$0xff]
    %v5562 = vld [vmem:[#allocation13 + $0x40] sm:$0xff]
    %v5563 = vld [vmem:[#allocation13 + $0x48] sm:$0xff]
    %v5564 = vld [vmem:[#allocation13 + $0x50] sm:$0xff]
    %v5565 = vld [vmem:[#allocation13 + $0x58] sm:$0xff]
    %v5566 = vld [vmem:[#allocation13 + $0x60] sm:$0xff]
    %v5567 = vld [vmem:[#allocation13 + $0x68] sm:$0xff]
    %v5568 = vld [vmem:[#allocation13 + $0x70] sm:$0xff]
    %v5569 = vld [vmem:[#allocation13 + $0x78] sm:$0xff]
    %v5570 = vld [vmem:[%s16] sm:$0x1]
    %v5572 = vperm.slane %v5570, 0
    %5574 = vmatpush.msra.mxu0 %v5569
    %5575 = vmatpush.msra.mxu0 %v5568
    %5576 = vmatpush.msra.mxu0 %v5567
    %5577 = vmatpush.msra.mxu0 %v5566
    %5578 = vmatpush.msra.mxu0 %v5565
    %5579 = vmatpush.msra.mxu0 %v5564
    %5580 = vmatpush.msra.mxu0 %v5563
    %5581 = vmatpush.msra.mxu0 %v5562
    %5582 = vmatpush.msra.mxu0 %v5561
    %5583 = vmatpush.msra.mxu0 %v5560
    %5584 = vmatpush.msra.mxu0 %v5559
    %5585 = vmatpush.msra.mxu0 %v5558
    %5586 = vmatpush.msra.mxu0 %v5557
    %5587 = vmatpush.msra.mxu0 %v5556
    %5588 = vmatpush.msra.mxu0 %v5555
    %5589 = vmatpush.msra.mxu0 %v5554
    %5590 = vmatmul.f32.gmra.mxu0 %v5552
    %v5591 = vpop.f32.mrf.mxu0
    %v5592 = vadd.f32 %v5572, %v5591
    %5593 = vdwg.mxu0
    %5594 = vst [vmem:[#allocation17] sm:$0x3] %v5592
    // Predicated region
    $region98: #{_lambda_.1} parent=1 // pred_check
      _
    $region99: #{_lambda_.1} parent=1 // pred_check_branch
      %5596 = sbr.rel (0) target = $region101
    $region100: #{_lambda_.1} parent=1 // pred_region
      _
    $region101: #{_lambda_.1} parent=1 // pred_fallthru
      _
    // Predicated region
    $region102: #{_lambda_.1} parent=1 // pred_check
      _
    $region103: #{_lambda_.1} parent=1 // pred_check_branch
      %5598 = sbr.rel (0) target = $region105
    $region104: #{_lambda_.1} parent=1 // pred_region
      %5600 = vsyncadd [#allocation4], 0
      %s5602 = sshll.u32 [#allocation14], 4
      %s5603 = int_to_ptr.vmem [resolvable:$true] %s5602
      %s5604 = sshll.u32 %s18, 4
      %s5605 = int_to_ptr.hbm [resolvable:$true] %s5604
      %5607 = dma.vmem_to_hbm [thread:$0]  %s5603, 32, %s5605, [#allocation4]
    $region105: #{_lambda_.1} parent=1 // pred_fallthru
      _
    // Predicated region
    $region106: #{_lambda_.1} parent=1 // pred_check
      _
    $region107: #{_lambda_.1} parent=1 // pred_check_branch
      %5609 = sbr.rel (0) target = $region109
    $region108: #{_lambda_.1} parent=1 // pred_region
      %5611 = vsyncadd [#allocation16], 0
      %s5613 = sshll.u32 [#allocation15], 4
      %s5614 = int_to_ptr.vmem [resolvable:$true] %s5613
      %s5615 = sshll.u32 %s19, 4
      %s5616 = int_to_ptr.hbm [resolvable:$true] %s5615
      %5618 = dma.vmem_to_hbm [thread:$0]  %s5614, 32, %s5616, [#allocation16]
    $region109: #{_lambda_.1} parent=1 // pred_fallthru
      _
    // Predicated region
    $region110: #{_lambda_.1} parent=1 // pred_check
      _
    $region111: #{_lambda_.1} parent=1 // pred_check_branch
      %5620 = sbr.rel (0) target = $region113
    $region112: #{_lambda_.1} parent=1 // pred_region
      %5622 = vsyncadd [#allocation16], 0
      %s5624 = sshll.u32 [#allocation17], 4
      %s5625 = int_to_ptr.vmem [resolvable:$true] %s5624
      %s5626 = sshll.u32 %s20, 4
      %s5627 = int_to_ptr.hbm [resolvable:$true] %s5626
      %5629 = dma.vmem_to_hbm [thread:$0]  %s5625, 32, %s5627, [#allocation16]
    $region113: #{_lambda_.1} parent=1 // pred_fallthru
      _
    // Predicated region
    $region114: #{_lambda_.1} parent=1 // pred_check
      _
    $region115: #{_lambda_.1} parent=1 // pred_check_branch
      %5631 = sbr.rel (0) target = $region117
    $region116: #{_lambda_.1} parent=1 // pred_region
      _
    $region117: #{_lambda_.1} parent=1 // pred_fallthru
      _
    // Predicated region
    $region118: #{_lambda_.1} parent=1 // pred_check
      _
    $region119: #{_lambda_.1} parent=1 // pred_check_branch
      %5633 = sbr.rel (0) target = $region121
    $region120: #{_lambda_.1} parent=1 // pred_region
      %5635 = dma.done [#allocation4], 32
    $region121: #{_lambda_.1} parent=1 // pred_fallthru
      _
    // Predicated region
    $region122: #{_lambda_.1} parent=1 // pred_check
      _
    $region123: #{_lambda_.1} parent=1 // pred_check_branch
      %5637 = sbr.rel (0) target = $region125
    $region124: #{_lambda_.1} parent=1 // pred_region
      %5639 = dma.done [#allocation16], 32
    $region125: #{_lambda_.1} parent=1 // pred_fallthru
      _
    // Predicated region
    $region126: #{_lambda_.1} parent=1 // pred_check
      _
    $region127: #{_lambda_.1} parent=1 // pred_check_branch
      %5641 = sbr.rel (0) target = $region129
    $region128: #{_lambda_.1} parent=1 // pred_region
      %5643 = dma.done [#allocation16], 32
    $region129: #{_lambda_.1} parent=1 // pred_fallthru
      _
    %5644 = vsyncpa [#allocation3], 1
    %5645 = vsyncpa [#allocation6], 1
    %5646 = vsyncpa [#allocation9], 1
    %5647 = vsyncpa [#allocation12], 1
    %5648 = vsyncpa [#allocation4], 1
    %5649 = vsyncpa [#allocation16], 1

</llo_original>
